<compile_context>
chip_gen: v6e
topology: v6e:2x2x1
jax: 0.10.0
libtpu: 0.0.40
codegen_flags: <defaults>
</compile_context>

<pallas_src>
import math

import jax
import jax.numpy as jnp
from jax.experimental import pallas as pl
from jax.experimental.pallas import tpu as pltpu


def make_mha_kernel(n_head_padded: int, n_d: int):
    inv_sqrt_nd = 1.0 / math.sqrt(n_d)

    def mha_kernel(q_ref, k_ref, v_ref,
                   wq_ref, bq_ref, wk_ref, bk_ref, wv_ref, bv_ref,
                   wc_ref, bc_ref,
                   out_ref):
        bt, t, dp = q_ref.shape
        rows = bt * t
        hp, nd = n_head_padded, n_d

        # Activations arrive as bf16; flatten to a (rows, dp) slab so each
        # projection is one full-width MXU matmul with f32 accumulation.
        q2 = q_ref[...].reshape(rows, dp)
        k2 = k_ref[...].reshape(rows, dp)
        v2 = v_ref[...].reshape(rows, dp)

        Q = jnp.dot(q2, wq_ref[...], preferred_element_type=jnp.float32) + bq_ref[...]
        K = jnp.dot(k2, wk_ref[...], preferred_element_type=jnp.float32) + bk_ref[...]
        V = jnp.dot(v2, wv_ref[...], preferred_element_type=jnp.float32) + bv_ref[...]

        def to_heads(x):  # (rows, dp) f32 -> (bt*hp, t, nd) bf16, head-major
            x = x.reshape(bt, t, hp, nd)
            x = jnp.transpose(x, (0, 2, 1, 3))
            return x.reshape(bt * hp, t, nd).astype(jnp.bfloat16)

        # Fold 1/sqrt(n_d) into Q: rows*dp multiplies instead of rescaling the
        # (bt*hp, t, t) scores slab.
        Qh = to_heads(Q * inv_sqrt_nd)
        Kh = to_heads(K)
        Vh = to_heads(V)

        # Batched over every (batch, head) pair: one scores einsum, stable
        # softmax with DEFERRED normalization, one probs @ V einsum.
        s = jnp.einsum('bqd,bkd->bqk', Qh, Kh,
                       preferred_element_type=jnp.float32)       # (bt*hp, t, t)
        p = jnp.exp(s - jnp.max(s, axis=-1, keepdims=True))
        l = jnp.sum(p, axis=-1, keepdims=True)                   # (bt*hp, t, 1)

        ctx = jnp.einsum('bqk,bkd->bqd', p.astype(jnp.bfloat16), Vh,
                         preferred_element_type=jnp.float32)     # (bt*hp, t, nd)
        # Normalize the small context instead of the large probability slab.
        ctx = ctx * pl.reciprocal(l, approx=True)

        # Back to (rows, dp) and ONE full-contraction combine matmul.
        ctx = jnp.transpose(ctx.reshape(bt, hp, t, nd), (0, 2, 1, 3))
        ctx = ctx.reshape(rows, dp).astype(jnp.bfloat16)
        out = jnp.dot(ctx, wc_ref[...], preferred_element_type=jnp.float32) + bc_ref[...]

        # TODO(synk): the optional `mask` argument of the PyTorch module is not
        # plumbed (forward with mask=None is implemented).
        out_ref[...] = out.reshape(bt, t, dp).astype(out_ref.dtype)

    return mha_kernel


def _vmem_budget_bytes() -> int:
    """Physical VMEM of this generation minus headroom for compiler scratch."""
    try:
        cap = int(pltpu.get_tpu_info().vmem_capacity_bytes)
    except Exception:
        cap = 64 * 1024 * 1024          # conservative default: v7x per-core VMEM
    return (cap // 8) * 7               # keep ~1/8 free (~56 MiB v7x, ~112 MiB v5e/v6e)


def _tile_vmem_need(b_tile: int, T: int, D_pad: int, Hp: int, out_bytes: int) -> int:
    """Rough per-grid-step working set of the kernel above."""
    rows = b_tile * T
    blk = rows * D_pad
    need = 3 * 2 * blk * 2                # q/k/v bf16 blocks, double-buffered
    need += 2 * blk * out_bytes           # output block, double-buffered
    need += 4 * D_pad * D_pad * 2         # bf16 weights, single-buffered
    need += 4 * 8 * D_pad * 4             # biases (sublane padded), single-buffered
    need += 3 * blk * 4                   # Q / K / V f32 projections
    need += 3 * blk * 2                   # head-major bf16 copies
    need += 2 * b_tile * Hp * T * T * 4   # scores + probs f32
    need += blk * (4 + 2)                 # ctx f32 + ctx bf16
    need += blk * 4                       # combine output f32 before cast
    need += 4 << 20                       # slack for compiler temporaries
    return need


def _choose_b_tile(B: int, T: int, D_pad: int, Hp: int, out_bytes: int,
                   budget: int) -> int:
    """Largest batch tile that fits the VMEM budget while keeping >=4 (then
    >=2) grid steps for pipeline overlap / both v7x TensorCores, preferring an
    even step count."""
    divisors = [d for d in range(1, B + 1) if B % d == 0]

    def fits(d):
        return _tile_vmem_need(d, T, D_pad, Hp, out_bytes) <= budget

    for min_steps in (4, 2, 1):
        cands = [d for d in divisors if (B // d) >= min_steps and fits(d)]
        if cands:
            even = [d for d in cands if (B // d) % 2 == 0]
            return max(even) if even else max(cands)
    return 1


def multi_head_attention(q, k, v, params, *, n_head: int):
    """q, k, v: (B, T, D).  params: dict of torch-nn.Linear-style weights/biases."""
    B, T, D = q.shape
    assert D % n_head == 0
    n_d = D // n_head

    # Lane-dense width that is also a multiple of n_d, so the head split is a
    # pure reshape (extra columns become zero "padding heads" contributing
    # exactly zero to the output).  Real ViT widths (multiples of 128) pad by 0.
    lcm = n_d * 128 // math.gcd(n_d, 128)
    D_pad = ((D + lcm - 1) // lcm) * lcm
    Hp = D_pad // n_d

    def prep_w(w):   # torch (out, in) -> pre-transposed, padded, bf16 (in, out)
        wt = w.T
        if D_pad != D:
            wt = jnp.pad(wt, ((0, D_pad - D), (0, D_pad - D)))
        return wt.astype(jnp.bfloat16)

    def prep_b(b):
        if D_pad != D:
            b = jnp.pad(b, (0, D_pad - D))
        return b.reshape(1, D_pad).astype(jnp.float32)

    def prep_x(x):   # stream activations as bf16: halves HBM traffic and VMEM
        if D_pad != D:
            x = jnp.pad(x, ((0, 0), (0, 0), (0, D_pad - D)))
        return x.astype(jnp.bfloat16)

    wq, bq = prep_w(params["wq"]), prep_b(params["bq"])
    wk, bk = prep_w(params["wk"]), prep_b(params["bk"])
    wv, bv = prep_w(params["wv"]), prep_b(params["bv"])
    wc, bc = prep_w(params["wc"]), prep_b(params["bc"])
    qp, kp, vp = prep_x(q), prep_x(k), prep_x(v)

    out_dtype = q.dtype
    out_bytes = jnp.dtype(out_dtype).itemsize
    budget = _vmem_budget_bytes()
    b_tile = _choose_b_tile(B, T, D_pad, Hp, out_bytes, budget)
    grid = (B // b_tile,)

    need = _tile_vmem_need(b_tile, T, D_pad, Hp, out_bytes)
    vmem_limit = int(min(max(need, 32 * 1024 * 1024), budget))

    batch_spec = pl.BlockSpec((b_tile, T, D_pad), lambda b: (b, 0, 0))
    # Weights / biases never change across grid steps -> single buffer.
    w_spec = pl.BlockSpec((D_pad, D_pad), lambda b: (0, 0),
                          pipeline_mode=pl.Buffered(1))
    bias_spec = pl.BlockSpec((1, D_pad), lambda b: (0, 0),
                             pipeline_mode=pl.Buffered(1))

    kernel = make_mha_kernel(Hp, n_d)

    out = pl.pallas_call(
        kernel,
        out_shape=jax.ShapeDtypeStruct((B, T, D_pad), out_dtype),
        grid_spec=pltpu.PrefetchScalarGridSpec(
            num_scalar_prefetch=0,
            grid=grid,
            in_specs=[batch_spec, batch_spec, batch_spec,
                      w_spec, bias_spec, w_spec, bias_spec, w_spec, bias_spec,
                      w_spec, bias_spec],
            out_specs=batch_spec,
        ),
        compiler_params=pltpu.CompilerParams(
            dimension_semantics=("parallel",),
            vmem_limit_bytes=vmem_limit),
    )(qp, kp, vp, wq, bq, wk, bk, wv, bv, wc, bc)

    return out[..., :D] if D_pad != D else out


def _reference(q, k, v, params, *, n_head: int):
    """Pure-JAX f32 reference mirroring the PyTorch forward (mask=None)."""
    B, T, D = q.shape
    n_d = D // n_head

    def lin(x, w, b):
        return x @ w.T + b

    Q = lin(q, params["wq"], params["bq"]).reshape(B, T, n_head, n_d).transpose(0, 2, 1, 3)
    K = lin(k, params["wk"], params["bk"]).reshape(B, T, n_head, n_d).transpose(0, 2, 1, 3)
    V = lin(v, params["wv"], params["bv"]).reshape(B, T, n_head, n_d).transpose(0, 2, 1, 3)

    score = jnp.einsum("bhqd,bhkd->bhqk", Q, K) / math.sqrt(n_d)
    score = jax.nn.softmax(score, axis=-1)
    ctx = jnp.einsum("bhqk,bhkd->bhqd", score, V)
    ctx = ctx.transpose(0, 2, 1, 3).reshape(B, T, D)
    return lin(ctx, params["wc"], params["bc"])


if __name__ == "__main__":
    B, T, D, n_head = 4, 8, 32, 4

    key = jax.random.PRNGKey(0)
    keys = jax.random.split(key, 11)

    # Deterministic parameter init (torch.nn.Linear shapes: W (D, D), b (D,)).
    scale = 1.0 / math.sqrt(D)
    params = {
        "wq": jax.random.uniform(keys[0], (D, D), jnp.float32, -scale, scale),
        "bq": jax.random.uniform(keys[1], (D,), jnp.float32, -scale, scale),
        "wk": jax.random.uniform(keys[2], (D, D), jnp.float32, -scale, scale),
        "bk": jax.random.uniform(keys[3], (D,), jnp.float32, -scale, scale),
        "wv": jax.random.uniform(keys[4], (D, D), jnp.float32, -scale, scale),
        "bv": jax.random.uniform(keys[5], (D,), jnp.float32, -scale, scale),
        "wc": jax.random.uniform(keys[6], (D, D), jnp.float32, -scale, scale),
        "bc": jax.random.uniform(keys[7], (D,), jnp.float32, -scale, scale),
    }

    q = jax.random.normal(keys[8], (B, T, D), jnp.float32)
    k = jax.random.normal(keys[9], (B, T, D), jnp.float32)
    v = jax.random.normal(keys[10], (B, T, D), jnp.float32)

    out = multi_head_attention(q, k, v, params, n_head=n_head)
    out = jax.block_until_ready(out)

    ref = _reference(q, k, v, params, n_head=n_head)
    assert out.shape == (B, T, D)
    # bf16 MXU operands + approx reciprocal -> slightly looser tolerance.
    assert jnp.allclose(out, ref, atol=3e-2, rtol=3e-2), (
        float(jnp.max(jnp.abs(out - ref))))

    print("KERNEL_OK")
</pallas_src>

<mosaic_0001>
module attributes {stable_mosaic.version = 11 : i64} {
  func.func @mha_kernel(%arg0: i32, %arg1: memref<1x8x128xbf16, #tpu.memory_space<vmem>>, %arg2: memref<1x8x128xbf16, #tpu.memory_space<vmem>>, %arg3: memref<1x8x128xbf16, #tpu.memory_space<vmem>>, %arg4: memref<128x128xbf16, #tpu.memory_space<vmem>>, %arg5: memref<1x128xf32, #tpu.memory_space<vmem>>, %arg6: memref<128x128xbf16, #tpu.memory_space<vmem>>, %arg7: memref<1x128xf32, #tpu.memory_space<vmem>>, %arg8: memref<128x128xbf16, #tpu.memory_space<vmem>>, %arg9: memref<1x128xf32, #tpu.memory_space<vmem>>, %arg10: memref<128x128xbf16, #tpu.memory_space<vmem>>, %arg11: memref<1x128xf32, #tpu.memory_space<vmem>>, %arg12: memref<1x8x128xf32, #tpu.memory_space<vmem>>) attributes {dimension_semantics = [#tpu.dimension_semantics<parallel>], iteration_bounds = array<i64: 4>, scalar_prefetch = 0 : i64, scratch_operands = 0 : i64, tpu.core_type = #tpu.core_type<tc>, window_params = [{transform_indices = @transform_0, window_bounds = array<i64: 1, 8, 128>}, {transform_indices = @transform_1, window_bounds = array<i64: 1, 8, 128>}, {transform_indices = @transform_2, window_bounds = array<i64: 1, 8, 128>}, {pipeline_mode = #tpu.pipeline_mode<synchronous>, transform_indices = @transform_3, window_bounds = array<i64: 128, 128>}, {pipeline_mode = #tpu.pipeline_mode<synchronous>, transform_indices = @transform_4, window_bounds = array<i64: 1, 128>}, {pipeline_mode = #tpu.pipeline_mode<synchronous>, transform_indices = @transform_5, window_bounds = array<i64: 128, 128>}, {pipeline_mode = #tpu.pipeline_mode<synchronous>, transform_indices = @transform_6, window_bounds = array<i64: 1, 128>}, {pipeline_mode = #tpu.pipeline_mode<synchronous>, transform_indices = @transform_7, window_bounds = array<i64: 128, 128>}, {pipeline_mode = #tpu.pipeline_mode<synchronous>, transform_indices = @transform_8, window_bounds = array<i64: 1, 128>}, {pipeline_mode = #tpu.pipeline_mode<synchronous>, transform_indices = @transform_9, window_bounds = array<i64: 128, 128>}, {pipeline_mode = #tpu.pipeline_mode<synchronous>, transform_indices = @transform_10, window_bounds = array<i64: 1, 128>}, {transform_indices = @transform_11, window_bounds = array<i64: 1, 8, 128>}]} {
    %c0 = arith.constant 0 : index
    %c0_0 = arith.constant 0 : index
    %c0_1 = arith.constant 0 : index
    %0 = vector.load %arg1[%c0, %c0_0, %c0_1] : memref<1x8x128xbf16, #tpu.memory_space<vmem>>, vector<1x8x128xbf16>
    %1 = vector.shape_cast %0 : vector<1x8x128xbf16> to vector<8x128xbf16>
    %c0_2 = arith.constant 0 : index
    %c0_3 = arith.constant 0 : index
    %c0_4 = arith.constant 0 : index
    %2 = vector.load %arg2[%c0_2, %c0_3, %c0_4] : memref<1x8x128xbf16, #tpu.memory_space<vmem>>, vector<1x8x128xbf16>
    %3 = vector.shape_cast %2 : vector<1x8x128xbf16> to vector<8x128xbf16>
    %c0_5 = arith.constant 0 : index
    %c0_6 = arith.constant 0 : index
    %c0_7 = arith.constant 0 : index
    %4 = vector.load %arg3[%c0_5, %c0_6, %c0_7] : memref<1x8x128xbf16, #tpu.memory_space<vmem>>, vector<1x8x128xbf16>
    %5 = vector.shape_cast %4 : vector<1x8x128xbf16> to vector<8x128xbf16>
    %c0_8 = arith.constant 0 : index
    %c0_9 = arith.constant 0 : index
    %6 = vector.load %arg4[%c0_8, %c0_9] : memref<128x128xbf16, #tpu.memory_space<vmem>>, vector<128x128xbf16>
    %cst = arith.constant dense<0.000000e+00> : vector<8x128xf32>
    %7 = tpu.matmul %1, %6, %cst {dimension_numbers = #tpu.dot_dimension_numbers<[1], [0], [0], [1], [0, 0, 1, 1], [], []>} : vector<8x128xbf16>, vector<128x128xbf16>, vector<8x128xf32> -> vector<8x128xf32>
    %c0_10 = arith.constant 0 : index
    %c0_11 = arith.constant 0 : index
    %8 = vector.load %arg5[%c0_10, %c0_11] : memref<1x128xf32, #tpu.memory_space<vmem>>, vector<1x128xf32>
    %9 = vector.broadcast %8 : vector<1x128xf32> to vector<8x128xf32>
    %10 = arith.addf %7, %9 : vector<8x128xf32>
    %c0_12 = arith.constant 0 : index
    %c0_13 = arith.constant 0 : index
    %11 = vector.load %arg6[%c0_12, %c0_13] : memref<128x128xbf16, #tpu.memory_space<vmem>>, vector<128x128xbf16>
    %cst_14 = arith.constant dense<0.000000e+00> : vector<8x128xf32>
    %12 = tpu.matmul %3, %11, %cst_14 {dimension_numbers = #tpu.dot_dimension_numbers<[1], [0], [0], [1], [0, 0, 1, 1], [], []>} : vector<8x128xbf16>, vector<128x128xbf16>, vector<8x128xf32> -> vector<8x128xf32>
    %c0_15 = arith.constant 0 : index
    %c0_16 = arith.constant 0 : index
    %13 = vector.load %arg7[%c0_15, %c0_16] : memref<1x128xf32, #tpu.memory_space<vmem>>, vector<1x128xf32>
    %14 = vector.broadcast %13 : vector<1x128xf32> to vector<8x128xf32>
    %15 = arith.addf %12, %14 : vector<8x128xf32>
    %c0_17 = arith.constant 0 : index
    %c0_18 = arith.constant 0 : index
    %16 = vector.load %arg8[%c0_17, %c0_18] : memref<128x128xbf16, #tpu.memory_space<vmem>>, vector<128x128xbf16>
    %cst_19 = arith.constant dense<0.000000e+00> : vector<8x128xf32>
    %17 = tpu.matmul %5, %16, %cst_19 {dimension_numbers = #tpu.dot_dimension_numbers<[1], [0], [0], [1], [0, 0, 1, 1], [], []>} : vector<8x128xbf16>, vector<128x128xbf16>, vector<8x128xf32> -> vector<8x128xf32>
    %c0_20 = arith.constant 0 : index
    %c0_21 = arith.constant 0 : index
    %18 = vector.load %arg9[%c0_20, %c0_21] : memref<1x128xf32, #tpu.memory_space<vmem>>, vector<1x128xf32>
    %19 = vector.broadcast %18 : vector<1x128xf32> to vector<8x128xf32>
    %20 = arith.addf %17, %19 : vector<8x128xf32>
    %cst_22 = arith.constant 0.353553385 : f32
    %21 = vector.broadcast %cst_22 : f32 to vector<8x128xf32>
    %22 = arith.mulf %10, %21 : vector<8x128xf32>
    %23 = vector.shape_cast %22 : vector<8x128xf32> to vector<1x8x16x8xf32>
    %24 = tpu.transpose %23, [0, 2, 1, 3] : vector<1x8x16x8xf32> -> vector<1x16x8x8xf32>
    %25 = vector.shape_cast %24 : vector<1x16x8x8xf32> to vector<16x8x8xf32>
    %26 = arith.truncf %25 : vector<16x8x8xf32> to vector<16x8x8xbf16>
    %27 = vector.shape_cast %15 : vector<8x128xf32> to vector<1x8x16x8xf32>
    %28 = tpu.transpose %27, [0, 2, 1, 3] : vector<1x8x16x8xf32> -> vector<1x16x8x8xf32>
    %29 = vector.shape_cast %28 : vector<1x16x8x8xf32> to vector<16x8x8xf32>
    %30 = arith.truncf %29 : vector<16x8x8xf32> to vector<16x8x8xbf16>
    %31 = vector.shape_cast %20 : vector<8x128xf32> to vector<1x8x16x8xf32>
    %32 = tpu.transpose %31, [0, 2, 1, 3] : vector<1x8x16x8xf32> -> vector<1x16x8x8xf32>
    %33 = vector.shape_cast %32 : vector<1x16x8x8xf32> to vector<16x8x8xf32>
    %34 = arith.truncf %33 : vector<16x8x8xf32> to vector<16x8x8xbf16>
    "tpu.trace_start"() <{level = 10 : i32, message = "bqd,bkd->bqk"}> : () -> ()
    %cst_23 = arith.constant dense<0.000000e+00> : vector<16x8x8xf32>
    %35 = tpu.matmul %26, %30, %cst_23 {dimension_numbers = #tpu.dot_dimension_numbers<[2], [2], [1], [1], [0, 0, 0, 1, 1, 1], [0], [0]>} : vector<16x8x8xbf16>, vector<16x8x8xbf16>, vector<16x8x8xf32> -> vector<16x8x8xf32>
    "tpu.trace_stop"() : () -> ()
    %cst_24 = arith.constant dense<0xFF800000> : vector<16x8xf32>
    %36 = vector.multi_reduction <maximumf>, %35, %cst_24 [2] : vector<16x8x8xf32> to vector<16x8xf32>
    %37 = vector.shape_cast %36 : vector<16x8xf32> to vector<16x8x1xf32>
    %38 = vector.broadcast %37 : vector<16x8x1xf32> to vector<16x8x8xf32>
    %39 = arith.subf %35, %38 : vector<16x8x8xf32>
    %40 = math.exp %39 : vector<16x8x8xf32>
    %cst_25 = arith.constant dense<0.000000e+00> : vector<16x8xf32>
    %41 = vector.multi_reduction <add>, %40, %cst_25 [2] : vector<16x8x8xf32> to vector<16x8xf32>
    %42 = vector.shape_cast %41 : vector<16x8xf32> to vector<16x8x1xf32>
    %43 = arith.truncf %40 : vector<16x8x8xf32> to vector<16x8x8xbf16>
    "tpu.trace_start"() <{level = 10 : i32, message = "bqk,bkd->bqd"}> : () -> ()
    %cst_26 = arith.constant dense<0.000000e+00> : vector<16x8x8xf32>
    %44 = tpu.matmul %43, %34, %cst_26 {dimension_numbers = #tpu.dot_dimension_numbers<[2], [1], [1], [2], [0, 0, 0, 1, 1, 2], [0], [0]>} : vector<16x8x8xbf16>, vector<16x8x8xbf16>, vector<16x8x8xf32> -> vector<16x8x8xf32>
    "tpu.trace_stop"() : () -> ()
    %45 = tpu.reciprocal %42 {approx = true} : vector<16x8x1xf32> -> vector<16x8x1xf32>
    %46 = vector.broadcast %45 : vector<16x8x1xf32> to vector<16x8x8xf32>
    %47 = arith.mulf %44, %46 : vector<16x8x8xf32>
    %48 = vector.shape_cast %47 : vector<16x8x8xf32> to vector<1x16x8x8xf32>
    %49 = tpu.transpose %48, [0, 2, 1, 3] : vector<1x16x8x8xf32> -> vector<1x8x16x8xf32>
    %50 = vector.shape_cast %49 : vector<1x8x16x8xf32> to vector<8x128xf32>
    %51 = arith.truncf %50 : vector<8x128xf32> to vector<8x128xbf16>
    %c0_27 = arith.constant 0 : index
    %c0_28 = arith.constant 0 : index
    %52 = vector.load %arg10[%c0_27, %c0_28] : memref<128x128xbf16, #tpu.memory_space<vmem>>, vector<128x128xbf16>
    %cst_29 = arith.constant dense<0.000000e+00> : vector<8x128xf32>
    %53 = tpu.matmul %51, %52, %cst_29 {dimension_numbers = #tpu.dot_dimension_numbers<[1], [0], [0], [1], [0, 0, 1, 1], [], []>} : vector<8x128xbf16>, vector<128x128xbf16>, vector<8x128xf32> -> vector<8x128xf32>
    %c0_30 = arith.constant 0 : index
    %c0_31 = arith.constant 0 : index
    %54 = vector.load %arg11[%c0_30, %c0_31] : memref<1x128xf32, #tpu.memory_space<vmem>>, vector<1x128xf32>
    %55 = vector.broadcast %54 : vector<1x128xf32> to vector<8x128xf32>
    %56 = arith.addf %53, %55 : vector<8x128xf32>
    %57 = vector.shape_cast %56 : vector<8x128xf32> to vector<1x8x128xf32>
    %c0_32 = arith.constant 0 : index
    %c0_33 = arith.constant 0 : index
    %c0_34 = arith.constant 0 : index
    %58 = vector.load %arg12[%c0_32, %c0_33, %c0_34] : memref<1x8x128xf32, #tpu.memory_space<vmem>>, vector<1x8x128xf32>
    tpu.vector_store %arg12[%c0_32, %c0_33, %c0_34], %57 {strides = array<i32>} : memref<1x8x128xf32, #tpu.memory_space<vmem>>, vector<1x8x128xf32>,
    return
  }
  func.func @transform_0(%arg0: i32) -> (i32, i32, i32) {
    %c0_i32 = arith.constant 0 : i32
    %c0_i32_0 = arith.constant 0 : i32
    %c0_i32_1 = arith.constant 0 : i32
    return %arg0, %c0_i32, %c0_i32_0 : i32, i32, i32
  }
  func.func @transform_1(%arg0: i32) -> (i32, i32, i32) {
    %c0_i32 = arith.constant 0 : i32
    %c0_i32_0 = arith.constant 0 : i32
    %c0_i32_1 = arith.constant 0 : i32
    return %arg0, %c0_i32, %c0_i32_0 : i32, i32, i32
  }
  func.func @transform_2(%arg0: i32) -> (i32, i32, i32) {
    %c0_i32 = arith.constant 0 : i32
    %c0_i32_0 = arith.constant 0 : i32
    %c0_i32_1 = arith.constant 0 : i32
    return %arg0, %c0_i32, %c0_i32_0 : i32, i32, i32
  }
  func.func @transform_3(%arg0: i32) -> (i32, i32) {
    %c0_i32 = arith.constant 0 : i32
    %c0_i32_0 = arith.constant 0 : i32
    %c0_i32_1 = arith.constant 0 : i32
    return %c0_i32, %c0_i32_0 : i32, i32
  }
  func.func @transform_4(%arg0: i32) -> (i32, i32) {
    %c0_i32 = arith.constant 0 : i32
    %c0_i32_0 = arith.constant 0 : i32
    %c0_i32_1 = arith.constant 0 : i32
    return %c0_i32, %c0_i32_0 : i32, i32
  }
  func.func @transform_5(%arg0: i32) -> (i32, i32) {
    %c0_i32 = arith.constant 0 : i32
    %c0_i32_0 = arith.constant 0 : i32
    %c0_i32_1 = arith.constant 0 : i32
    return %c0_i32, %c0_i32_0 : i32, i32
  }
  func.func @transform_6(%arg0: i32) -> (i32, i32) {
    %c0_i32 = arith.constant 0 : i32
    %c0_i32_0 = arith.constant 0 : i32
    %c0_i32_1 = arith.constant 0 : i32
    return %c0_i32, %c0_i32_0 : i32, i32
  }
  func.func @transform_7(%arg0: i32) -> (i32, i32) {
    %c0_i32 = arith.constant 0 : i32
    %c0_i32_0 = arith.constant 0 : i32
    %c0_i32_1 = arith.constant 0 : i32
    return %c0_i32, %c0_i32_0 : i32, i32
  }
  func.func @transform_8(%arg0: i32) -> (i32, i32) {
    %c0_i32 = arith.constant 0 : i32
    %c0_i32_0 = arith.constant 0 : i32
    %c0_i32_1 = arith.constant 0 : i32
    return %c0_i32, %c0_i32_0 : i32, i32
  }
  func.func @transform_9(%arg0: i32) -> (i32, i32) {
    %c0_i32 = arith.constant 0 : i32
    %c0_i32_0 = arith.constant 0 : i32
    %c0_i32_1 = arith.constant 0 : i32
    return %c0_i32, %c0_i32_0 : i32, i32
  }
  func.func @transform_10(%arg0: i32) -> (i32, i32) {
    %c0_i32 = arith.constant 0 : i32
    %c0_i32_0 = arith.constant 0 : i32
    %c0_i32_1 = arith.constant 0 : i32
    return %c0_i32, %c0_i32_0 : i32, i32
  }
  func.func @transform_11(%arg0: i32) -> (i32, i32, i32) {
    %c0_i32 = arith.constant 0 : i32
    %c0_i32_0 = arith.constant 0 : i32
    %c0_i32_1 = arith.constant 0 : i32
    return %arg0, %c0_i32, %c0_i32_0 : i32, i32, i32
  }
}

</mosaic_0001>

<llo_original>
// kernel: tpu_custom_call.1
$region0: #{tpu_custom_call.1}
  #allocation0 [shape = 'u32[]', space=smem, size = 0x4, offset = 0x4, fixed_abs, tag = 'smem constant byte address 0x4 - core index']
  #allocation1 [shape = 'u32[144,128]{1,0:T(1,128)}', space=vmem, size = 0x12000, scoped, tag = 'internal scratch']
  %s0 = inlined_call_operand.hbm [shape: bf16[4,8,128], index: 0, kind: input, shape index: {}]
  %s1 = inlined_call_operand.hbm [shape: bf16[4,8,128], index: 1, kind: input, shape index: {}]
  %s2 = inlined_call_operand.hbm [shape: bf16[4,8,128], index: 2, kind: input, shape index: {}]
  %s3 = inlined_call_operand.hbm [shape: bf16[128,128], index: 3, kind: input, shape index: {}]
  %s4 = inlined_call_operand.vmem [shape: f32[1,128], index: 4, kind: input, shape index: {}]
  %s5 = inlined_call_operand.hbm [shape: bf16[128,128], index: 5, kind: input, shape index: {}]
  %s6 = inlined_call_operand.vmem [shape: f32[1,128], index: 6, kind: input, shape index: {}]
  %s7 = inlined_call_operand.hbm [shape: bf16[128,128], index: 7, kind: input, shape index: {}]
  %s8 = inlined_call_operand.vmem [shape: f32[1,128], index: 8, kind: input, shape index: {}]
  %s9 = inlined_call_operand.hbm [shape: bf16[128,128], index: 9, kind: input, shape index: {}]
  %s10 = inlined_call_operand.vmem [shape: f32[1,128], index: 10, kind: input, shape index: {}]
  %s11 = inlined_call_operand.hbm [shape: f32[4,8,128], index: 11, kind: output, shape index: {}]
  %s12 = sld [smem:[#allocation0]]
  $region105: #{tpu_custom_call.1} parent=0
    _
  %s14 = ssub.s32 1, %s12
  %s15 = scalar_select 0, %s14, %s12
  $region1: #{tpu_custom_call.1} parent=0
    #allocation2 [shape = 'u8[4096]{0}', space=vmem, size = 0x1000, scoped, tag = 'input window, operand 0']
    #allocation3 [shape = 's32[2]{0}', space=sflag, size = 0x8, scoped, tag = 'scoped memory for tpu_custom_call.1']
    #allocation4 [shape = 's32[2]{0}', space=sflag, size = 0x8, scoped, tag = 'scoped memory for tpu_custom_call.1']
    #allocation5 [shape = 'u8[4096]{0}', space=vmem, size = 0x1000, scoped, tag = 'input window, operand 1']
    #allocation6 [shape = 's32[2]{0}', space=sflag, size = 0x8, scoped, tag = 'scoped memory for tpu_custom_call.1']
    #allocation7 [shape = 'u8[4096]{0}', space=vmem, size = 0x1000, scoped, tag = 'input window, operand 2']
    #allocation8 [shape = 'u8[32768]{0}', space=vmem, size = 0x8000, scoped, tag = 'input window, operand 3, single buffered']
    #allocation9 [shape = 's32[1]{0}', space=sflag, size = 0x4, scoped, tag = 'scoped memory for tpu_custom_call.1']
    #allocation10 [shape = 'u8[32768]{0}', space=vmem, size = 0x8000, scoped, tag = 'input window, operand 5, single buffered']
    #allocation11 [shape = 'u8[32768]{0}', space=vmem, size = 0x8000, scoped, tag = 'input window, operand 7, single buffered']
    #allocation12 [shape = 's32[1]{0}', space=sflag, size = 0x4, scoped, tag = 'scoped memory for tpu_custom_call.1']
    #allocation13 [shape = 'u8[32768]{0}', space=vmem, size = 0x8000, scoped, tag = 'input window, operand 9, single buffered']
    #allocation14 [shape = 'u8[8192]{0}', space=vmem, size = 0x2000, scoped, tag = 'output window, operand 0']
    %16 = vsyncpa [#allocation3], 0
    %s17 = scalar_lea.sflag [#allocation3], 1
    %18 = vsyncpa %s17, 0
    %19 = vsyncpa [#allocation6], 0
    %s20 = scalar_lea.sflag [#allocation6], 1
    %21 = vsyncpa %s20, 0
    %22 = vsyncpa [#allocation9], 0
    %23 = vsyncpa [#allocation12], 0
    %24 = vsyncpa [#allocation4], 0
    %s25 = scalar_lea.sflag [#allocation4], 1
    %26 = vsyncpa %s25, 0
    loop: start=0, step=1, limit=6
    $region2: #{tpu_custom_call.1} parent=1 // loop_pre_header
      _
    $region3: #{tpu_custom_call.1} parent=1 // loop_header
      %s28 = sphi 0, %s32
      %p29 = scmp.ge.s32.totalorder %s28, 6
      %s38 = sphi 0, %s40
      %s41 = sphi 0, %s38
      %s42 = sphi 0, %s41
      %s58 = sphi 0, %s42
      %s64 = sphi 0, %s66
      %s67 = sphi 0, %s64
      %s68 = sphi 0, %s67
      %s84 = sphi 0, %s68
      %s90 = sphi 0, %s92
      %s93 = sphi 0, %s90
      %s94 = sphi 0, %s93
      %s110 = sphi 0, %s94
      %s114 = sphi 0, %s114
      %s116 = sphi 0, %s114
      %s117 = sphi 0, %s116
      %s131 = sphi 0, %s117
      %s135 = sphi 0, %s135
      %s137 = sphi 0, %s135
      %s138 = sphi 0, %s137
      %s152 = sphi 0, %s138
      %s156 = sphi 0, %s156
      %s158 = sphi 0, %s156
      %s159 = sphi 0, %s158
      %s173 = sphi 0, %s159
      %s177 = sphi 0, %s177
      %s179 = sphi 0, %s177
      %s180 = sphi 0, %s179
      %s194 = sphi 0, %s180
      %s198 = sphi 0, %s198
      %s200 = sphi 0, %s198
      %s201 = sphi 0, %s200
      %s215 = sphi 0, %s201
      %s219 = sphi 0, %s219
      %s221 = sphi 0, %s219
      %s222 = sphi 0, %s221
      %s236 = sphi 0, %s222
      %s240 = sphi 0, %s240
      %s242 = sphi 0, %s240
      %s243 = sphi 0, %s242
      %s257 = sphi 0, %s243
      %s261 = sphi 0, %s261
      %s263 = sphi 0, %s261
      %s264 = sphi 0, %s263
      %s278 = sphi 0, %s264
      %s284 = sphi 0, %s286
      %s287 = sphi 0, %s284
      %s288 = sphi 0, %s287
      %s304 = sphi 0, %s288
    $region4: #{tpu_custom_call.1} parent=1 // loop_header_branch
      %31 = sbr.rel (%p29) target = $region8
    $region5: #{tpu_custom_call.1} parent=1 // loop_body
      %s33 = ssub.s32 %s28, 1
      %s34 = ssub.s32 %s28, 2
      %s35 = sadd.s32 %s28, 1
      %s36 = ssub.s32 %s28, %s35
      %p37 = scmp.eq.s32.totalorder %s36, 0
      %s39 = sadd.s32 %s38, 1
      %s40 = scalar_select %p37, %s38, %s39
      %p43 = pneg %p37
      %p44 = scmp.eq.s32.totalorder %s28, 3
      %p45 = por %p43, %p44
      %p46 = scmp.ne.s32.totalorder %s38, %s41
      %p47 = scmp.eq.s32.totalorder %s28, 0
      %p48 = por %p46, %p47
      %p49 = scmp.ne.s32.totalorder %s38, %s41
      %p50 = scmp.eq.s32.totalorder %s33, 3
      %p51 = por %p49, %p50
      %p52 = scmp.ne.s32.totalorder %s41, %s42
      %p53 = scmp.eq.s32.totalorder %s33, 0
      %p54 = por %p52, %p53
      %p55 = scmp.ne.s32.totalorder %s41, %s42
      %p56 = scmp.eq.s32.totalorder %s34, 3
      %p57 = por %p55, %p56
      %p59 = scmp.ne.s32.totalorder %s42, %s58
      %p60 = scmp.eq.s32.totalorder %s34, 0
      %p61 = por %p59, %p60
      %s62 = ssub.s32 %s28, %s35
      %p63 = scmp.eq.s32.totalorder %s62, 0
      %s65 = sadd.s32 %s64, 1
      %s66 = scalar_select %p63, %s64, %s65
      %p69 = pneg %p63
      %p70 = scmp.eq.s32.totalorder %s28, 3
      %p71 = por %p69, %p70
      %p72 = scmp.ne.s32.totalorder %s64, %s67
      %p73 = scmp.eq.s32.totalorder %s28, 0
      %p74 = por %p72, %p73
      %p75 = scmp.ne.s32.totalorder %s64, %s67
      %p76 = scmp.eq.s32.totalorder %s33, 3
      %p77 = por %p75, %p76
      %p78 = scmp.ne.s32.totalorder %s67, %s68
      %p79 = scmp.eq.s32.totalorder %s33, 0
      %p80 = por %p78, %p79
      %p81 = scmp.ne.s32.totalorder %s67, %s68
      %p82 = scmp.eq.s32.totalorder %s34, 3
      %p83 = por %p81, %p82
      %p85 = scmp.ne.s32.totalorder %s68, %s84
      %p86 = scmp.eq.s32.totalorder %s34, 0
      %p87 = por %p85, %p86
      %s88 = ssub.s32 %s28, %s35
      %p89 = scmp.eq.s32.totalorder %s88, 0
      %s91 = sadd.s32 %s90, 1
      %s92 = scalar_select %p89, %s90, %s91
      %p95 = pneg %p89
      %p96 = scmp.eq.s32.totalorder %s28, 3
      %p97 = por %p95, %p96
      %p98 = scmp.ne.s32.totalorder %s90, %s93
      %p99 = scmp.eq.s32.totalorder %s28, 0
      %p100 = por %p98, %p99
      %p101 = scmp.ne.s32.totalorder %s90, %s93
      %p102 = scmp.eq.s32.totalorder %s33, 3
      %p103 = por %p101, %p102
      %p104 = scmp.ne.s32.totalorder %s93, %s94
      %p105 = scmp.eq.s32.totalorder %s33, 0
      %p106 = por %p104, %p105
      %p107 = scmp.ne.s32.totalorder %s93, %s94
      %p108 = scmp.eq.s32.totalorder %s34, 3
      %p109 = por %p107, %p108
      %p111 = scmp.ne.s32.totalorder %s94, %s110
      %p112 = scmp.eq.s32.totalorder %s34, 0
      %p113 = por %p111, %p112
      %s115 = sadd.s32 %s114, 1
      %p118 = scmp.eq.s32.totalorder %s28, 3
      %p119 = scmp.ne.s32.totalorder %s114, %s116
      %p120 = scmp.eq.s32.totalorder %s28, 0
      %p121 = por %p119, %p120
      %p122 = scmp.ne.s32.totalorder %s114, %s116
      %p123 = scmp.eq.s32.totalorder %s33, 3
      %p124 = por %p122, %p123
      %p125 = scmp.ne.s32.totalorder %s116, %s117
      %p126 = scmp.eq.s32.totalorder %s33, 0
      %p127 = por %p125, %p126
      %p128 = scmp.ne.s32.totalorder %s116, %s117
      %p129 = scmp.eq.s32.totalorder %s34, 3
      %p130 = por %p128, %p129
      %p132 = scmp.ne.s32.totalorder %s117, %s131
      %p133 = scmp.eq.s32.totalorder %s34, 0
      %p134 = por %p132, %p133
      %s136 = sadd.s32 %s135, 1
      %p139 = scmp.eq.s32.totalorder %s28, 3
      %p140 = scmp.ne.s32.totalorder %s135, %s137
      %p141 = scmp.eq.s32.totalorder %s28, 0
      %p142 = por %p140, %p141
      %p143 = scmp.ne.s32.totalorder %s135, %s137
      %p144 = scmp.eq.s32.totalorder %s33, 3
      %p145 = por %p143, %p144
      %p146 = scmp.ne.s32.totalorder %s137, %s138
      %p147 = scmp.eq.s32.totalorder %s33, 0
      %p148 = por %p146, %p147
      %p149 = scmp.ne.s32.totalorder %s137, %s138
      %p150 = scmp.eq.s32.totalorder %s34, 3
      %p151 = por %p149, %p150
      %p153 = scmp.ne.s32.totalorder %s138, %s152
      %p154 = scmp.eq.s32.totalorder %s34, 0
      %p155 = por %p153, %p154
      %s157 = sadd.s32 %s156, 1
      %p160 = scmp.eq.s32.totalorder %s28, 3
      %p161 = scmp.ne.s32.totalorder %s156, %s158
      %p162 = scmp.eq.s32.totalorder %s28, 0
      %p163 = por %p161, %p162
      %p164 = scmp.ne.s32.totalorder %s156, %s158
      %p165 = scmp.eq.s32.totalorder %s33, 3
      %p166 = por %p164, %p165
      %p167 = scmp.ne.s32.totalorder %s158, %s159
      %p168 = scmp.eq.s32.totalorder %s33, 0
      %p169 = por %p167, %p168
      %p170 = scmp.ne.s32.totalorder %s158, %s159
      %p171 = scmp.eq.s32.totalorder %s34, 3
      %p172 = por %p170, %p171
      %p174 = scmp.ne.s32.totalorder %s159, %s173
      %p175 = scmp.eq.s32.totalorder %s34, 0
      %p176 = por %p174, %p175
      %s178 = sadd.s32 %s177, 1
      %p181 = scmp.eq.s32.totalorder %s28, 3
      %p182 = scmp.ne.s32.totalorder %s177, %s179
      %p183 = scmp.eq.s32.totalorder %s28, 0
      %p184 = por %p182, %p183
      %p185 = scmp.ne.s32.totalorder %s177, %s179
      %p186 = scmp.eq.s32.totalorder %s33, 3
      %p187 = por %p185, %p186
      %p188 = scmp.ne.s32.totalorder %s179, %s180
      %p189 = scmp.eq.s32.totalorder %s33, 0
      %p190 = por %p188, %p189
      %p191 = scmp.ne.s32.totalorder %s179, %s180
      %p192 = scmp.eq.s32.totalorder %s34, 3
      %p193 = por %p191, %p192
      %p195 = scmp.ne.s32.totalorder %s180, %s194
      %p196 = scmp.eq.s32.totalorder %s34, 0
      %p197 = por %p195, %p196
      %s199 = sadd.s32 %s198, 1
      %p202 = scmp.eq.s32.totalorder %s28, 3
      %p203 = scmp.ne.s32.totalorder %s198, %s200
      %p204 = scmp.eq.s32.totalorder %s28, 0
      %p205 = por %p203, %p204
      %p206 = scmp.ne.s32.totalorder %s198, %s200
      %p207 = scmp.eq.s32.totalorder %s33, 3
      %p208 = por %p206, %p207
      %p209 = scmp.ne.s32.totalorder %s200, %s201
      %p210 = scmp.eq.s32.totalorder %s33, 0
      %p211 = por %p209, %p210
      %p212 = scmp.ne.s32.totalorder %s200, %s201
      %p213 = scmp.eq.s32.totalorder %s34, 3
      %p214 = por %p212, %p213
      %p216 = scmp.ne.s32.totalorder %s201, %s215
      %p217 = scmp.eq.s32.totalorder %s34, 0
      %p218 = por %p216, %p217
      %s220 = sadd.s32 %s219, 1
      %p223 = scmp.eq.s32.totalorder %s28, 3
      %p224 = scmp.ne.s32.totalorder %s219, %s221
      %p225 = scmp.eq.s32.totalorder %s28, 0
      %p226 = por %p224, %p225
      %p227 = scmp.ne.s32.totalorder %s219, %s221
      %p228 = scmp.eq.s32.totalorder %s33, 3
      %p229 = por %p227, %p228
      %p230 = scmp.ne.s32.totalorder %s221, %s222
      %p231 = scmp.eq.s32.totalorder %s33, 0
      %p232 = por %p230, %p231
      %p233 = scmp.ne.s32.totalorder %s221, %s222
      %p234 = scmp.eq.s32.totalorder %s34, 3
      %p235 = por %p233, %p234
      %p237 = scmp.ne.s32.totalorder %s222, %s236
      %p238 = scmp.eq.s32.totalorder %s34, 0
      %p239 = por %p237, %p238
      %s241 = sadd.s32 %s240, 1
      %p244 = scmp.eq.s32.totalorder %s28, 3
      %p245 = scmp.ne.s32.totalorder %s240, %s242
      %p246 = scmp.eq.s32.totalorder %s28, 0
      %p247 = por %p245, %p246
      %p248 = scmp.ne.s32.totalorder %s240, %s242
      %p249 = scmp.eq.s32.totalorder %s33, 3
      %p250 = por %p248, %p249
      %p251 = scmp.ne.s32.totalorder %s242, %s243
      %p252 = scmp.eq.s32.totalorder %s33, 0
      %p253 = por %p251, %p252
      %p254 = scmp.ne.s32.totalorder %s242, %s243
      %p255 = scmp.eq.s32.totalorder %s34, 3
      %p256 = por %p254, %p255
      %p258 = scmp.ne.s32.totalorder %s243, %s257
      %p259 = scmp.eq.s32.totalorder %s34, 0
      %p260 = por %p258, %p259
      %s262 = sadd.s32 %s261, 1
      %p265 = scmp.eq.s32.totalorder %s28, 3
      %p266 = scmp.ne.s32.totalorder %s261, %s263
      %p267 = scmp.eq.s32.totalorder %s28, 0
      %p268 = por %p266, %p267
      %p269 = scmp.ne.s32.totalorder %s261, %s263
      %p270 = scmp.eq.s32.totalorder %s33, 3
      %p271 = por %p269, %p270
      %p272 = scmp.ne.s32.totalorder %s263, %s264
      %p273 = scmp.eq.s32.totalorder %s33, 0
      %p274 = por %p272, %p273
      %p275 = scmp.ne.s32.totalorder %s263, %s264
      %p276 = scmp.eq.s32.totalorder %s34, 3
      %p277 = por %p275, %p276
      %p279 = scmp.ne.s32.totalorder %s264, %s278
      %p280 = scmp.eq.s32.totalorder %s34, 0
      %p281 = por %p279, %p280
      %s282 = ssub.s32 %s28, %s35
      %p283 = scmp.eq.s32.totalorder %s282, 0
      %s285 = sadd.s32 %s284, 1
      %s286 = scalar_select %p283, %s284, %s285
      %p289 = pneg %p283
      %p290 = scmp.eq.s32.totalorder %s28, 3
      %p291 = por %p289, %p290
      %p292 = scmp.ne.s32.totalorder %s284, %s287
      %p293 = scmp.eq.s32.totalorder %s28, 0
      %p294 = por %p292, %p293
      %p295 = scmp.ne.s32.totalorder %s284, %s287
      %p296 = scmp.eq.s32.totalorder %s33, 3
      %p297 = por %p295, %p296
      %p298 = scmp.ne.s32.totalorder %s287, %s288
      %p299 = scmp.eq.s32.totalorder %s33, 0
      %p300 = por %p298, %p299
      %p301 = scmp.ne.s32.totalorder %s287, %s288
      %p302 = scmp.eq.s32.totalorder %s34, 3
      %p303 = por %p301, %p302
      %p305 = scmp.ne.s32.totalorder %s288, %s304
      %p306 = scmp.eq.s32.totalorder %s34, 0
      %p307 = por %p305, %p306
      %p308 = scmp.le.s32.totalorder 1, %s28
      %p309 = scmp.lt.s32.totalorder %s28, 5
      %p310 = pnand %p308, %p309
      %p311 = pneg %p310
      // Predicated region
      $region9: #{tpu_custom_call.1} parent=5 // pred_check
        _
      $region10: #{tpu_custom_call.1} parent=5 // pred_check_branch
        %313 = sbr.rel (%p310) target = $region12
      $region11: #{tpu_custom_call.1} parent=5 // pred_region
        %s314 = ssub.s32 %s28, 1
        // Predicated region
        $region13: #{tpu_custom_call.1} parent=11 // pred_check
          %p315 = pneg %p127
        $region14: #{tpu_custom_call.1} parent=11 // pred_check_branch
          %317 = sbr.rel (%p315) target = $region16
        $region15: #{tpu_custom_call.1} parent=11 // pred_region
          %s319 = ssub.s32 1024, 1024
          %320 = vsyncadd [#allocation9], %s319
          %s321 = sshll.u32 [#allocation8], 4
          %s322 = int_to_ptr.vmem [resolvable:$true] %s321
          %327 = dma.hbm_to_vmem [thread:$0]  %s3, 1024, %s322, [#allocation9], 64, 64, 4
        $region16: #{tpu_custom_call.1} parent=11 // pred_fallthru
          _
        // Predicated region
        $region17: #{tpu_custom_call.1} parent=11 // pred_check
          %p328 = pneg %p148
        $region18: #{tpu_custom_call.1} parent=11 // pred_check_branch
          %330 = sbr.rel (%p328) target = $region20
        $region19: #{tpu_custom_call.1} parent=11 // pred_region
          _
        $region20: #{tpu_custom_call.1} parent=11 // pred_fallthru
          _
        // Predicated region
        $region21: #{tpu_custom_call.1} parent=11 // pred_check
          %p331 = pneg %p169
        $region22: #{tpu_custom_call.1} parent=11 // pred_check_branch
          %333 = sbr.rel (%p331) target = $region24
        $region23: #{tpu_custom_call.1} parent=11 // pred_region
          %s335 = ssub.s32 1024, 1024
          %336 = vsyncadd [#allocation9], %s335
          %s337 = sshll.u32 [#allocation10], 4
          %s338 = int_to_ptr.vmem [resolvable:$true] %s337
          %343 = dma.hbm_to_vmem [thread:$0]  %s5, 1024, %s338, [#allocation9], 64, 64, 4
        $region24: #{tpu_custom_call.1} parent=11 // pred_fallthru
          _
        // Predicated region
        $region25: #{tpu_custom_call.1} parent=11 // pred_check
          %p344 = pneg %p190
        $region26: #{tpu_custom_call.1} parent=11 // pred_check_branch
          %346 = sbr.rel (%p344) target = $region28
        $region27: #{tpu_custom_call.1} parent=11 // pred_region
          _
        $region28: #{tpu_custom_call.1} parent=11 // pred_fallthru
          _
        // Predicated region
        $region29: #{tpu_custom_call.1} parent=11 // pred_check
          %p347 = pneg %p211
        $region30: #{tpu_custom_call.1} parent=11 // pred_check_branch
          %349 = sbr.rel (%p347) target = $region32
        $region31: #{tpu_custom_call.1} parent=11 // pred_region
          %s351 = ssub.s32 1024, 1024
          %352 = vsyncadd [#allocation12], %s351
          %s353 = sshll.u32 [#allocation11], 4
          %s354 = int_to_ptr.vmem [resolvable:$true] %s353
          %359 = dma.hbm_to_vmem [thread:$0]  %s7, 1024, %s354, [#allocation12], 64, 64, 4
        $region32: #{tpu_custom_call.1} parent=11 // pred_fallthru
          _
        // Predicated region
        $region33: #{tpu_custom_call.1} parent=11 // pred_check
          %p360 = pneg %p232
        $region34: #{tpu_custom_call.1} parent=11 // pred_check_branch
          %362 = sbr.rel (%p360) target = $region36
        $region35: #{tpu_custom_call.1} parent=11 // pred_region
          _
        $region36: #{tpu_custom_call.1} parent=11 // pred_fallthru
          _
        // Predicated region
        $region37: #{tpu_custom_call.1} parent=11 // pred_check
          %p363 = pneg %p253
        $region38: #{tpu_custom_call.1} parent=11 // pred_check_branch
          %365 = sbr.rel (%p363) target = $region40
        $region39: #{tpu_custom_call.1} parent=11 // pred_region
          %s367 = ssub.s32 1024, 1024
          %368 = vsyncadd [#allocation12], %s367
          %s369 = sshll.u32 [#allocation13], 4
          %s370 = int_to_ptr.vmem [resolvable:$true] %s369
          %375 = dma.hbm_to_vmem [thread:$0]  %s9, 1024, %s370, [#allocation12], 64, 64, 4
        $region40: #{tpu_custom_call.1} parent=11 // pred_fallthru
          _
        // Predicated region
        $region41: #{tpu_custom_call.1} parent=11 // pred_check
          %p376 = pneg %p274
        $region42: #{tpu_custom_call.1} parent=11 // pred_check_branch
          %378 = sbr.rel (%p376) target = $region44
        $region43: #{tpu_custom_call.1} parent=11 // pred_region
          _
        $region44: #{tpu_custom_call.1} parent=11 // pred_fallthru
          _
      $region12: #{tpu_custom_call.1} parent=5 // pred_fallthru
        _
      %p379 = scmp.lt.s32.totalorder %s28, 4
      // Predicated region
      $region45: #{tpu_custom_call.1} parent=5 // pred_check
        %p380 = pneg %p379
      $region46: #{tpu_custom_call.1} parent=5 // pred_check_branch
        %382 = sbr.rel (%p380) target = $region48
      $region47: #{tpu_custom_call.1} parent=5 // pred_region
        // Predicated region
        $region49: #{tpu_custom_call.1} parent=47 // pred_check
          %p383 = pneg %p48
        $region50: #{tpu_custom_call.1} parent=47 // pred_check_branch
          %385 = sbr.rel (%p383) target = $region52
        $region51: #{tpu_custom_call.1} parent=47 // pred_region
          %s386 = sand.u32 %s38, 1
          %s387 = scalar_lea.sflag [#allocation3], %s386
          %s388 = sand.u32 %s38, 1
          %s389 = smul.addr %s388, 4
          %s390 = scalar_lea.vmem [#allocation2], %s389
          %s392 = ssub.s32 64, 64
          %393 = vsyncadd %s387, %s392
          %s394 = smul.addr %s28, 64
          %s395 = scalar_lea.hbm %s0, %s394
          %s397 = sshll.u32 %s390, 4
          %s398 = int_to_ptr.vmem [resolvable:$true] %s397
          %400 = dma.hbm_to_vmem [thread:$0]  %s395, 64, %s398, %s387
        $region52: #{tpu_custom_call.1} parent=47 // pred_fallthru
          _
        // Predicated region
        $region53: #{tpu_custom_call.1} parent=47 // pred_check
          %p401 = pneg %p74
        $region54: #{tpu_custom_call.1} parent=47 // pred_check_branch
          %403 = sbr.rel (%p401) target = $region56
        $region55: #{tpu_custom_call.1} parent=47 // pred_region
          %s404 = sand.u32 %s28, 1
          %s405 = scalar_lea.sflag [#allocation6], %s404
          %s406 = sand.u32 %s64, 1
          %s407 = smul.addr %s406, 4
          %s408 = scalar_lea.vmem [#allocation5], %s407
          %s410 = ssub.s32 64, 64
          %411 = vsyncadd %s405, %s410
          %s412 = smul.addr %s28, 64
          %s413 = scalar_lea.hbm %s1, %s412
          %s415 = sshll.u32 %s408, 4
          %s416 = int_to_ptr.vmem [resolvable:$true] %s415
          %418 = dma.hbm_to_vmem [thread:$0]  %s413, 64, %s416, %s405
        $region56: #{tpu_custom_call.1} parent=47 // pred_fallthru
          _
        // Predicated region
        $region57: #{tpu_custom_call.1} parent=47 // pred_check
          %p419 = pneg %p100
        $region58: #{tpu_custom_call.1} parent=47 // pred_check_branch
          %421 = sbr.rel (%p419) target = $region60
        $region59: #{tpu_custom_call.1} parent=47 // pred_region
          %s422 = sand.u32 %s28, 1
          %s423 = scalar_lea.sflag [#allocation6], %s422
          %s424 = sand.u32 %s90, 1
          %s425 = smul.addr %s424, 4
          %s426 = scalar_lea.vmem [#allocation7], %s425
          %s428 = ssub.s32 64, 64
          %429 = vsyncadd %s423, %s428
          %s430 = smul.addr %s28, 64
          %s431 = scalar_lea.hbm %s2, %s430
          %s433 = sshll.u32 %s426, 4
          %s434 = int_to_ptr.vmem [resolvable:$true] %s433
          %436 = dma.hbm_to_vmem [thread:$0]  %s431, 64, %s434, %s423
        $region60: #{tpu_custom_call.1} parent=47 // pred_fallthru
          _
      $region48: #{tpu_custom_call.1} parent=5 // pred_fallthru
        _
      %p437 = scmp.le.s32.totalorder 1, %s28
      %p438 = scmp.lt.s32.totalorder %s28, 5
      %p439 = pnand %p437, %p438
      %p440 = pneg %p439
      // Predicated region
      $region61: #{tpu_custom_call.1} parent=5 // pred_check
        _
      $region62: #{tpu_custom_call.1} parent=5 // pred_check_branch
        %442 = sbr.rel (%p439) target = $region64
      $region63: #{tpu_custom_call.1} parent=5 // pred_region
        %s443 = ssub.s32 %s28, 1
        %s444 = sand.u32 %s41, 1
        %s445 = scalar_lea.sflag [#allocation3], %s444
        %s446 = sand.u32 %s41, 1
        %s447 = smul.addr %s446, 4
        %s448 = scalar_lea.vmem [#allocation2], %s447
        // Predicated region
        $region65: #{tpu_custom_call.1} parent=63 // pred_check
          %p449 = pneg %p54
        $region66: #{tpu_custom_call.1} parent=63 // pred_check_branch
          %451 = sbr.rel (%p449) target = $region68
        $region67: #{tpu_custom_call.1} parent=63 // pred_region
          %452 = dma.done %s445, 64
        $region68: #{tpu_custom_call.1} parent=63 // pred_fallthru
          _
        %s453 = sand.u32 %s33, 1
        %s454 = scalar_lea.sflag [#allocation6], %s453
        %s455 = sand.u32 %s67, 1
        %s456 = smul.addr %s455, 4
        %s457 = scalar_lea.vmem [#allocation5], %s456
        // Predicated region
        $region69: #{tpu_custom_call.1} parent=63 // pred_check
          %p458 = pneg %p80
        $region70: #{tpu_custom_call.1} parent=63 // pred_check_branch
          %460 = sbr.rel (%p458) target = $region72
        $region71: #{tpu_custom_call.1} parent=63 // pred_region
          %461 = dma.done %s454, 64
        $region72: #{tpu_custom_call.1} parent=63 // pred_fallthru
          _
        %s462 = sand.u32 %s33, 1
        %s463 = scalar_lea.sflag [#allocation6], %s462
        %s464 = sand.u32 %s93, 1
        %s465 = smul.addr %s464, 4
        %s466 = scalar_lea.vmem [#allocation7], %s465
        // Predicated region
        $region73: #{tpu_custom_call.1} parent=63 // pred_check
          %p467 = pneg %p106
        $region74: #{tpu_custom_call.1} parent=63 // pred_check_branch
          %469 = sbr.rel (%p467) target = $region76
        $region75: #{tpu_custom_call.1} parent=63 // pred_region
          %470 = dma.done %s463, 64
        $region76: #{tpu_custom_call.1} parent=63 // pred_fallthru
          _
        // Predicated region
        $region77: #{tpu_custom_call.1} parent=63 // pred_check
          %p471 = pneg %p127
        $region78: #{tpu_custom_call.1} parent=63 // pred_check_branch
          %473 = sbr.rel (%p471) target = $region80
        $region79: #{tpu_custom_call.1} parent=63 // pred_region
          %474 = dma.done [#allocation9], 1024
        $region80: #{tpu_custom_call.1} parent=63 // pred_fallthru
          _
        // Predicated region
        $region81: #{tpu_custom_call.1} parent=63 // pred_check
          %p475 = pneg %p169
        $region82: #{tpu_custom_call.1} parent=63 // pred_check_branch
          %477 = sbr.rel (%p475) target = $region84
        $region83: #{tpu_custom_call.1} parent=63 // pred_region
          %478 = dma.done [#allocation9], 1024
        $region84: #{tpu_custom_call.1} parent=63 // pred_fallthru
          _
        // Predicated region
        $region85: #{tpu_custom_call.1} parent=63 // pred_check
          %p479 = pneg %p211
        $region86: #{tpu_custom_call.1} parent=63 // pred_check_branch
          %481 = sbr.rel (%p479) target = $region88
        $region87: #{tpu_custom_call.1} parent=63 // pred_region
          %482 = dma.done [#allocation12], 1024
        $region88: #{tpu_custom_call.1} parent=63 // pred_fallthru
          _
        // Predicated region
        $region89: #{tpu_custom_call.1} parent=63 // pred_check
          %p483 = pneg %p253
        $region90: #{tpu_custom_call.1} parent=63 // pred_check_branch
          %485 = sbr.rel (%p483) target = $region92
        $region91: #{tpu_custom_call.1} parent=63 // pred_region
          %486 = dma.done [#allocation12], 1024
        $region92: #{tpu_custom_call.1} parent=63 // pred_fallthru
          _
        %s487 = sand.u32 %s41, 1
        %s488 = scalar_lea.sflag [#allocation3], %s487
        %s489 = sand.u32 %s41, 1
        %s490 = smul.addr %s489, 4
        %s491 = scalar_lea.vmem [#allocation2], %s490
        %p492 = pneg %p54
        %p493 = pneg %p51
        %s494 = sand.u32 %s33, 1
        %s495 = scalar_lea.sflag [#allocation6], %s494
        %s496 = sand.u32 %s67, 1
        %s497 = smul.addr %s496, 4
        %s498 = scalar_lea.vmem [#allocation5], %s497
        %p499 = pneg %p80
        %p500 = pneg %p77
        %s501 = sand.u32 %s33, 1
        %s502 = scalar_lea.sflag [#allocation6], %s501
        %s503 = sand.u32 %s93, 1
        %s504 = smul.addr %s503, 4
        %s505 = scalar_lea.vmem [#allocation7], %s504
        %p506 = pneg %p106
        %p507 = pneg %p103
        %p508 = pneg %p127
        %p509 = pneg %p124
        %p510 = pneg %p148
        %p511 = pneg %p145
        %p512 = pneg %p169
        %p513 = pneg %p166
        %p514 = pneg %p190
        %p515 = pneg %p187
        %p516 = pneg %p211
        %p517 = pneg %p208
        %p518 = pneg %p232
        %p519 = pneg %p229
        %p520 = pneg %p253
        %p521 = pneg %p250
        %p522 = pneg %p274
        %p523 = pneg %p271
        %p524 = pneg %p300
        %p525 = pneg %p297
        %s526 = sand.u32 %s287, 1
        %s527 = scalar_lea.sflag [#allocation4], %s526
        %s528 = sand.u32 %s287, 1
        %s529 = smul.addr %s528, 8
        %s530 = scalar_lea.vmem [#allocation14], %s529
        %v532 = vld [vmem:[%s448] sm:$0xf]
        %v533 = vld [vmem:[%s457] sm:$0xf]
        %v534 = vld [vmem:[%s466] sm:$0xf]
        %v535 = vld [vmem:[#allocation8] sm:$0xf]
        %v536 = vld [vmem:[#allocation8 + $0x4] sm:$0xf]
        %v537 = vld [vmem:[#allocation8 + $0x8] sm:$0xf]
        %v538 = vld [vmem:[#allocation8 + $0xc] sm:$0xf]
        %v539 = vld [vmem:[#allocation8 + $0x10] sm:$0xf]
        %v540 = vld [vmem:[#allocation8 + $0x14] sm:$0xf]
        %v541 = vld [vmem:[#allocation8 + $0x18] sm:$0xf]
        %v542 = vld [vmem:[#allocation8 + $0x1c] sm:$0xf]
        %v543 = vld [vmem:[#allocation8 + $0x20] sm:$0xf]
        %v544 = vld [vmem:[#allocation8 + $0x24] sm:$0xf]
        %v545 = vld [vmem:[#allocation8 + $0x28] sm:$0xf]
        %v546 = vld [vmem:[#allocation8 + $0x2c] sm:$0xf]
        %v547 = vld [vmem:[#allocation8 + $0x30] sm:$0xf]
        %v548 = vld [vmem:[#allocation8 + $0x34] sm:$0xf]
        %v549 = vld [vmem:[#allocation8 + $0x38] sm:$0xf]
        %v550 = vld [vmem:[#allocation8 + $0x3c] sm:$0xf]
        %v551 = vld [vmem:[%s4] sm:$0x1]
        %v553 = vlaneseq
        %v554 = vshrl.u32 %v553, 7
        %v555 = vsub.s32 0, %v554
        %v556 = vrot.slane %v551, %v555
        %v574 = vunpack.c.l.b16 %v535
        %v575 = vunpack.c.l.b16 %v536
        %v576 = vunpack.c.l.b16 %v537
        %v577 = vunpack.c.l.b16 %v538
        %v578 = vunpack.c.l.b16 %v539
        %v579 = vunpack.c.l.b16 %v540
        %v580 = vunpack.c.l.b16 %v541
        %v581 = vunpack.c.l.b16 %v542
        %v582 = vunpack.c.l.b16 %v543
        %v583 = vunpack.c.l.b16 %v544
        %v584 = vunpack.c.l.b16 %v545
        %v585 = vunpack.c.l.b16 %v546
        %v586 = vunpack.c.l.b16 %v547
        %v587 = vunpack.c.l.b16 %v548
        %v588 = vunpack.c.l.b16 %v549
        %v589 = vunpack.c.l.b16 %v550
        %v590 = vpack.c.b16 %v575, %v574
        %v591 = vpack.c.b16 %v577, %v576
        %v592 = vpack.c.b16 %v579, %v578
        %v593 = vpack.c.b16 %v581, %v580
        %v594 = vpack.c.b16 %v583, %v582
        %v595 = vpack.c.b16 %v585, %v584
        %v596 = vpack.c.b16 %v587, %v586
        %v597 = vpack.c.b16 %v589, %v588
        %606 = vmatprep.subr.bf16.mxu0 0
        %607 = vmatpush1.bf16.msra.mxu0 %v597
        %608 = vmatprep.subr.bf16.mxu0 0
        %609 = vmatpush1.bf16.msra.mxu0 %v596
        %610 = vmatprep.subr.bf16.mxu0 0
        %611 = vmatpush1.bf16.msra.mxu0 %v595
        %612 = vmatprep.subr.bf16.mxu0 0
        %613 = vmatpush1.bf16.msra.mxu0 %v594
        %614 = vmatprep.subr.bf16.mxu0 0
        %615 = vmatpush1.bf16.msra.mxu0 %v593
        %616 = vmatprep.subr.bf16.mxu0 0
        %617 = vmatpush1.bf16.msra.mxu0 %v592
        %618 = vmatprep.subr.bf16.mxu0 0
        %619 = vmatpush1.bf16.msra.mxu0 %v591
        %620 = vmatprep.subr.bf16.mxu0 0
        %621 = vmatpush1.bf16.msra.mxu0 %v590
        %622 = vmatprep.subr.bf16.mxu0 0
        %623 = vmatpush2.bf16.msra.mxu0 0
        %624 = vmatprep.subr.bf16.mxu0 0
        %625 = vmatpush2.bf16.msra.mxu0 0
        %626 = vmatprep.subr.bf16.mxu0 0
        %627 = vmatpush2.bf16.msra.mxu0 0
        %628 = vmatprep.subr.bf16.mxu0 0
        %629 = vmatpush2.bf16.msra.mxu0 0
        %630 = vmatprep.subr.bf16.mxu0 0
        %631 = vmatpush2.bf16.msra.mxu0 0
        %632 = vmatprep.subr.bf16.mxu0 0
        %633 = vmatpush2.bf16.msra.mxu0 0
        %634 = vmatprep.subr.bf16.mxu0 0
        %635 = vmatpush2.bf16.msra.mxu0 0
        %636 = vmatprep.subr.bf16.mxu0 0
        %637 = vmatpush2.bf16.msra.mxu0 0
        %638 = vmatprep.mubr.bf16.mxu0 0
        %639 = vmatmul.mubr.bf16.gmra.mxu0 %v532
        %v640 = vpop.f32.mrf.mxu0
        %v641 = vadd.f32 %v556, %v640
        %v642 = vpop.f32.mrf.mxu0
        %v643 = vpop.f32.mrf.mxu0
        %v644 = vpop.f32.mrf.mxu0
        %645 = vdwg.mxu0
        %v646 = vld [vmem:[#allocation10] sm:$0xf]
        %v647 = vld [vmem:[#allocation10 + $0x4] sm:$0xf]
        %v648 = vld [vmem:[#allocation10 + $0x8] sm:$0xf]
        %v649 = vld [vmem:[#allocation10 + $0xc] sm:$0xf]
        %v650 = vld [vmem:[#allocation10 + $0x10] sm:$0xf]
        %v651 = vld [vmem:[#allocation10 + $0x14] sm:$0xf]
        %v652 = vld [vmem:[#allocation10 + $0x18] sm:$0xf]
        %v653 = vld [vmem:[#allocation10 + $0x1c] sm:$0xf]
        %v654 = vld [vmem:[#allocation10 + $0x20] sm:$0xf]
        %v655 = vld [vmem:[#allocation10 + $0x24] sm:$0xf]
        %v656 = vld [vmem:[#allocation10 + $0x28] sm:$0xf]
        %v657 = vld [vmem:[#allocation10 + $0x2c] sm:$0xf]
        %v658 = vld [vmem:[#allocation10 + $0x30] sm:$0xf]
        %v659 = vld [vmem:[#allocation10 + $0x34] sm:$0xf]
        %v660 = vld [vmem:[#allocation10 + $0x38] sm:$0xf]
        %v661 = vld [vmem:[#allocation10 + $0x3c] sm:$0xf]
        %v662 = vld [vmem:[%s6] sm:$0x1]
        %v664 = vlaneseq
        %v665 = vshrl.u32 %v664, 7
        %v666 = vsub.s32 0, %v665
        %v667 = vrot.slane %v662, %v666
        %v685 = vunpack.c.l.b16 %v646
        %v686 = vunpack.c.l.b16 %v647
        %v687 = vunpack.c.l.b16 %v648
        %v688 = vunpack.c.l.b16 %v649
        %v689 = vunpack.c.l.b16 %v650
        %v690 = vunpack.c.l.b16 %v651
        %v691 = vunpack.c.l.b16 %v652
        %v692 = vunpack.c.l.b16 %v653
        %v693 = vunpack.c.l.b16 %v654
        %v694 = vunpack.c.l.b16 %v655
        %v695 = vunpack.c.l.b16 %v656
        %v696 = vunpack.c.l.b16 %v657
        %v697 = vunpack.c.l.b16 %v658
        %v698 = vunpack.c.l.b16 %v659
        %v699 = vunpack.c.l.b16 %v660
        %v700 = vunpack.c.l.b16 %v661
        %v701 = vpack.c.b16 %v686, %v685
        %v702 = vpack.c.b16 %v688, %v687
        %v703 = vpack.c.b16 %v690, %v689
        %v704 = vpack.c.b16 %v692, %v691
        %v705 = vpack.c.b16 %v694, %v693
        %v706 = vpack.c.b16 %v696, %v695
        %v707 = vpack.c.b16 %v698, %v697
        %v708 = vpack.c.b16 %v700, %v699
        %717 = vmatprep.subr.bf16.mxu0 0
        %718 = vmatpush1.bf16.msra.mxu0 %v708
        %719 = vmatprep.subr.bf16.mxu0 0
        %720 = vmatpush1.bf16.msra.mxu0 %v707
        %721 = vmatprep.subr.bf16.mxu0 0
        %722 = vmatpush1.bf16.msra.mxu0 %v706
        %723 = vmatprep.subr.bf16.mxu0 0
        %724 = vmatpush1.bf16.msra.mxu0 %v705
        %725 = vmatprep.subr.bf16.mxu0 0
        %726 = vmatpush1.bf16.msra.mxu0 %v704
        %727 = vmatprep.subr.bf16.mxu0 0
        %728 = vmatpush1.bf16.msra.mxu0 %v703
        %729 = vmatprep.subr.bf16.mxu0 0
        %730 = vmatpush1.bf16.msra.mxu0 %v702
        %731 = vmatprep.subr.bf16.mxu0 0
        %732 = vmatpush1.bf16.msra.mxu0 %v701
        %733 = vmatprep.subr.bf16.mxu0 0
        %734 = vmatpush2.bf16.msra.mxu0 0
        %735 = vmatprep.subr.bf16.mxu0 0
        %736 = vmatpush2.bf16.msra.mxu0 0
        %737 = vmatprep.subr.bf16.mxu0 0
        %738 = vmatpush2.bf16.msra.mxu0 0
        %739 = vmatprep.subr.bf16.mxu0 0
        %740 = vmatpush2.bf16.msra.mxu0 0
        %741 = vmatprep.subr.bf16.mxu0 0
        %742 = vmatpush2.bf16.msra.mxu0 0
        %743 = vmatprep.subr.bf16.mxu0 0
        %744 = vmatpush2.bf16.msra.mxu0 0
        %745 = vmatprep.subr.bf16.mxu0 0
        %746 = vmatpush2.bf16.msra.mxu0 0
        %747 = vmatprep.subr.bf16.mxu0 0
        %748 = vmatpush2.bf16.msra.mxu0 0
        %749 = vmatprep.mubr.bf16.mxu0 0
        %750 = vmatmul.mubr.bf16.gmra.mxu0 %v533
        %v751 = vpop.f32.mrf.mxu0
        %v752 = vadd.f32 %v667, %v751
        %v753 = vpop.f32.mrf.mxu0
        %v754 = vpop.f32.mrf.mxu0
        %v755 = vpop.f32.mrf.mxu0
        %756 = vdwg.mxu0
        %v757 = vld [vmem:[#allocation11] sm:$0xf]
        %v758 = vld [vmem:[#allocation11 + $0x4] sm:$0xf]
        %v759 = vld [vmem:[#allocation11 + $0x8] sm:$0xf]
        %v760 = vld [vmem:[#allocation11 + $0xc] sm:$0xf]
        %v761 = vld [vmem:[#allocation11 + $0x10] sm:$0xf]
        %v762 = vld [vmem:[#allocation11 + $0x14] sm:$0xf]
        %v763 = vld [vmem:[#allocation11 + $0x18] sm:$0xf]
        %v764 = vld [vmem:[#allocation11 + $0x1c] sm:$0xf]
        %v765 = vld [vmem:[#allocation11 + $0x20] sm:$0xf]
        %v766 = vld [vmem:[#allocation11 + $0x24] sm:$0xf]
        %v767 = vld [vmem:[#allocation11 + $0x28] sm:$0xf]
        %v768 = vld [vmem:[#allocation11 + $0x2c] sm:$0xf]
        %v769 = vld [vmem:[#allocation11 + $0x30] sm:$0xf]
        %v770 = vld [vmem:[#allocation11 + $0x34] sm:$0xf]
        %v771 = vld [vmem:[#allocation11 + $0x38] sm:$0xf]
        %v772 = vld [vmem:[#allocation11 + $0x3c] sm:$0xf]
        %v773 = vld [vmem:[%s8] sm:$0x1]
        %v775 = vlaneseq
        %v776 = vshrl.u32 %v775, 7
        %v777 = vsub.s32 0, %v776
        %v778 = vrot.slane %v773, %v777
        %v796 = vunpack.c.l.b16 %v757
        %v797 = vunpack.c.l.b16 %v758
        %v798 = vunpack.c.l.b16 %v759
        %v799 = vunpack.c.l.b16 %v760
        %v800 = vunpack.c.l.b16 %v761
        %v801 = vunpack.c.l.b16 %v762
        %v802 = vunpack.c.l.b16 %v763
        %v803 = vunpack.c.l.b16 %v764
        %v804 = vunpack.c.l.b16 %v765
        %v805 = vunpack.c.l.b16 %v766
        %v806 = vunpack.c.l.b16 %v767
        %v807 = vunpack.c.l.b16 %v768
        %v808 = vunpack.c.l.b16 %v769
        %v809 = vunpack.c.l.b16 %v770
        %v810 = vunpack.c.l.b16 %v771
        %v811 = vunpack.c.l.b16 %v772
        %v812 = vpack.c.b16 %v797, %v796
        %v813 = vpack.c.b16 %v799, %v798
        %v814 = vpack.c.b16 %v801, %v800
        %v815 = vpack.c.b16 %v803, %v802
        %v816 = vpack.c.b16 %v805, %v804
        %v817 = vpack.c.b16 %v807, %v806
        %v818 = vpack.c.b16 %v809, %v808
        %v819 = vpack.c.b16 %v811, %v810
        %828 = vmatprep.subr.bf16.mxu0 0
        %829 = vmatpush1.bf16.msra.mxu0 %v819
        %830 = vmatprep.subr.bf16.mxu0 0
        %831 = vmatpush1.bf16.msra.mxu0 %v818
        %832 = vmatprep.subr.bf16.mxu0 0
        %833 = vmatpush1.bf16.msra.mxu0 %v817
        %834 = vmatprep.subr.bf16.mxu0 0
        %835 = vmatpush1.bf16.msra.mxu0 %v816
        %836 = vmatprep.subr.bf16.mxu0 0
        %837 = vmatpush1.bf16.msra.mxu0 %v815
        %838 = vmatprep.subr.bf16.mxu0 0
        %839 = vmatpush1.bf16.msra.mxu0 %v814
        %840 = vmatprep.subr.bf16.mxu0 0
        %841 = vmatpush1.bf16.msra.mxu0 %v813
        %842 = vmatprep.subr.bf16.mxu0 0
        %843 = vmatpush1.bf16.msra.mxu0 %v812
        %844 = vmatprep.subr.bf16.mxu0 0
        %845 = vmatpush2.bf16.msra.mxu0 0
        %846 = vmatprep.subr.bf16.mxu0 0
        %847 = vmatpush2.bf16.msra.mxu0 0
        %848 = vmatprep.subr.bf16.mxu0 0
        %849 = vmatpush2.bf16.msra.mxu0 0
        %850 = vmatprep.subr.bf16.mxu0 0
        %851 = vmatpush2.bf16.msra.mxu0 0
        %852 = vmatprep.subr.bf16.mxu0 0
        %853 = vmatpush2.bf16.msra.mxu0 0
        %854 = vmatprep.subr.bf16.mxu0 0
        %855 = vmatpush2.bf16.msra.mxu0 0
        %856 = vmatprep.subr.bf16.mxu0 0
        %857 = vmatpush2.bf16.msra.mxu0 0
        %858 = vmatprep.subr.bf16.mxu0 0
        %859 = vmatpush2.bf16.msra.mxu0 0
        %860 = vmatprep.mubr.bf16.mxu0 0
        %861 = vmatmul.mubr.bf16.gmra.mxu0 %v534
        %v862 = vpop.f32.mrf.mxu0
        %v863 = vadd.f32 %v778, %v862
        %v864 = vpop.f32.mrf.mxu0
        %v865 = vpop.f32.mrf.mxu0
        %v866 = vpop.f32.mrf.mxu0
        %867 = vdwg.mxu0
        %v868 = vmul.f32 %v641, 0.35355338
        %870 = vrot.lane.b32.xlu0 %v868, 120
        %v871 = vpop.permute.xlu0 %870
        %873 = vrot.lane.b32.xlu0 %v868, 112
        %v874 = vpop.permute.xlu0 %873
        %876 = vrot.lane.b32.xlu0 %v868, 104
        %v877 = vpop.permute.xlu0 %876
        %879 = vrot.lane.b32.xlu0 %v868, 96
        %v880 = vpop.permute.xlu0 %879
        %882 = vrot.lane.b32.xlu0 %v868, 88
        %v883 = vpop.permute.xlu0 %882
        %885 = vrot.lane.b32.xlu0 %v868, 80
        %v886 = vpop.permute.xlu0 %885
        %888 = vrot.lane.b32.xlu0 %v868, 72
        %v889 = vpop.permute.xlu0 %888
        %891 = vrot.lane.b32.xlu0 %v868, 64
        %v892 = vpop.permute.xlu0 %891
        %894 = vrot.lane.b32.xlu0 %v868, 56
        %v895 = vpop.permute.xlu0 %894
        %897 = vrot.lane.b32.xlu0 %v868, 48
        %v898 = vpop.permute.xlu0 %897
        %900 = vrot.lane.b32.xlu0 %v868, 40
        %v901 = vpop.permute.xlu0 %900
        %903 = vrot.lane.b32.xlu0 %v868, 32
        %v904 = vpop.permute.xlu0 %903
        %906 = vrot.lane.b32.xlu0 %v868, 24
        %v907 = vpop.permute.xlu0 %906
        %909 = vrot.lane.b32.xlu0 %v868, 16
        %v910 = vpop.permute.xlu0 %909
        %912 = vrot.lane.b32.xlu0 %v868, 8
        %v913 = vpop.permute.xlu0 %912
        %v915 = vcombine.low %v868, %v874
        %v916 = vcombine.high %v868, %v874
        %v918 = vunpack.c.l.s4 1983009808
        %v919 = vunpack.c.0.s8 %v918
        %v920 = vlaneseq
        %v921 = vshrl.u32 %v920, 7
        %v922 = vsub.s32 %v919, %v921
        %v923 = vrot.slane %v915, %v922
        %v925 = vunpack.c.l.s4 1983009808
        %v926 = vunpack.c.0.s8 %v925
        %v927 = vlaneseq
        %v928 = vshrl.u32 %v927, 7
        %v929 = vsub.s32 %v926, %v928
        %v930 = vrot.slane %v916, %v929
        %v931 = vcombine.low %v871, %v877
        %v932 = vcombine.high %v871, %v877
        %v934 = vunpack.c.l.s4 1983009808
        %v935 = vunpack.c.0.s8 %v934
        %v936 = vlaneseq
        %v937 = vshrl.u32 %v936, 7
        %v938 = vsub.s32 %v935, %v937
        %v939 = vrot.slane %v931, %v938
        %v941 = vunpack.c.l.s4 1983009808
        %v942 = vunpack.c.0.s8 %v941
        %v943 = vlaneseq
        %v944 = vshrl.u32 %v943, 7
        %v945 = vsub.s32 %v942, %v944
        %v946 = vrot.slane %v932, %v945
        %v947 = vcombine.low %v880, %v886
        %v948 = vcombine.high %v880, %v886
        %v950 = vunpack.c.l.s4 1983009808
        %v951 = vunpack.c.0.s8 %v950
        %v952 = vlaneseq
        %v953 = vshrl.u32 %v952, 7
        %v954 = vsub.s32 %v951, %v953
        %v955 = vrot.slane %v947, %v954
        %v957 = vunpack.c.l.s4 1983009808
        %v958 = vunpack.c.0.s8 %v957
        %v959 = vlaneseq
        %v960 = vshrl.u32 %v959, 7
        %v961 = vsub.s32 %v958, %v960
        %v962 = vrot.slane %v948, %v961
        %v963 = vcombine.low %v883, %v889
        %v964 = vcombine.high %v883, %v889
        %v966 = vunpack.c.l.s4 1983009808
        %v967 = vunpack.c.0.s8 %v966
        %v968 = vlaneseq
        %v969 = vshrl.u32 %v968, 7
        %v970 = vsub.s32 %v967, %v969
        %v971 = vrot.slane %v963, %v970
        %v973 = vunpack.c.l.s4 1983009808
        %v974 = vunpack.c.0.s8 %v973
        %v975 = vlaneseq
        %v976 = vshrl.u32 %v975, 7
        %v977 = vsub.s32 %v974, %v976
        %v978 = vrot.slane %v964, %v977
        %v979 = vcombine.low %v923, %v939
        %v980 = vcombine.high %v923, %v939
        %v982 = vunpack.c.l.s4 1934713408
        %v983 = vunpack.c.0.s8 %v982
        %v984 = vlaneseq
        %v985 = vshrl.u32 %v984, 7
        %v986 = vsub.s32 %v983, %v985
        %v987 = vrot.slane %v979, %v986
        %v989 = vunpack.c.l.s4 1934713408
        %v990 = vunpack.c.0.s8 %v989
        %v991 = vlaneseq
        %v992 = vshrl.u32 %v991, 7
        %v993 = vsub.s32 %v990, %v992
        %v994 = vrot.slane %v980, %v993
        %v995 = vcombine.low %v930, %v946
        %v996 = vcombine.high %v930, %v946
        %v998 = vunpack.c.l.s4 1934713408
        %v999 = vunpack.c.0.s8 %v998
        %v1000 = vlaneseq
        %v1001 = vshrl.u32 %v1000, 7
        %v1002 = vsub.s32 %v999, %v1001
        %v1003 = vrot.slane %v995, %v1002
        %v1005 = vunpack.c.l.s4 1934713408
        %v1006 = vunpack.c.0.s8 %v1005
        %v1007 = vlaneseq
        %v1008 = vshrl.u32 %v1007, 7
        %v1009 = vsub.s32 %v1006, %v1008
        %v1010 = vrot.slane %v996, %v1009
        %v1011 = vcombine.low %v955, %v971
        %v1012 = vcombine.high %v955, %v971
        %v1014 = vunpack.c.l.s4 1934713408
        %v1015 = vunpack.c.0.s8 %v1014
        %v1016 = vlaneseq
        %v1017 = vshrl.u32 %v1016, 7
        %v1018 = vsub.s32 %v1015, %v1017
        %v1019 = vrot.slane %v1011, %v1018
        %v1021 = vunpack.c.l.s4 1934713408
        %v1022 = vunpack.c.0.s8 %v1021
        %v1023 = vlaneseq
        %v1024 = vshrl.u32 %v1023, 7
        %v1025 = vsub.s32 %v1022, %v1024
        %v1026 = vrot.slane %v1012, %v1025
        %v1027 = vcombine.low %v962, %v978
        %v1028 = vcombine.high %v962, %v978
        %v1030 = vunpack.c.l.s4 1934713408
        %v1031 = vunpack.c.0.s8 %v1030
        %v1032 = vlaneseq
        %v1033 = vshrl.u32 %v1032, 7
        %v1034 = vsub.s32 %v1031, %v1033
        %v1035 = vrot.slane %v1027, %v1034
        %v1037 = vunpack.c.l.s4 1934713408
        %v1038 = vunpack.c.0.s8 %v1037
        %v1039 = vlaneseq
        %v1040 = vshrl.u32 %v1039, 7
        %v1041 = vsub.s32 %v1038, %v1040
        %v1042 = vrot.slane %v1028, %v1041
        %v1043 = vcombine.low %v987, %v1019
        %v1044 = vcombine.high %v987, %v1019
        %v1045 = vcombine.low %v994, %v1026
        %v1046 = vcombine.high %v994, %v1026
        %v1047 = vcombine.low %v1003, %v1035
        %v1048 = vcombine.high %v1003, %v1035
        %v1049 = vcombine.low %v1010, %v1042
        %v1050 = vcombine.high %v1010, %v1042
        %v1051 = vcombine.low %v892, %v898
        %v1052 = vcombine.high %v892, %v898
        %v1054 = vunpack.c.l.s4 1983009808
        %v1055 = vunpack.c.0.s8 %v1054
        %v1056 = vlaneseq
        %v1057 = vshrl.u32 %v1056, 7
        %v1058 = vsub.s32 %v1055, %v1057
        %v1059 = vrot.slane %v1051, %v1058
        %v1061 = vunpack.c.l.s4 1983009808
        %v1062 = vunpack.c.0.s8 %v1061
        %v1063 = vlaneseq
        %v1064 = vshrl.u32 %v1063, 7
        %v1065 = vsub.s32 %v1062, %v1064
        %v1066 = vrot.slane %v1052, %v1065
        %v1067 = vcombine.low %v895, %v901
        %v1068 = vcombine.high %v895, %v901
        %v1070 = vunpack.c.l.s4 1983009808
        %v1071 = vunpack.c.0.s8 %v1070
        %v1072 = vlaneseq
        %v1073 = vshrl.u32 %v1072, 7
        %v1074 = vsub.s32 %v1071, %v1073
        %v1075 = vrot.slane %v1067, %v1074
        %v1077 = vunpack.c.l.s4 1983009808
        %v1078 = vunpack.c.0.s8 %v1077
        %v1079 = vlaneseq
        %v1080 = vshrl.u32 %v1079, 7
        %v1081 = vsub.s32 %v1078, %v1080
        %v1082 = vrot.slane %v1068, %v1081
        %v1083 = vcombine.low %v904, %v910
        %v1084 = vcombine.high %v904, %v910
        %v1086 = vunpack.c.l.s4 1983009808
        %v1087 = vunpack.c.0.s8 %v1086
        %v1088 = vlaneseq
        %v1089 = vshrl.u32 %v1088, 7
        %v1090 = vsub.s32 %v1087, %v1089
        %v1091 = vrot.slane %v1083, %v1090
        %v1093 = vunpack.c.l.s4 1983009808
        %v1094 = vunpack.c.0.s8 %v1093
        %v1095 = vlaneseq
        %v1096 = vshrl.u32 %v1095, 7
        %v1097 = vsub.s32 %v1094, %v1096
        %v1098 = vrot.slane %v1084, %v1097
        %v1099 = vcombine.low %v907, %v913
        %v1100 = vcombine.high %v907, %v913
        %v1102 = vunpack.c.l.s4 1983009808
        %v1103 = vunpack.c.0.s8 %v1102
        %v1104 = vlaneseq
        %v1105 = vshrl.u32 %v1104, 7
        %v1106 = vsub.s32 %v1103, %v1105
        %v1107 = vrot.slane %v1099, %v1106
        %v1109 = vunpack.c.l.s4 1983009808
        %v1110 = vunpack.c.0.s8 %v1109
        %v1111 = vlaneseq
        %v1112 = vshrl.u32 %v1111, 7
        %v1113 = vsub.s32 %v1110, %v1112
        %v1114 = vrot.slane %v1100, %v1113
        %v1115 = vcombine.low %v1059, %v1075
        %v1116 = vcombine.high %v1059, %v1075
        %v1118 = vunpack.c.l.s4 1934713408
        %v1119 = vunpack.c.0.s8 %v1118
        %v1120 = vlaneseq
        %v1121 = vshrl.u32 %v1120, 7
        %v1122 = vsub.s32 %v1119, %v1121
        %v1123 = vrot.slane %v1115, %v1122
        %v1125 = vunpack.c.l.s4 1934713408
        %v1126 = vunpack.c.0.s8 %v1125
        %v1127 = vlaneseq
        %v1128 = vshrl.u32 %v1127, 7
        %v1129 = vsub.s32 %v1126, %v1128
        %v1130 = vrot.slane %v1116, %v1129
        %v1131 = vcombine.low %v1066, %v1082
        %v1132 = vcombine.high %v1066, %v1082
        %v1134 = vunpack.c.l.s4 1934713408
        %v1135 = vunpack.c.0.s8 %v1134
        %v1136 = vlaneseq
        %v1137 = vshrl.u32 %v1136, 7
        %v1138 = vsub.s32 %v1135, %v1137
        %v1139 = vrot.slane %v1131, %v1138
        %v1141 = vunpack.c.l.s4 1934713408
        %v1142 = vunpack.c.0.s8 %v1141
        %v1143 = vlaneseq
        %v1144 = vshrl.u32 %v1143, 7
        %v1145 = vsub.s32 %v1142, %v1144
        %v1146 = vrot.slane %v1132, %v1145
        %v1147 = vcombine.low %v1091, %v1107
        %v1148 = vcombine.high %v1091, %v1107
        %v1150 = vunpack.c.l.s4 1934713408
        %v1151 = vunpack.c.0.s8 %v1150
        %v1152 = vlaneseq
        %v1153 = vshrl.u32 %v1152, 7
        %v1154 = vsub.s32 %v1151, %v1153
        %v1155 = vrot.slane %v1147, %v1154
        %v1157 = vunpack.c.l.s4 1934713408
        %v1158 = vunpack.c.0.s8 %v1157
        %v1159 = vlaneseq
        %v1160 = vshrl.u32 %v1159, 7
        %v1161 = vsub.s32 %v1158, %v1160
        %v1162 = vrot.slane %v1148, %v1161
        %v1163 = vcombine.low %v1098, %v1114
        %v1164 = vcombine.high %v1098, %v1114
        %v1166 = vunpack.c.l.s4 1934713408
        %v1167 = vunpack.c.0.s8 %v1166
        %v1168 = vlaneseq
        %v1169 = vshrl.u32 %v1168, 7
        %v1170 = vsub.s32 %v1167, %v1169
        %v1171 = vrot.slane %v1163, %v1170
        %v1173 = vunpack.c.l.s4 1934713408
        %v1174 = vunpack.c.0.s8 %v1173
        %v1175 = vlaneseq
        %v1176 = vshrl.u32 %v1175, 7
        %v1177 = vsub.s32 %v1174, %v1176
        %v1178 = vrot.slane %v1164, %v1177
        %v1179 = vcombine.low %v1123, %v1155
        %v1180 = vcombine.high %v1123, %v1155
        %v1181 = vcombine.low %v1130, %v1162
        %v1182 = vcombine.high %v1130, %v1162
        %v1183 = vcombine.low %v1139, %v1171
        %v1184 = vcombine.high %v1139, %v1171
        %v1185 = vcombine.low %v1146, %v1178
        %v1186 = vcombine.high %v1146, %v1178
        %v1187 = vcombine.low %v1043, %v1045
        %v1188 = vcombine.high %v1043, %v1045
        %v1190 = vunpack.c.l.s4 1983009808
        %v1191 = vunpack.c.0.s8 %v1190
        %v1192 = vlaneseq
        %v1193 = vshrl.u32 %v1192, 7
        %v1194 = vsub.s32 %v1191, %v1193
        %v1195 = vrot.slane %v1187, %v1194
        %v1197 = vunpack.c.l.s4 1983009808
        %v1198 = vunpack.c.0.s8 %v1197
        %v1199 = vlaneseq
        %v1200 = vshrl.u32 %v1199, 7
        %v1201 = vsub.s32 %v1198, %v1200
        %v1202 = vrot.slane %v1188, %v1201
        %v1203 = vcombine.low %v1044, %v1046
        %v1204 = vcombine.high %v1044, %v1046
        %v1206 = vunpack.c.l.s4 1983009808
        %v1207 = vunpack.c.0.s8 %v1206
        %v1208 = vlaneseq
        %v1209 = vshrl.u32 %v1208, 7
        %v1210 = vsub.s32 %v1207, %v1209
        %v1211 = vrot.slane %v1203, %v1210
        %v1213 = vunpack.c.l.s4 1983009808
        %v1214 = vunpack.c.0.s8 %v1213
        %v1215 = vlaneseq
        %v1216 = vshrl.u32 %v1215, 7
        %v1217 = vsub.s32 %v1214, %v1216
        %v1218 = vrot.slane %v1204, %v1217
        %v1219 = vcombine.low %v1047, %v1049
        %v1220 = vcombine.high %v1047, %v1049
        %v1222 = vunpack.c.l.s4 1983009808
        %v1223 = vunpack.c.0.s8 %v1222
        %v1224 = vlaneseq
        %v1225 = vshrl.u32 %v1224, 7
        %v1226 = vsub.s32 %v1223, %v1225
        %v1227 = vrot.slane %v1219, %v1226
        %v1229 = vunpack.c.l.s4 1983009808
        %v1230 = vunpack.c.0.s8 %v1229
        %v1231 = vlaneseq
        %v1232 = vshrl.u32 %v1231, 7
        %v1233 = vsub.s32 %v1230, %v1232
        %v1234 = vrot.slane %v1220, %v1233
        %v1235 = vcombine.low %v1048, %v1050
        %v1236 = vcombine.high %v1048, %v1050
        %v1238 = vunpack.c.l.s4 1983009808
        %v1239 = vunpack.c.0.s8 %v1238
        %v1240 = vlaneseq
        %v1241 = vshrl.u32 %v1240, 7
        %v1242 = vsub.s32 %v1239, %v1241
        %v1243 = vrot.slane %v1235, %v1242
        %v1245 = vunpack.c.l.s4 1983009808
        %v1246 = vunpack.c.0.s8 %v1245
        %v1247 = vlaneseq
        %v1248 = vshrl.u32 %v1247, 7
        %v1249 = vsub.s32 %v1246, %v1248
        %v1250 = vrot.slane %v1236, %v1249
        %v1251 = vcombine.low %v1195, %v1211
        %v1252 = vcombine.high %v1195, %v1211
        %v1254 = vunpack.c.l.s4 1934713408
        %v1255 = vunpack.c.0.s8 %v1254
        %v1256 = vlaneseq
        %v1257 = vshrl.u32 %v1256, 7
        %v1258 = vsub.s32 %v1255, %v1257
        %v1259 = vrot.slane %v1251, %v1258
        %v1261 = vunpack.c.l.s4 1934713408
        %v1262 = vunpack.c.0.s8 %v1261
        %v1263 = vlaneseq
        %v1264 = vshrl.u32 %v1263, 7
        %v1265 = vsub.s32 %v1262, %v1264
        %v1266 = vrot.slane %v1252, %v1265
        %v1267 = vcombine.low %v1202, %v1218
        %v1268 = vcombine.high %v1202, %v1218
        %v1270 = vunpack.c.l.s4 1934713408
        %v1271 = vunpack.c.0.s8 %v1270
        %v1272 = vlaneseq
        %v1273 = vshrl.u32 %v1272, 7
        %v1274 = vsub.s32 %v1271, %v1273
        %v1275 = vrot.slane %v1267, %v1274
        %v1277 = vunpack.c.l.s4 1934713408
        %v1278 = vunpack.c.0.s8 %v1277
        %v1279 = vlaneseq
        %v1280 = vshrl.u32 %v1279, 7
        %v1281 = vsub.s32 %v1278, %v1280
        %v1282 = vrot.slane %v1268, %v1281
        %v1283 = vcombine.low %v1227, %v1243
        %v1284 = vcombine.high %v1227, %v1243
        %v1286 = vunpack.c.l.s4 1934713408
        %v1287 = vunpack.c.0.s8 %v1286
        %v1288 = vlaneseq
        %v1289 = vshrl.u32 %v1288, 7
        %v1290 = vsub.s32 %v1287, %v1289
        %v1291 = vrot.slane %v1283, %v1290
        %v1293 = vunpack.c.l.s4 1934713408
        %v1294 = vunpack.c.0.s8 %v1293
        %v1295 = vlaneseq
        %v1296 = vshrl.u32 %v1295, 7
        %v1297 = vsub.s32 %v1294, %v1296
        %v1298 = vrot.slane %v1284, %v1297
        %v1299 = vcombine.low %v1234, %v1250
        %v1300 = vcombine.high %v1234, %v1250
        %v1302 = vunpack.c.l.s4 1934713408
        %v1303 = vunpack.c.0.s8 %v1302
        %v1304 = vlaneseq
        %v1305 = vshrl.u32 %v1304, 7
        %v1306 = vsub.s32 %v1303, %v1305
        %v1307 = vrot.slane %v1299, %v1306
        %v1309 = vunpack.c.l.s4 1934713408
        %v1310 = vunpack.c.0.s8 %v1309
        %v1311 = vlaneseq
        %v1312 = vshrl.u32 %v1311, 7
        %v1313 = vsub.s32 %v1310, %v1312
        %v1314 = vrot.slane %v1300, %v1313
        %v1315 = vcombine.low %v1259, %v1291
        %v1316 = vcombine.high %v1259, %v1291
        %v1317 = vcombine.low %v1266, %v1298
        %v1318 = vcombine.high %v1266, %v1298
        %v1319 = vcombine.low %v1275, %v1307
        %v1320 = vcombine.high %v1275, %v1307
        %v1321 = vcombine.low %v1282, %v1314
        %v1322 = vcombine.high %v1282, %v1314
        %v1323 = vcombine.low %v1179, %v1181
        %v1324 = vcombine.high %v1179, %v1181
        %v1326 = vunpack.c.l.s4 1983009808
        %v1327 = vunpack.c.0.s8 %v1326
        %v1328 = vlaneseq
        %v1329 = vshrl.u32 %v1328, 7
        %v1330 = vsub.s32 %v1327, %v1329
        %v1331 = vrot.slane %v1323, %v1330
        %v1333 = vunpack.c.l.s4 1983009808
        %v1334 = vunpack.c.0.s8 %v1333
        %v1335 = vlaneseq
        %v1336 = vshrl.u32 %v1335, 7
        %v1337 = vsub.s32 %v1334, %v1336
        %v1338 = vrot.slane %v1324, %v1337
        %v1339 = vcombine.low %v1180, %v1182
        %v1340 = vcombine.high %v1180, %v1182
        %v1342 = vunpack.c.l.s4 1983009808
        %v1343 = vunpack.c.0.s8 %v1342
        %v1344 = vlaneseq
        %v1345 = vshrl.u32 %v1344, 7
        %v1346 = vsub.s32 %v1343, %v1345
        %v1347 = vrot.slane %v1339, %v1346
        %v1349 = vunpack.c.l.s4 1983009808
        %v1350 = vunpack.c.0.s8 %v1349
        %v1351 = vlaneseq
        %v1352 = vshrl.u32 %v1351, 7
        %v1353 = vsub.s32 %v1350, %v1352
        %v1354 = vrot.slane %v1340, %v1353
        %v1355 = vcombine.low %v1183, %v1185
        %v1356 = vcombine.high %v1183, %v1185
        %v1358 = vunpack.c.l.s4 1983009808
        %v1359 = vunpack.c.0.s8 %v1358
        %v1360 = vlaneseq
        %v1361 = vshrl.u32 %v1360, 7
        %v1362 = vsub.s32 %v1359, %v1361
        %v1363 = vrot.slane %v1355, %v1362
        %v1365 = vunpack.c.l.s4 1983009808
        %v1366 = vunpack.c.0.s8 %v1365
        %v1367 = vlaneseq
        %v1368 = vshrl.u32 %v1367, 7
        %v1369 = vsub.s32 %v1366, %v1368
        %v1370 = vrot.slane %v1356, %v1369
        %v1371 = vcombine.low %v1184, %v1186
        %v1372 = vcombine.high %v1184, %v1186
        %v1374 = vunpack.c.l.s4 1983009808
        %v1375 = vunpack.c.0.s8 %v1374
        %v1376 = vlaneseq
        %v1377 = vshrl.u32 %v1376, 7
        %v1378 = vsub.s32 %v1375, %v1377
        %v1379 = vrot.slane %v1371, %v1378
        %v1381 = vunpack.c.l.s4 1983009808
        %v1382 = vunpack.c.0.s8 %v1381
        %v1383 = vlaneseq
        %v1384 = vshrl.u32 %v1383, 7
        %v1385 = vsub.s32 %v1382, %v1384
        %v1386 = vrot.slane %v1372, %v1385
        %v1387 = vcombine.low %v1331, %v1347
        %v1388 = vcombine.high %v1331, %v1347
        %v1390 = vunpack.c.l.s4 1934713408
        %v1391 = vunpack.c.0.s8 %v1390
        %v1392 = vlaneseq
        %v1393 = vshrl.u32 %v1392, 7
        %v1394 = vsub.s32 %v1391, %v1393
        %v1395 = vrot.slane %v1387, %v1394
        %v1397 = vunpack.c.l.s4 1934713408
        %v1398 = vunpack.c.0.s8 %v1397
        %v1399 = vlaneseq
        %v1400 = vshrl.u32 %v1399, 7
        %v1401 = vsub.s32 %v1398, %v1400
        %v1402 = vrot.slane %v1388, %v1401
        %v1403 = vcombine.low %v1338, %v1354
        %v1404 = vcombine.high %v1338, %v1354
        %v1406 = vunpack.c.l.s4 1934713408
        %v1407 = vunpack.c.0.s8 %v1406
        %v1408 = vlaneseq
        %v1409 = vshrl.u32 %v1408, 7
        %v1410 = vsub.s32 %v1407, %v1409
        %v1411 = vrot.slane %v1403, %v1410
        %v1413 = vunpack.c.l.s4 1934713408
        %v1414 = vunpack.c.0.s8 %v1413
        %v1415 = vlaneseq
        %v1416 = vshrl.u32 %v1415, 7
        %v1417 = vsub.s32 %v1414, %v1416
        %v1418 = vrot.slane %v1404, %v1417
        %v1419 = vcombine.low %v1363, %v1379
        %v1420 = vcombine.high %v1363, %v1379
        %v1422 = vunpack.c.l.s4 1934713408
        %v1423 = vunpack.c.0.s8 %v1422
        %v1424 = vlaneseq
        %v1425 = vshrl.u32 %v1424, 7
        %v1426 = vsub.s32 %v1423, %v1425
        %v1427 = vrot.slane %v1419, %v1426
        %v1429 = vunpack.c.l.s4 1934713408
        %v1430 = vunpack.c.0.s8 %v1429
        %v1431 = vlaneseq
        %v1432 = vshrl.u32 %v1431, 7
        %v1433 = vsub.s32 %v1430, %v1432
        %v1434 = vrot.slane %v1420, %v1433
        %v1435 = vcombine.low %v1370, %v1386
        %v1436 = vcombine.high %v1370, %v1386
        %v1438 = vunpack.c.l.s4 1934713408
        %v1439 = vunpack.c.0.s8 %v1438
        %v1440 = vlaneseq
        %v1441 = vshrl.u32 %v1440, 7
        %v1442 = vsub.s32 %v1439, %v1441
        %v1443 = vrot.slane %v1435, %v1442
        %v1445 = vunpack.c.l.s4 1934713408
        %v1446 = vunpack.c.0.s8 %v1445
        %v1447 = vlaneseq
        %v1448 = vshrl.u32 %v1447, 7
        %v1449 = vsub.s32 %v1446, %v1448
        %v1450 = vrot.slane %v1436, %v1449
        %v1451 = vcombine.low %v1395, %v1427
        %v1452 = vcombine.high %v1395, %v1427
        %v1453 = vcombine.low %v1402, %v1434
        %v1454 = vcombine.high %v1402, %v1434
        %v1455 = vcombine.low %v1411, %v1443
        %v1456 = vcombine.high %v1411, %v1443
        %v1457 = vcombine.low %v1418, %v1450
        %v1458 = vcombine.high %v1418, %v1450
        %v1459 = vpack.c.bf16 %v1315, %v1315
        %v1460 = vpack.c.bf16 %v1316, %v1316
        %v1461 = vpack.c.bf16 %v1317, %v1317
        %v1462 = vpack.c.bf16 %v1318, %v1318
        %v1463 = vpack.c.bf16 %v1319, %v1319
        %v1464 = vpack.c.bf16 %v1320, %v1320
        %v1465 = vpack.c.bf16 %v1321, %v1321
        %v1466 = vpack.c.bf16 %v1322, %v1322
        %v1467 = vpack.c.bf16 %v1451, %v1451
        %v1468 = vpack.c.bf16 %v1452, %v1452
        %v1469 = vpack.c.bf16 %v1453, %v1453
        %v1470 = vpack.c.bf16 %v1454, %v1454
        %v1471 = vpack.c.bf16 %v1455, %v1455
        %v1472 = vpack.c.bf16 %v1456, %v1456
        %v1473 = vpack.c.bf16 %v1457, %v1457
        %v1474 = vpack.c.bf16 %v1458, %v1458
        %1476 = vrot.lane.b32.xlu0 %v752, 120
        %v1477 = vpop.permute.xlu0 %1476
        %1479 = vrot.lane.b32.xlu0 %v752, 112
        %v1480 = vpop.permute.xlu0 %1479
        %1482 = vrot.lane.b32.xlu0 %v752, 104
        %v1483 = vpop.permute.xlu0 %1482
        %1485 = vrot.lane.b32.xlu0 %v752, 96
        %v1486 = vpop.permute.xlu0 %1485
        %1488 = vrot.lane.b32.xlu0 %v752, 88
        %v1489 = vpop.permute.xlu0 %1488
        %1491 = vrot.lane.b32.xlu0 %v752, 80
        %v1492 = vpop.permute.xlu0 %1491
        %1494 = vrot.lane.b32.xlu0 %v752, 72
        %v1495 = vpop.permute.xlu0 %1494
        %1497 = vrot.lane.b32.xlu0 %v752, 64
        %v1498 = vpop.permute.xlu0 %1497
        %1500 = vrot.lane.b32.xlu0 %v752, 56
        %v1501 = vpop.permute.xlu0 %1500
        %1503 = vrot.lane.b32.xlu0 %v752, 48
        %v1504 = vpop.permute.xlu0 %1503
        %1506 = vrot.lane.b32.xlu0 %v752, 40
        %v1507 = vpop.permute.xlu0 %1506
        %1509 = vrot.lane.b32.xlu0 %v752, 32
        %v1510 = vpop.permute.xlu0 %1509
        %1512 = vrot.lane.b32.xlu0 %v752, 24
        %v1513 = vpop.permute.xlu0 %1512
        %1515 = vrot.lane.b32.xlu0 %v752, 16
        %v1516 = vpop.permute.xlu0 %1515
        %1518 = vrot.lane.b32.xlu0 %v752, 8
        %v1519 = vpop.permute.xlu0 %1518
        %v1521 = vcombine.low %v752, %v1480
        %v1522 = vcombine.high %v752, %v1480
        %v1524 = vunpack.c.l.s4 1983009808
        %v1525 = vunpack.c.0.s8 %v1524
        %v1526 = vlaneseq
        %v1527 = vshrl.u32 %v1526, 7
        %v1528 = vsub.s32 %v1525, %v1527
        %v1529 = vrot.slane %v1521, %v1528
        %v1531 = vunpack.c.l.s4 1983009808
        %v1532 = vunpack.c.0.s8 %v1531
        %v1533 = vlaneseq
        %v1534 = vshrl.u32 %v1533, 7
        %v1535 = vsub.s32 %v1532, %v1534
        %v1536 = vrot.slane %v1522, %v1535
        %v1537 = vcombine.low %v1477, %v1483
        %v1538 = vcombine.high %v1477, %v1483
        %v1540 = vunpack.c.l.s4 1983009808
        %v1541 = vunpack.c.0.s8 %v1540
        %v1542 = vlaneseq
        %v1543 = vshrl.u32 %v1542, 7
        %v1544 = vsub.s32 %v1541, %v1543
        %v1545 = vrot.slane %v1537, %v1544
        %v1547 = vunpack.c.l.s4 1983009808
        %v1548 = vunpack.c.0.s8 %v1547
        %v1549 = vlaneseq
        %v1550 = vshrl.u32 %v1549, 7
        %v1551 = vsub.s32 %v1548, %v1550
        %v1552 = vrot.slane %v1538, %v1551
        %v1553 = vcombine.low %v1486, %v1492
        %v1554 = vcombine.high %v1486, %v1492
        %v1556 = vunpack.c.l.s4 1983009808
        %v1557 = vunpack.c.0.s8 %v1556
        %v1558 = vlaneseq
        %v1559 = vshrl.u32 %v1558, 7
        %v1560 = vsub.s32 %v1557, %v1559
        %v1561 = vrot.slane %v1553, %v1560
        %v1563 = vunpack.c.l.s4 1983009808
        %v1564 = vunpack.c.0.s8 %v1563
        %v1565 = vlaneseq
        %v1566 = vshrl.u32 %v1565, 7
        %v1567 = vsub.s32 %v1564, %v1566
        %v1568 = vrot.slane %v1554, %v1567
        %v1569 = vcombine.low %v1489, %v1495
        %v1570 = vcombine.high %v1489, %v1495
        %v1572 = vunpack.c.l.s4 1983009808
        %v1573 = vunpack.c.0.s8 %v1572
        %v1574 = vlaneseq
        %v1575 = vshrl.u32 %v1574, 7
        %v1576 = vsub.s32 %v1573, %v1575
        %v1577 = vrot.slane %v1569, %v1576
        %v1579 = vunpack.c.l.s4 1983009808
        %v1580 = vunpack.c.0.s8 %v1579
        %v1581 = vlaneseq
        %v1582 = vshrl.u32 %v1581, 7
        %v1583 = vsub.s32 %v1580, %v1582
        %v1584 = vrot.slane %v1570, %v1583
        %v1585 = vcombine.low %v1529, %v1545
        %v1586 = vcombine.high %v1529, %v1545
        %v1588 = vunpack.c.l.s4 1934713408
        %v1589 = vunpack.c.0.s8 %v1588
        %v1590 = vlaneseq
        %v1591 = vshrl.u32 %v1590, 7
        %v1592 = vsub.s32 %v1589, %v1591
        %v1593 = vrot.slane %v1585, %v1592
        %v1595 = vunpack.c.l.s4 1934713408
        %v1596 = vunpack.c.0.s8 %v1595
        %v1597 = vlaneseq
        %v1598 = vshrl.u32 %v1597, 7
        %v1599 = vsub.s32 %v1596, %v1598
        %v1600 = vrot.slane %v1586, %v1599
        %v1601 = vcombine.low %v1536, %v1552
        %v1602 = vcombine.high %v1536, %v1552
        %v1604 = vunpack.c.l.s4 1934713408
        %v1605 = vunpack.c.0.s8 %v1604
        %v1606 = vlaneseq
        %v1607 = vshrl.u32 %v1606, 7
        %v1608 = vsub.s32 %v1605, %v1607
        %v1609 = vrot.slane %v1601, %v1608
        %v1611 = vunpack.c.l.s4 1934713408
        %v1612 = vunpack.c.0.s8 %v1611
        %v1613 = vlaneseq
        %v1614 = vshrl.u32 %v1613, 7
        %v1615 = vsub.s32 %v1612, %v1614
        %v1616 = vrot.slane %v1602, %v1615
        %v1617 = vcombine.low %v1561, %v1577
        %v1618 = vcombine.high %v1561, %v1577
        %v1620 = vunpack.c.l.s4 1934713408
        %v1621 = vunpack.c.0.s8 %v1620
        %v1622 = vlaneseq
        %v1623 = vshrl.u32 %v1622, 7
        %v1624 = vsub.s32 %v1621, %v1623
        %v1625 = vrot.slane %v1617, %v1624
        %v1627 = vunpack.c.l.s4 1934713408
        %v1628 = vunpack.c.0.s8 %v1627
        %v1629 = vlaneseq
        %v1630 = vshrl.u32 %v1629, 7
        %v1631 = vsub.s32 %v1628, %v1630
        %v1632 = vrot.slane %v1618, %v1631
        %v1633 = vcombine.low %v1568, %v1584
        %v1634 = vcombine.high %v1568, %v1584
        %v1636 = vunpack.c.l.s4 1934713408
        %v1637 = vunpack.c.0.s8 %v1636
        %v1638 = vlaneseq
        %v1639 = vshrl.u32 %v1638, 7
        %v1640 = vsub.s32 %v1637, %v1639
        %v1641 = vrot.slane %v1633, %v1640
        %v1643 = vunpack.c.l.s4 1934713408
        %v1644 = vunpack.c.0.s8 %v1643
        %v1645 = vlaneseq
        %v1646 = vshrl.u32 %v1645, 7
        %v1647 = vsub.s32 %v1644, %v1646
        %v1648 = vrot.slane %v1634, %v1647
        %v1649 = vcombine.low %v1593, %v1625
        %v1650 = vcombine.high %v1593, %v1625
        %v1651 = vcombine.low %v1600, %v1632
        %v1652 = vcombine.high %v1600, %v1632
        %v1653 = vcombine.low %v1609, %v1641
        %v1654 = vcombine.high %v1609, %v1641
        %v1655 = vcombine.low %v1616, %v1648
        %v1656 = vcombine.high %v1616, %v1648
        %v1657 = vcombine.low %v1498, %v1504
        %v1658 = vcombine.high %v1498, %v1504
        %v1660 = vunpack.c.l.s4 1983009808
        %v1661 = vunpack.c.0.s8 %v1660
        %v1662 = vlaneseq
        %v1663 = vshrl.u32 %v1662, 7
        %v1664 = vsub.s32 %v1661, %v1663
        %v1665 = vrot.slane %v1657, %v1664
        %v1667 = vunpack.c.l.s4 1983009808
        %v1668 = vunpack.c.0.s8 %v1667
        %v1669 = vlaneseq
        %v1670 = vshrl.u32 %v1669, 7
        %v1671 = vsub.s32 %v1668, %v1670
        %v1672 = vrot.slane %v1658, %v1671
        %v1673 = vcombine.low %v1501, %v1507
        %v1674 = vcombine.high %v1501, %v1507
        %v1676 = vunpack.c.l.s4 1983009808
        %v1677 = vunpack.c.0.s8 %v1676
        %v1678 = vlaneseq
        %v1679 = vshrl.u32 %v1678, 7
        %v1680 = vsub.s32 %v1677, %v1679
        %v1681 = vrot.slane %v1673, %v1680
        %v1683 = vunpack.c.l.s4 1983009808
        %v1684 = vunpack.c.0.s8 %v1683
        %v1685 = vlaneseq
        %v1686 = vshrl.u32 %v1685, 7
        %v1687 = vsub.s32 %v1684, %v1686
        %v1688 = vrot.slane %v1674, %v1687
        %v1689 = vcombine.low %v1510, %v1516
        %v1690 = vcombine.high %v1510, %v1516
        %v1692 = vunpack.c.l.s4 1983009808
        %v1693 = vunpack.c.0.s8 %v1692
        %v1694 = vlaneseq
        %v1695 = vshrl.u32 %v1694, 7
        %v1696 = vsub.s32 %v1693, %v1695
        %v1697 = vrot.slane %v1689, %v1696
        %v1699 = vunpack.c.l.s4 1983009808
        %v1700 = vunpack.c.0.s8 %v1699
        %v1701 = vlaneseq
        %v1702 = vshrl.u32 %v1701, 7
        %v1703 = vsub.s32 %v1700, %v1702
        %v1704 = vrot.slane %v1690, %v1703
        %v1705 = vcombine.low %v1513, %v1519
        %v1706 = vcombine.high %v1513, %v1519
        %v1708 = vunpack.c.l.s4 1983009808
        %v1709 = vunpack.c.0.s8 %v1708
        %v1710 = vlaneseq
        %v1711 = vshrl.u32 %v1710, 7
        %v1712 = vsub.s32 %v1709, %v1711
        %v1713 = vrot.slane %v1705, %v1712
        %v1715 = vunpack.c.l.s4 1983009808
        %v1716 = vunpack.c.0.s8 %v1715
        %v1717 = vlaneseq
        %v1718 = vshrl.u32 %v1717, 7
        %v1719 = vsub.s32 %v1716, %v1718
        %v1720 = vrot.slane %v1706, %v1719
        %v1721 = vcombine.low %v1665, %v1681
        %v1722 = vcombine.high %v1665, %v1681
        %v1724 = vunpack.c.l.s4 1934713408
        %v1725 = vunpack.c.0.s8 %v1724
        %v1726 = vlaneseq
        %v1727 = vshrl.u32 %v1726, 7
        %v1728 = vsub.s32 %v1725, %v1727
        %v1729 = vrot.slane %v1721, %v1728
        %v1731 = vunpack.c.l.s4 1934713408
        %v1732 = vunpack.c.0.s8 %v1731
        %v1733 = vlaneseq
        %v1734 = vshrl.u32 %v1733, 7
        %v1735 = vsub.s32 %v1732, %v1734
        %v1736 = vrot.slane %v1722, %v1735
        %v1737 = vcombine.low %v1672, %v1688
        %v1738 = vcombine.high %v1672, %v1688
        %v1740 = vunpack.c.l.s4 1934713408
        %v1741 = vunpack.c.0.s8 %v1740
        %v1742 = vlaneseq
        %v1743 = vshrl.u32 %v1742, 7
        %v1744 = vsub.s32 %v1741, %v1743
        %v1745 = vrot.slane %v1737, %v1744
        %v1747 = vunpack.c.l.s4 1934713408
        %v1748 = vunpack.c.0.s8 %v1747
        %v1749 = vlaneseq
        %v1750 = vshrl.u32 %v1749, 7
        %v1751 = vsub.s32 %v1748, %v1750
        %v1752 = vrot.slane %v1738, %v1751
        %v1753 = vcombine.low %v1697, %v1713
        %v1754 = vcombine.high %v1697, %v1713
        %v1756 = vunpack.c.l.s4 1934713408
        %v1757 = vunpack.c.0.s8 %v1756
        %v1758 = vlaneseq
        %v1759 = vshrl.u32 %v1758, 7
        %v1760 = vsub.s32 %v1757, %v1759
        %v1761 = vrot.slane %v1753, %v1760
        %v1763 = vunpack.c.l.s4 1934713408
        %v1764 = vunpack.c.0.s8 %v1763
        %v1765 = vlaneseq
        %v1766 = vshrl.u32 %v1765, 7
        %v1767 = vsub.s32 %v1764, %v1766
        %v1768 = vrot.slane %v1754, %v1767
        %v1769 = vcombine.low %v1704, %v1720
        %v1770 = vcombine.high %v1704, %v1720
        %v1772 = vunpack.c.l.s4 1934713408
        %v1773 = vunpack.c.0.s8 %v1772
        %v1774 = vlaneseq
        %v1775 = vshrl.u32 %v1774, 7
        %v1776 = vsub.s32 %v1773, %v1775
        %v1777 = vrot.slane %v1769, %v1776
        %v1779 = vunpack.c.l.s4 1934713408
        %v1780 = vunpack.c.0.s8 %v1779
        %v1781 = vlaneseq
        %v1782 = vshrl.u32 %v1781, 7
        %v1783 = vsub.s32 %v1780, %v1782
        %v1784 = vrot.slane %v1770, %v1783
        %v1785 = vcombine.low %v1729, %v1761
        %v1786 = vcombine.high %v1729, %v1761
        %v1787 = vcombine.low %v1736, %v1768
        %v1788 = vcombine.high %v1736, %v1768
        %v1789 = vcombine.low %v1745, %v1777
        %v1790 = vcombine.high %v1745, %v1777
        %v1791 = vcombine.low %v1752, %v1784
        %v1792 = vcombine.high %v1752, %v1784
        %v1793 = vcombine.low %v1649, %v1651
        %v1794 = vcombine.high %v1649, %v1651
        %v1796 = vunpack.c.l.s4 1983009808
        %v1797 = vunpack.c.0.s8 %v1796
        %v1798 = vlaneseq
        %v1799 = vshrl.u32 %v1798, 7
        %v1800 = vsub.s32 %v1797, %v1799
        %v1801 = vrot.slane %v1793, %v1800
        %v1803 = vunpack.c.l.s4 1983009808
        %v1804 = vunpack.c.0.s8 %v1803
        %v1805 = vlaneseq
        %v1806 = vshrl.u32 %v1805, 7
        %v1807 = vsub.s32 %v1804, %v1806
        %v1808 = vrot.slane %v1794, %v1807
        %v1809 = vcombine.low %v1650, %v1652
        %v1810 = vcombine.high %v1650, %v1652
        %v1812 = vunpack.c.l.s4 1983009808
        %v1813 = vunpack.c.0.s8 %v1812
        %v1814 = vlaneseq
        %v1815 = vshrl.u32 %v1814, 7
        %v1816 = vsub.s32 %v1813, %v1815
        %v1817 = vrot.slane %v1809, %v1816
        %v1819 = vunpack.c.l.s4 1983009808
        %v1820 = vunpack.c.0.s8 %v1819
        %v1821 = vlaneseq
        %v1822 = vshrl.u32 %v1821, 7
        %v1823 = vsub.s32 %v1820, %v1822
        %v1824 = vrot.slane %v1810, %v1823
        %v1825 = vcombine.low %v1653, %v1655
        %v1826 = vcombine.high %v1653, %v1655
        %v1828 = vunpack.c.l.s4 1983009808
        %v1829 = vunpack.c.0.s8 %v1828
        %v1830 = vlaneseq
        %v1831 = vshrl.u32 %v1830, 7
        %v1832 = vsub.s32 %v1829, %v1831
        %v1833 = vrot.slane %v1825, %v1832
        %v1835 = vunpack.c.l.s4 1983009808
        %v1836 = vunpack.c.0.s8 %v1835
        %v1837 = vlaneseq
        %v1838 = vshrl.u32 %v1837, 7
        %v1839 = vsub.s32 %v1836, %v1838
        %v1840 = vrot.slane %v1826, %v1839
        %v1841 = vcombine.low %v1654, %v1656
        %v1842 = vcombine.high %v1654, %v1656
        %v1844 = vunpack.c.l.s4 1983009808
        %v1845 = vunpack.c.0.s8 %v1844
        %v1846 = vlaneseq
        %v1847 = vshrl.u32 %v1846, 7
        %v1848 = vsub.s32 %v1845, %v1847
        %v1849 = vrot.slane %v1841, %v1848
        %v1851 = vunpack.c.l.s4 1983009808
        %v1852 = vunpack.c.0.s8 %v1851
        %v1853 = vlaneseq
        %v1854 = vshrl.u32 %v1853, 7
        %v1855 = vsub.s32 %v1852, %v1854
        %v1856 = vrot.slane %v1842, %v1855
        %v1857 = vcombine.low %v1801, %v1817
        %v1858 = vcombine.high %v1801, %v1817
        %v1860 = vunpack.c.l.s4 1934713408
        %v1861 = vunpack.c.0.s8 %v1860
        %v1862 = vlaneseq
        %v1863 = vshrl.u32 %v1862, 7
        %v1864 = vsub.s32 %v1861, %v1863
        %v1865 = vrot.slane %v1857, %v1864
        %v1867 = vunpack.c.l.s4 1934713408
        %v1868 = vunpack.c.0.s8 %v1867
        %v1869 = vlaneseq
        %v1870 = vshrl.u32 %v1869, 7
        %v1871 = vsub.s32 %v1868, %v1870
        %v1872 = vrot.slane %v1858, %v1871
        %v1873 = vcombine.low %v1808, %v1824
        %v1874 = vcombine.high %v1808, %v1824
        %v1876 = vunpack.c.l.s4 1934713408
        %v1877 = vunpack.c.0.s8 %v1876
        %v1878 = vlaneseq
        %v1879 = vshrl.u32 %v1878, 7
        %v1880 = vsub.s32 %v1877, %v1879
        %v1881 = vrot.slane %v1873, %v1880
        %v1883 = vunpack.c.l.s4 1934713408
        %v1884 = vunpack.c.0.s8 %v1883
        %v1885 = vlaneseq
        %v1886 = vshrl.u32 %v1885, 7
        %v1887 = vsub.s32 %v1884, %v1886
        %v1888 = vrot.slane %v1874, %v1887
        %v1889 = vcombine.low %v1833, %v1849
        %v1890 = vcombine.high %v1833, %v1849
        %v1892 = vunpack.c.l.s4 1934713408
        %v1893 = vunpack.c.0.s8 %v1892
        %v1894 = vlaneseq
        %v1895 = vshrl.u32 %v1894, 7
        %v1896 = vsub.s32 %v1893, %v1895
        %v1897 = vrot.slane %v1889, %v1896
        %v1899 = vunpack.c.l.s4 1934713408
        %v1900 = vunpack.c.0.s8 %v1899
        %v1901 = vlaneseq
        %v1902 = vshrl.u32 %v1901, 7
        %v1903 = vsub.s32 %v1900, %v1902
        %v1904 = vrot.slane %v1890, %v1903
        %v1905 = vcombine.low %v1840, %v1856
        %v1906 = vcombine.high %v1840, %v1856
        %v1908 = vunpack.c.l.s4 1934713408
        %v1909 = vunpack.c.0.s8 %v1908
        %v1910 = vlaneseq
        %v1911 = vshrl.u32 %v1910, 7
        %v1912 = vsub.s32 %v1909, %v1911
        %v1913 = vrot.slane %v1905, %v1912
        %v1915 = vunpack.c.l.s4 1934713408
        %v1916 = vunpack.c.0.s8 %v1915
        %v1917 = vlaneseq
        %v1918 = vshrl.u32 %v1917, 7
        %v1919 = vsub.s32 %v1916, %v1918
        %v1920 = vrot.slane %v1906, %v1919
        %v1921 = vcombine.low %v1865, %v1897
        %v1922 = vcombine.high %v1865, %v1897
        %v1923 = vcombine.low %v1872, %v1904
        %v1924 = vcombine.high %v1872, %v1904
        %v1925 = vcombine.low %v1881, %v1913
        %v1926 = vcombine.high %v1881, %v1913
        %v1927 = vcombine.low %v1888, %v1920
        %v1928 = vcombine.high %v1888, %v1920
        %v1929 = vcombine.low %v1785, %v1787
        %v1930 = vcombine.high %v1785, %v1787
        %v1932 = vunpack.c.l.s4 1983009808
        %v1933 = vunpack.c.0.s8 %v1932
        %v1934 = vlaneseq
        %v1935 = vshrl.u32 %v1934, 7
        %v1936 = vsub.s32 %v1933, %v1935
        %v1937 = vrot.slane %v1929, %v1936
        %v1939 = vunpack.c.l.s4 1983009808
        %v1940 = vunpack.c.0.s8 %v1939
        %v1941 = vlaneseq
        %v1942 = vshrl.u32 %v1941, 7
        %v1943 = vsub.s32 %v1940, %v1942
        %v1944 = vrot.slane %v1930, %v1943
        %v1945 = vcombine.low %v1786, %v1788
        %v1946 = vcombine.high %v1786, %v1788
        %v1948 = vunpack.c.l.s4 1983009808
        %v1949 = vunpack.c.0.s8 %v1948
        %v1950 = vlaneseq
        %v1951 = vshrl.u32 %v1950, 7
        %v1952 = vsub.s32 %v1949, %v1951
        %v1953 = vrot.slane %v1945, %v1952
        %v1955 = vunpack.c.l.s4 1983009808
        %v1956 = vunpack.c.0.s8 %v1955
        %v1957 = vlaneseq
        %v1958 = vshrl.u32 %v1957, 7
        %v1959 = vsub.s32 %v1956, %v1958
        %v1960 = vrot.slane %v1946, %v1959
        %v1961 = vcombine.low %v1789, %v1791
        %v1962 = vcombine.high %v1789, %v1791
        %v1964 = vunpack.c.l.s4 1983009808
        %v1965 = vunpack.c.0.s8 %v1964
        %v1966 = vlaneseq
        %v1967 = vshrl.u32 %v1966, 7
        %v1968 = vsub.s32 %v1965, %v1967
        %v1969 = vrot.slane %v1961, %v1968
        %v1971 = vunpack.c.l.s4 1983009808
        %v1972 = vunpack.c.0.s8 %v1971
        %v1973 = vlaneseq
        %v1974 = vshrl.u32 %v1973, 7
        %v1975 = vsub.s32 %v1972, %v1974
        %v1976 = vrot.slane %v1962, %v1975
        %v1977 = vcombine.low %v1790, %v1792
        %v1978 = vcombine.high %v1790, %v1792
        %v1980 = vunpack.c.l.s4 1983009808
        %v1981 = vunpack.c.0.s8 %v1980
        %v1982 = vlaneseq
        %v1983 = vshrl.u32 %v1982, 7
        %v1984 = vsub.s32 %v1981, %v1983
        %v1985 = vrot.slane %v1977, %v1984
        %v1987 = vunpack.c.l.s4 1983009808
        %v1988 = vunpack.c.0.s8 %v1987
        %v1989 = vlaneseq
        %v1990 = vshrl.u32 %v1989, 7
        %v1991 = vsub.s32 %v1988, %v1990
        %v1992 = vrot.slane %v1978, %v1991
        %v1993 = vcombine.low %v1937, %v1953
        %v1994 = vcombine.high %v1937, %v1953
        %v1996 = vunpack.c.l.s4 1934713408
        %v1997 = vunpack.c.0.s8 %v1996
        %v1998 = vlaneseq
        %v1999 = vshrl.u32 %v1998, 7
        %v2000 = vsub.s32 %v1997, %v1999
        %v2001 = vrot.slane %v1993, %v2000
        %v2003 = vunpack.c.l.s4 1934713408
        %v2004 = vunpack.c.0.s8 %v2003
        %v2005 = vlaneseq
        %v2006 = vshrl.u32 %v2005, 7
        %v2007 = vsub.s32 %v2004, %v2006
        %v2008 = vrot.slane %v1994, %v2007
        %v2009 = vcombine.low %v1944, %v1960
        %v2010 = vcombine.high %v1944, %v1960
        %v2012 = vunpack.c.l.s4 1934713408
        %v2013 = vunpack.c.0.s8 %v2012
        %v2014 = vlaneseq
        %v2015 = vshrl.u32 %v2014, 7
        %v2016 = vsub.s32 %v2013, %v2015
        %v2017 = vrot.slane %v2009, %v2016
        %v2019 = vunpack.c.l.s4 1934713408
        %v2020 = vunpack.c.0.s8 %v2019
        %v2021 = vlaneseq
        %v2022 = vshrl.u32 %v2021, 7
        %v2023 = vsub.s32 %v2020, %v2022
        %v2024 = vrot.slane %v2010, %v2023
        %v2025 = vcombine.low %v1969, %v1985
        %v2026 = vcombine.high %v1969, %v1985
        %v2028 = vunpack.c.l.s4 1934713408
        %v2029 = vunpack.c.0.s8 %v2028
        %v2030 = vlaneseq
        %v2031 = vshrl.u32 %v2030, 7
        %v2032 = vsub.s32 %v2029, %v2031
        %v2033 = vrot.slane %v2025, %v2032
        %v2035 = vunpack.c.l.s4 1934713408
        %v2036 = vunpack.c.0.s8 %v2035
        %v2037 = vlaneseq
        %v2038 = vshrl.u32 %v2037, 7
        %v2039 = vsub.s32 %v2036, %v2038
        %v2040 = vrot.slane %v2026, %v2039
        %v2041 = vcombine.low %v1976, %v1992
        %v2042 = vcombine.high %v1976, %v1992
        %v2044 = vunpack.c.l.s4 1934713408
        %v2045 = vunpack.c.0.s8 %v2044
        %v2046 = vlaneseq
        %v2047 = vshrl.u32 %v2046, 7
        %v2048 = vsub.s32 %v2045, %v2047
        %v2049 = vrot.slane %v2041, %v2048
        %v2051 = vunpack.c.l.s4 1934713408
        %v2052 = vunpack.c.0.s8 %v2051
        %v2053 = vlaneseq
        %v2054 = vshrl.u32 %v2053, 7
        %v2055 = vsub.s32 %v2052, %v2054
        %v2056 = vrot.slane %v2042, %v2055
        %v2057 = vcombine.low %v2001, %v2033
        %v2058 = vcombine.high %v2001, %v2033
        %v2059 = vcombine.low %v2008, %v2040
        %v2060 = vcombine.high %v2008, %v2040
        %v2061 = vcombine.low %v2017, %v2049
        %v2062 = vcombine.high %v2017, %v2049
        %v2063 = vcombine.low %v2024, %v2056
        %v2064 = vcombine.high %v2024, %v2056
        %v2065 = vpack.c.bf16 %v1921, %v1921
        %v2066 = vpack.c.bf16 %v1922, %v1922
        %v2067 = vpack.c.bf16 %v1923, %v1923
        %v2068 = vpack.c.bf16 %v1924, %v1924
        %v2069 = vpack.c.bf16 %v1925, %v1925
        %v2070 = vpack.c.bf16 %v1926, %v1926
        %v2071 = vpack.c.bf16 %v1927, %v1927
        %v2072 = vpack.c.bf16 %v1928, %v1928
        %v2073 = vpack.c.bf16 %v2057, %v2057
        %v2074 = vpack.c.bf16 %v2058, %v2058
        %v2075 = vpack.c.bf16 %v2059, %v2059
        %v2076 = vpack.c.bf16 %v2060, %v2060
        %v2077 = vpack.c.bf16 %v2061, %v2061
        %v2078 = vpack.c.bf16 %v2062, %v2062
        %v2079 = vpack.c.bf16 %v2063, %v2063
        %v2080 = vpack.c.bf16 %v2064, %v2064
        %2082 = vrot.lane.b32.xlu0 %v863, 120
        %v2083 = vpop.permute.xlu0 %2082
        %2085 = vrot.lane.b32.xlu0 %v863, 112
        %v2086 = vpop.permute.xlu0 %2085
        %2088 = vrot.lane.b32.xlu0 %v863, 104
        %v2089 = vpop.permute.xlu0 %2088
        %2091 = vrot.lane.b32.xlu0 %v863, 96
        %v2092 = vpop.permute.xlu0 %2091
        %2094 = vrot.lane.b32.xlu0 %v863, 88
        %v2095 = vpop.permute.xlu0 %2094
        %2097 = vrot.lane.b32.xlu0 %v863, 80
        %v2098 = vpop.permute.xlu0 %2097
        %2100 = vrot.lane.b32.xlu0 %v863, 72
        %v2101 = vpop.permute.xlu0 %2100
        %2103 = vrot.lane.b32.xlu0 %v863, 64
        %v2104 = vpop.permute.xlu0 %2103
        %2106 = vrot.lane.b32.xlu0 %v863, 56
        %v2107 = vpop.permute.xlu0 %2106
        %2109 = vrot.lane.b32.xlu0 %v863, 48
        %v2110 = vpop.permute.xlu0 %2109
        %2112 = vrot.lane.b32.xlu0 %v863, 40
        %v2113 = vpop.permute.xlu0 %2112
        %2115 = vrot.lane.b32.xlu0 %v863, 32
        %v2116 = vpop.permute.xlu0 %2115
        %2118 = vrot.lane.b32.xlu0 %v863, 24
        %v2119 = vpop.permute.xlu0 %2118
        %2121 = vrot.lane.b32.xlu0 %v863, 16
        %v2122 = vpop.permute.xlu0 %2121
        %2124 = vrot.lane.b32.xlu0 %v863, 8
        %v2125 = vpop.permute.xlu0 %2124
        %v2127 = vcombine.low %v863, %v2086
        %v2128 = vcombine.high %v863, %v2086
        %v2130 = vunpack.c.l.s4 1983009808
        %v2131 = vunpack.c.0.s8 %v2130
        %v2132 = vlaneseq
        %v2133 = vshrl.u32 %v2132, 7
        %v2134 = vsub.s32 %v2131, %v2133
        %v2135 = vrot.slane %v2127, %v2134
        %v2137 = vunpack.c.l.s4 1983009808
        %v2138 = vunpack.c.0.s8 %v2137
        %v2139 = vlaneseq
        %v2140 = vshrl.u32 %v2139, 7
        %v2141 = vsub.s32 %v2138, %v2140
        %v2142 = vrot.slane %v2128, %v2141
        %v2143 = vcombine.low %v2083, %v2089
        %v2144 = vcombine.high %v2083, %v2089
        %v2146 = vunpack.c.l.s4 1983009808
        %v2147 = vunpack.c.0.s8 %v2146
        %v2148 = vlaneseq
        %v2149 = vshrl.u32 %v2148, 7
        %v2150 = vsub.s32 %v2147, %v2149
        %v2151 = vrot.slane %v2143, %v2150
        %v2153 = vunpack.c.l.s4 1983009808
        %v2154 = vunpack.c.0.s8 %v2153
        %v2155 = vlaneseq
        %v2156 = vshrl.u32 %v2155, 7
        %v2157 = vsub.s32 %v2154, %v2156
        %v2158 = vrot.slane %v2144, %v2157
        %v2159 = vcombine.low %v2092, %v2098
        %v2160 = vcombine.high %v2092, %v2098
        %v2162 = vunpack.c.l.s4 1983009808
        %v2163 = vunpack.c.0.s8 %v2162
        %v2164 = vlaneseq
        %v2165 = vshrl.u32 %v2164, 7
        %v2166 = vsub.s32 %v2163, %v2165
        %v2167 = vrot.slane %v2159, %v2166
        %v2169 = vunpack.c.l.s4 1983009808
        %v2170 = vunpack.c.0.s8 %v2169
        %v2171 = vlaneseq
        %v2172 = vshrl.u32 %v2171, 7
        %v2173 = vsub.s32 %v2170, %v2172
        %v2174 = vrot.slane %v2160, %v2173
        %v2175 = vcombine.low %v2095, %v2101
        %v2176 = vcombine.high %v2095, %v2101
        %v2178 = vunpack.c.l.s4 1983009808
        %v2179 = vunpack.c.0.s8 %v2178
        %v2180 = vlaneseq
        %v2181 = vshrl.u32 %v2180, 7
        %v2182 = vsub.s32 %v2179, %v2181
        %v2183 = vrot.slane %v2175, %v2182
        %v2185 = vunpack.c.l.s4 1983009808
        %v2186 = vunpack.c.0.s8 %v2185
        %v2187 = vlaneseq
        %v2188 = vshrl.u32 %v2187, 7
        %v2189 = vsub.s32 %v2186, %v2188
        %v2190 = vrot.slane %v2176, %v2189
        %v2191 = vcombine.low %v2135, %v2151
        %v2192 = vcombine.high %v2135, %v2151
        %v2194 = vunpack.c.l.s4 1934713408
        %v2195 = vunpack.c.0.s8 %v2194
        %v2196 = vlaneseq
        %v2197 = vshrl.u32 %v2196, 7
        %v2198 = vsub.s32 %v2195, %v2197
        %v2199 = vrot.slane %v2191, %v2198
        %v2201 = vunpack.c.l.s4 1934713408
        %v2202 = vunpack.c.0.s8 %v2201
        %v2203 = vlaneseq
        %v2204 = vshrl.u32 %v2203, 7
        %v2205 = vsub.s32 %v2202, %v2204
        %v2206 = vrot.slane %v2192, %v2205
        %v2207 = vcombine.low %v2142, %v2158
        %v2208 = vcombine.high %v2142, %v2158
        %v2210 = vunpack.c.l.s4 1934713408
        %v2211 = vunpack.c.0.s8 %v2210
        %v2212 = vlaneseq
        %v2213 = vshrl.u32 %v2212, 7
        %v2214 = vsub.s32 %v2211, %v2213
        %v2215 = vrot.slane %v2207, %v2214
        %v2217 = vunpack.c.l.s4 1934713408
        %v2218 = vunpack.c.0.s8 %v2217
        %v2219 = vlaneseq
        %v2220 = vshrl.u32 %v2219, 7
        %v2221 = vsub.s32 %v2218, %v2220
        %v2222 = vrot.slane %v2208, %v2221
        %v2223 = vcombine.low %v2167, %v2183
        %v2224 = vcombine.high %v2167, %v2183
        %v2226 = vunpack.c.l.s4 1934713408
        %v2227 = vunpack.c.0.s8 %v2226
        %v2228 = vlaneseq
        %v2229 = vshrl.u32 %v2228, 7
        %v2230 = vsub.s32 %v2227, %v2229
        %v2231 = vrot.slane %v2223, %v2230
        %v2233 = vunpack.c.l.s4 1934713408
        %v2234 = vunpack.c.0.s8 %v2233
        %v2235 = vlaneseq
        %v2236 = vshrl.u32 %v2235, 7
        %v2237 = vsub.s32 %v2234, %v2236
        %v2238 = vrot.slane %v2224, %v2237
        %v2239 = vcombine.low %v2174, %v2190
        %v2240 = vcombine.high %v2174, %v2190
        %v2242 = vunpack.c.l.s4 1934713408
        %v2243 = vunpack.c.0.s8 %v2242
        %v2244 = vlaneseq
        %v2245 = vshrl.u32 %v2244, 7
        %v2246 = vsub.s32 %v2243, %v2245
        %v2247 = vrot.slane %v2239, %v2246
        %v2249 = vunpack.c.l.s4 1934713408
        %v2250 = vunpack.c.0.s8 %v2249
        %v2251 = vlaneseq
        %v2252 = vshrl.u32 %v2251, 7
        %v2253 = vsub.s32 %v2250, %v2252
        %v2254 = vrot.slane %v2240, %v2253
        %v2255 = vcombine.low %v2199, %v2231
        %v2256 = vcombine.high %v2199, %v2231
        %v2257 = vcombine.low %v2206, %v2238
        %v2258 = vcombine.high %v2206, %v2238
        %v2259 = vcombine.low %v2215, %v2247
        %v2260 = vcombine.high %v2215, %v2247
        %v2261 = vcombine.low %v2222, %v2254
        %v2262 = vcombine.high %v2222, %v2254
        %v2263 = vcombine.low %v2104, %v2110
        %v2264 = vcombine.high %v2104, %v2110
        %v2266 = vunpack.c.l.s4 1983009808
        %v2267 = vunpack.c.0.s8 %v2266
        %v2268 = vlaneseq
        %v2269 = vshrl.u32 %v2268, 7
        %v2270 = vsub.s32 %v2267, %v2269
        %v2271 = vrot.slane %v2263, %v2270
        %v2273 = vunpack.c.l.s4 1983009808
        %v2274 = vunpack.c.0.s8 %v2273
        %v2275 = vlaneseq
        %v2276 = vshrl.u32 %v2275, 7
        %v2277 = vsub.s32 %v2274, %v2276
        %v2278 = vrot.slane %v2264, %v2277
        %v2279 = vcombine.low %v2107, %v2113
        %v2280 = vcombine.high %v2107, %v2113
        %v2282 = vunpack.c.l.s4 1983009808
        %v2283 = vunpack.c.0.s8 %v2282
        %v2284 = vlaneseq
        %v2285 = vshrl.u32 %v2284, 7
        %v2286 = vsub.s32 %v2283, %v2285
        %v2287 = vrot.slane %v2279, %v2286
        %v2289 = vunpack.c.l.s4 1983009808
        %v2290 = vunpack.c.0.s8 %v2289
        %v2291 = vlaneseq
        %v2292 = vshrl.u32 %v2291, 7
        %v2293 = vsub.s32 %v2290, %v2292
        %v2294 = vrot.slane %v2280, %v2293
        %v2295 = vcombine.low %v2116, %v2122
        %v2296 = vcombine.high %v2116, %v2122
        %v2298 = vunpack.c.l.s4 1983009808
        %v2299 = vunpack.c.0.s8 %v2298
        %v2300 = vlaneseq
        %v2301 = vshrl.u32 %v2300, 7
        %v2302 = vsub.s32 %v2299, %v2301
        %v2303 = vrot.slane %v2295, %v2302
        %v2305 = vunpack.c.l.s4 1983009808
        %v2306 = vunpack.c.0.s8 %v2305
        %v2307 = vlaneseq
        %v2308 = vshrl.u32 %v2307, 7
        %v2309 = vsub.s32 %v2306, %v2308
        %v2310 = vrot.slane %v2296, %v2309
        %v2311 = vcombine.low %v2119, %v2125
        %v2312 = vcombine.high %v2119, %v2125
        %v2314 = vunpack.c.l.s4 1983009808
        %v2315 = vunpack.c.0.s8 %v2314
        %v2316 = vlaneseq
        %v2317 = vshrl.u32 %v2316, 7
        %v2318 = vsub.s32 %v2315, %v2317
        %v2319 = vrot.slane %v2311, %v2318
        %v2321 = vunpack.c.l.s4 1983009808
        %v2322 = vunpack.c.0.s8 %v2321
        %v2323 = vlaneseq
        %v2324 = vshrl.u32 %v2323, 7
        %v2325 = vsub.s32 %v2322, %v2324
        %v2326 = vrot.slane %v2312, %v2325
        %v2327 = vcombine.low %v2271, %v2287
        %v2328 = vcombine.high %v2271, %v2287
        %v2330 = vunpack.c.l.s4 1934713408
        %v2331 = vunpack.c.0.s8 %v2330
        %v2332 = vlaneseq
        %v2333 = vshrl.u32 %v2332, 7
        %v2334 = vsub.s32 %v2331, %v2333
        %v2335 = vrot.slane %v2327, %v2334
        %v2337 = vunpack.c.l.s4 1934713408
        %v2338 = vunpack.c.0.s8 %v2337
        %v2339 = vlaneseq
        %v2340 = vshrl.u32 %v2339, 7
        %v2341 = vsub.s32 %v2338, %v2340
        %v2342 = vrot.slane %v2328, %v2341
        %v2343 = vcombine.low %v2278, %v2294
        %v2344 = vcombine.high %v2278, %v2294
        %v2346 = vunpack.c.l.s4 1934713408
        %v2347 = vunpack.c.0.s8 %v2346
        %v2348 = vlaneseq
        %v2349 = vshrl.u32 %v2348, 7
        %v2350 = vsub.s32 %v2347, %v2349
        %v2351 = vrot.slane %v2343, %v2350
        %v2353 = vunpack.c.l.s4 1934713408
        %v2354 = vunpack.c.0.s8 %v2353
        %v2355 = vlaneseq
        %v2356 = vshrl.u32 %v2355, 7
        %v2357 = vsub.s32 %v2354, %v2356
        %v2358 = vrot.slane %v2344, %v2357
        %v2359 = vcombine.low %v2303, %v2319
        %v2360 = vcombine.high %v2303, %v2319
        %v2362 = vunpack.c.l.s4 1934713408
        %v2363 = vunpack.c.0.s8 %v2362
        %v2364 = vlaneseq
        %v2365 = vshrl.u32 %v2364, 7
        %v2366 = vsub.s32 %v2363, %v2365
        %v2367 = vrot.slane %v2359, %v2366
        %v2369 = vunpack.c.l.s4 1934713408
        %v2370 = vunpack.c.0.s8 %v2369
        %v2371 = vlaneseq
        %v2372 = vshrl.u32 %v2371, 7
        %v2373 = vsub.s32 %v2370, %v2372
        %v2374 = vrot.slane %v2360, %v2373
        %v2375 = vcombine.low %v2310, %v2326
        %v2376 = vcombine.high %v2310, %v2326
        %v2378 = vunpack.c.l.s4 1934713408
        %v2379 = vunpack.c.0.s8 %v2378
        %v2380 = vlaneseq
        %v2381 = vshrl.u32 %v2380, 7
        %v2382 = vsub.s32 %v2379, %v2381
        %v2383 = vrot.slane %v2375, %v2382
        %v2385 = vunpack.c.l.s4 1934713408
        %v2386 = vunpack.c.0.s8 %v2385
        %v2387 = vlaneseq
        %v2388 = vshrl.u32 %v2387, 7
        %v2389 = vsub.s32 %v2386, %v2388
        %v2390 = vrot.slane %v2376, %v2389
        %v2391 = vcombine.low %v2335, %v2367
        %v2392 = vcombine.high %v2335, %v2367
        %v2393 = vcombine.low %v2342, %v2374
        %v2394 = vcombine.high %v2342, %v2374
        %v2395 = vcombine.low %v2351, %v2383
        %v2396 = vcombine.high %v2351, %v2383
        %v2397 = vcombine.low %v2358, %v2390
        %v2398 = vcombine.high %v2358, %v2390
        %v2399 = vcombine.low %v2255, %v2257
        %v2400 = vcombine.high %v2255, %v2257
        %v2402 = vunpack.c.l.s4 1983009808
        %v2403 = vunpack.c.0.s8 %v2402
        %v2404 = vlaneseq
        %v2405 = vshrl.u32 %v2404, 7
        %v2406 = vsub.s32 %v2403, %v2405
        %v2407 = vrot.slane %v2399, %v2406
        %v2409 = vunpack.c.l.s4 1983009808
        %v2410 = vunpack.c.0.s8 %v2409
        %v2411 = vlaneseq
        %v2412 = vshrl.u32 %v2411, 7
        %v2413 = vsub.s32 %v2410, %v2412
        %v2414 = vrot.slane %v2400, %v2413
        %v2415 = vcombine.low %v2256, %v2258
        %v2416 = vcombine.high %v2256, %v2258
        %v2418 = vunpack.c.l.s4 1983009808
        %v2419 = vunpack.c.0.s8 %v2418
        %v2420 = vlaneseq
        %v2421 = vshrl.u32 %v2420, 7
        %v2422 = vsub.s32 %v2419, %v2421
        %v2423 = vrot.slane %v2415, %v2422
        %v2425 = vunpack.c.l.s4 1983009808
        %v2426 = vunpack.c.0.s8 %v2425
        %v2427 = vlaneseq
        %v2428 = vshrl.u32 %v2427, 7
        %v2429 = vsub.s32 %v2426, %v2428
        %v2430 = vrot.slane %v2416, %v2429
        %v2431 = vcombine.low %v2259, %v2261
        %v2432 = vcombine.high %v2259, %v2261
        %v2434 = vunpack.c.l.s4 1983009808
        %v2435 = vunpack.c.0.s8 %v2434
        %v2436 = vlaneseq
        %v2437 = vshrl.u32 %v2436, 7
        %v2438 = vsub.s32 %v2435, %v2437
        %v2439 = vrot.slane %v2431, %v2438
        %v2441 = vunpack.c.l.s4 1983009808
        %v2442 = vunpack.c.0.s8 %v2441
        %v2443 = vlaneseq
        %v2444 = vshrl.u32 %v2443, 7
        %v2445 = vsub.s32 %v2442, %v2444
        %v2446 = vrot.slane %v2432, %v2445
        %v2447 = vcombine.low %v2260, %v2262
        %v2448 = vcombine.high %v2260, %v2262
        %v2450 = vunpack.c.l.s4 1983009808
        %v2451 = vunpack.c.0.s8 %v2450
        %v2452 = vlaneseq
        %v2453 = vshrl.u32 %v2452, 7
        %v2454 = vsub.s32 %v2451, %v2453
        %v2455 = vrot.slane %v2447, %v2454
        %v2457 = vunpack.c.l.s4 1983009808
        %v2458 = vunpack.c.0.s8 %v2457
        %v2459 = vlaneseq
        %v2460 = vshrl.u32 %v2459, 7
        %v2461 = vsub.s32 %v2458, %v2460
        %v2462 = vrot.slane %v2448, %v2461
        %v2463 = vcombine.low %v2407, %v2423
        %v2464 = vcombine.high %v2407, %v2423
        %v2466 = vunpack.c.l.s4 1934713408
        %v2467 = vunpack.c.0.s8 %v2466
        %v2468 = vlaneseq
        %v2469 = vshrl.u32 %v2468, 7
        %v2470 = vsub.s32 %v2467, %v2469
        %v2471 = vrot.slane %v2463, %v2470
        %v2473 = vunpack.c.l.s4 1934713408
        %v2474 = vunpack.c.0.s8 %v2473
        %v2475 = vlaneseq
        %v2476 = vshrl.u32 %v2475, 7
        %v2477 = vsub.s32 %v2474, %v2476
        %v2478 = vrot.slane %v2464, %v2477
        %v2479 = vcombine.low %v2414, %v2430
        %v2480 = vcombine.high %v2414, %v2430
        %v2482 = vunpack.c.l.s4 1934713408
        %v2483 = vunpack.c.0.s8 %v2482
        %v2484 = vlaneseq
        %v2485 = vshrl.u32 %v2484, 7
        %v2486 = vsub.s32 %v2483, %v2485
        %v2487 = vrot.slane %v2479, %v2486
        %v2489 = vunpack.c.l.s4 1934713408
        %v2490 = vunpack.c.0.s8 %v2489
        %v2491 = vlaneseq
        %v2492 = vshrl.u32 %v2491, 7
        %v2493 = vsub.s32 %v2490, %v2492
        %v2494 = vrot.slane %v2480, %v2493
        %v2495 = vcombine.low %v2439, %v2455
        %v2496 = vcombine.high %v2439, %v2455
        %v2498 = vunpack.c.l.s4 1934713408
        %v2499 = vunpack.c.0.s8 %v2498
        %v2500 = vlaneseq
        %v2501 = vshrl.u32 %v2500, 7
        %v2502 = vsub.s32 %v2499, %v2501
        %v2503 = vrot.slane %v2495, %v2502
        %v2505 = vunpack.c.l.s4 1934713408
        %v2506 = vunpack.c.0.s8 %v2505
        %v2507 = vlaneseq
        %v2508 = vshrl.u32 %v2507, 7
        %v2509 = vsub.s32 %v2506, %v2508
        %v2510 = vrot.slane %v2496, %v2509
        %v2511 = vcombine.low %v2446, %v2462
        %v2512 = vcombine.high %v2446, %v2462
        %v2514 = vunpack.c.l.s4 1934713408
        %v2515 = vunpack.c.0.s8 %v2514
        %v2516 = vlaneseq
        %v2517 = vshrl.u32 %v2516, 7
        %v2518 = vsub.s32 %v2515, %v2517
        %v2519 = vrot.slane %v2511, %v2518
        %v2521 = vunpack.c.l.s4 1934713408
        %v2522 = vunpack.c.0.s8 %v2521
        %v2523 = vlaneseq
        %v2524 = vshrl.u32 %v2523, 7
        %v2525 = vsub.s32 %v2522, %v2524
        %v2526 = vrot.slane %v2512, %v2525
        %v2527 = vcombine.low %v2471, %v2503
        %v2528 = vcombine.high %v2471, %v2503
        %v2529 = vcombine.low %v2478, %v2510
        %v2530 = vcombine.high %v2478, %v2510
        %v2531 = vcombine.low %v2487, %v2519
        %v2532 = vcombine.high %v2487, %v2519
        %v2533 = vcombine.low %v2494, %v2526
        %v2534 = vcombine.high %v2494, %v2526
        %v2535 = vcombine.low %v2391, %v2393
        %v2536 = vcombine.high %v2391, %v2393
        %v2538 = vunpack.c.l.s4 1983009808
        %v2539 = vunpack.c.0.s8 %v2538
        %v2540 = vlaneseq
        %v2541 = vshrl.u32 %v2540, 7
        %v2542 = vsub.s32 %v2539, %v2541
        %v2543 = vrot.slane %v2535, %v2542
        %v2545 = vunpack.c.l.s4 1983009808
        %v2546 = vunpack.c.0.s8 %v2545
        %v2547 = vlaneseq
        %v2548 = vshrl.u32 %v2547, 7
        %v2549 = vsub.s32 %v2546, %v2548
        %v2550 = vrot.slane %v2536, %v2549
        %v2551 = vcombine.low %v2392, %v2394
        %v2552 = vcombine.high %v2392, %v2394
        %v2554 = vunpack.c.l.s4 1983009808
        %v2555 = vunpack.c.0.s8 %v2554
        %v2556 = vlaneseq
        %v2557 = vshrl.u32 %v2556, 7
        %v2558 = vsub.s32 %v2555, %v2557
        %v2559 = vrot.slane %v2551, %v2558
        %v2561 = vunpack.c.l.s4 1983009808
        %v2562 = vunpack.c.0.s8 %v2561
        %v2563 = vlaneseq
        %v2564 = vshrl.u32 %v2563, 7
        %v2565 = vsub.s32 %v2562, %v2564
        %v2566 = vrot.slane %v2552, %v2565
        %v2567 = vcombine.low %v2395, %v2397
        %v2568 = vcombine.high %v2395, %v2397
        %v2570 = vunpack.c.l.s4 1983009808
        %v2571 = vunpack.c.0.s8 %v2570
        %v2572 = vlaneseq
        %v2573 = vshrl.u32 %v2572, 7
        %v2574 = vsub.s32 %v2571, %v2573
        %v2575 = vrot.slane %v2567, %v2574
        %v2577 = vunpack.c.l.s4 1983009808
        %v2578 = vunpack.c.0.s8 %v2577
        %v2579 = vlaneseq
        %v2580 = vshrl.u32 %v2579, 7
        %v2581 = vsub.s32 %v2578, %v2580
        %v2582 = vrot.slane %v2568, %v2581
        %v2583 = vcombine.low %v2396, %v2398
        %v2584 = vcombine.high %v2396, %v2398
        %v2586 = vunpack.c.l.s4 1983009808
        %v2587 = vunpack.c.0.s8 %v2586
        %v2588 = vlaneseq
        %v2589 = vshrl.u32 %v2588, 7
        %v2590 = vsub.s32 %v2587, %v2589
        %v2591 = vrot.slane %v2583, %v2590
        %v2593 = vunpack.c.l.s4 1983009808
        %v2594 = vunpack.c.0.s8 %v2593
        %v2595 = vlaneseq
        %v2596 = vshrl.u32 %v2595, 7
        %v2597 = vsub.s32 %v2594, %v2596
        %v2598 = vrot.slane %v2584, %v2597
        %v2599 = vcombine.low %v2543, %v2559
        %v2600 = vcombine.high %v2543, %v2559
        %v2602 = vunpack.c.l.s4 1934713408
        %v2603 = vunpack.c.0.s8 %v2602
        %v2604 = vlaneseq
        %v2605 = vshrl.u32 %v2604, 7
        %v2606 = vsub.s32 %v2603, %v2605
        %v2607 = vrot.slane %v2599, %v2606
        %v2609 = vunpack.c.l.s4 1934713408
        %v2610 = vunpack.c.0.s8 %v2609
        %v2611 = vlaneseq
        %v2612 = vshrl.u32 %v2611, 7
        %v2613 = vsub.s32 %v2610, %v2612
        %v2614 = vrot.slane %v2600, %v2613
        %v2615 = vcombine.low %v2550, %v2566
        %v2616 = vcombine.high %v2550, %v2566
        %v2618 = vunpack.c.l.s4 1934713408
        %v2619 = vunpack.c.0.s8 %v2618
        %v2620 = vlaneseq
        %v2621 = vshrl.u32 %v2620, 7
        %v2622 = vsub.s32 %v2619, %v2621
        %v2623 = vrot.slane %v2615, %v2622
        %v2625 = vunpack.c.l.s4 1934713408
        %v2626 = vunpack.c.0.s8 %v2625
        %v2627 = vlaneseq
        %v2628 = vshrl.u32 %v2627, 7
        %v2629 = vsub.s32 %v2626, %v2628
        %v2630 = vrot.slane %v2616, %v2629
        %v2631 = vcombine.low %v2575, %v2591
        %v2632 = vcombine.high %v2575, %v2591
        %v2634 = vunpack.c.l.s4 1934713408
        %v2635 = vunpack.c.0.s8 %v2634
        %v2636 = vlaneseq
        %v2637 = vshrl.u32 %v2636, 7
        %v2638 = vsub.s32 %v2635, %v2637
        %v2639 = vrot.slane %v2631, %v2638
        %v2641 = vunpack.c.l.s4 1934713408
        %v2642 = vunpack.c.0.s8 %v2641
        %v2643 = vlaneseq
        %v2644 = vshrl.u32 %v2643, 7
        %v2645 = vsub.s32 %v2642, %v2644
        %v2646 = vrot.slane %v2632, %v2645
        %v2647 = vcombine.low %v2582, %v2598
        %v2648 = vcombine.high %v2582, %v2598
        %v2650 = vunpack.c.l.s4 1934713408
        %v2651 = vunpack.c.0.s8 %v2650
        %v2652 = vlaneseq
        %v2653 = vshrl.u32 %v2652, 7
        %v2654 = vsub.s32 %v2651, %v2653
        %v2655 = vrot.slane %v2647, %v2654
        %v2657 = vunpack.c.l.s4 1934713408
        %v2658 = vunpack.c.0.s8 %v2657
        %v2659 = vlaneseq
        %v2660 = vshrl.u32 %v2659, 7
        %v2661 = vsub.s32 %v2658, %v2660
        %v2662 = vrot.slane %v2648, %v2661
        %v2663 = vcombine.low %v2607, %v2639
        %v2664 = vcombine.high %v2607, %v2639
        %v2665 = vcombine.low %v2614, %v2646
        %v2666 = vcombine.high %v2614, %v2646
        %v2667 = vcombine.low %v2623, %v2655
        %v2668 = vcombine.high %v2623, %v2655
        %v2669 = vcombine.low %v2630, %v2662
        %v2670 = vcombine.high %v2630, %v2662
        %v2671 = vpack.c.bf16 %v2527, %v2527
        %v2672 = vpack.c.bf16 %v2528, %v2528
        %v2673 = vpack.c.bf16 %v2529, %v2529
        %v2674 = vpack.c.bf16 %v2530, %v2530
        %v2675 = vpack.c.bf16 %v2531, %v2531
        %v2676 = vpack.c.bf16 %v2532, %v2532
        %v2677 = vpack.c.bf16 %v2533, %v2533
        %v2678 = vpack.c.bf16 %v2534, %v2534
        %v2679 = vpack.c.bf16 %v2663, %v2663
        %v2680 = vpack.c.bf16 %v2664, %v2664
        %v2681 = vpack.c.bf16 %v2665, %v2665
        %v2682 = vpack.c.bf16 %v2666, %v2666
        %v2683 = vpack.c.bf16 %v2667, %v2667
        %v2684 = vpack.c.bf16 %v2668, %v2668
        %v2685 = vpack.c.bf16 %v2669, %v2669
        %v2686 = vpack.c.bf16 %v2670, %v2670
        %vm2687 = vcmask 64512
        %v2689 = vsel %vm2687, %v1459, 0
        %v2692 = vsel %vm2687, %v2065, 0
        %2694 = vmatprep.subr.bf16.mxu0 0
        %2695 = vmatpush1.bf16.xpose.msra.mxu0 0
        %2696 = vmatprep.subr.bf16.mxu0 0
        %2697 = vmatpush1.bf16.xpose.msra.mxu0 0
        %2698 = vmatprep.subr.bf16.mxu0 0
        %2699 = vmatpush1.bf16.xpose.msra.mxu0 0
        %2700 = vmatprep.subr.bf16.mxu0 0
        %2701 = vmatpush1.bf16.xpose.msra.mxu0 0
        %2702 = vmatprep.subr.bf16.mxu0 0
        %2703 = vmatpush1.bf16.xpose.msra.mxu0 0
        %2704 = vmatprep.subr.bf16.mxu0 0
        %2705 = vmatpush1.bf16.xpose.msra.mxu0 0
        %2706 = vmatprep.subr.bf16.mxu0 0
        %2707 = vmatpush1.bf16.xpose.msra.mxu0 0
        %2708 = vmatprep.subr.bf16.mxu0 0
        %2709 = vmatpush1.bf16.xpose.msra.mxu0 %v2692
        %2710 = vmatprep.subr.bf16.mxu0 0
        %2711 = vmatpush2.bf16.xpose.msra.mxu0 0
        %2712 = vmatprep.subr.bf16.mxu0 0
        %2713 = vmatpush2.bf16.xpose.msra.mxu0 0
        %2714 = vmatprep.subr.bf16.mxu0 0
        %2715 = vmatpush2.bf16.xpose.msra.mxu0 0
        %2716 = vmatprep.subr.bf16.mxu0 0
        %2717 = vmatpush2.bf16.xpose.msra.mxu0 0
        %2718 = vmatprep.subr.bf16.mxu0 0
        %2719 = vmatpush2.bf16.xpose.msra.mxu0 0
        %2720 = vmatprep.subr.bf16.mxu0 0
        %2721 = vmatpush2.bf16.xpose.msra.mxu0 0
        %2722 = vmatprep.subr.bf16.mxu0 0
        %2723 = vmatpush2.bf16.xpose.msra.mxu0 0
        %2724 = vmatprep.subr.bf16.mxu0 0
        %2725 = vmatpush2.bf16.xpose.msra.mxu0 0
        %2726 = vmatprep.mubr.bf16.mxu0 0
        %2727 = vmatmul.mubr.bf16.gmra.mxu0 %v2689
        %v2728 = vpop.f32.mrf.mxu0
        %v2729 = vadd.f32 0.0, %v2728
        %v2730 = vpop.f32.mrf.mxu0
        %v2731 = vpop.f32.mrf.mxu0
        %v2732 = vpop.f32.mrf.mxu0
        %2733 = vdwg.mxu0
        %v2735 = vsel %vm2687, %v1460, 0
        %v2738 = vsel %vm2687, %v2066, 0
        %2740 = vmatprep.subr.bf16.mxu0 0
        %2741 = vmatpush1.bf16.xpose.msra.mxu0 0
        %2742 = vmatprep.subr.bf16.mxu0 0
        %2743 = vmatpush1.bf16.xpose.msra.mxu0 0
        %2744 = vmatprep.subr.bf16.mxu0 0
        %2745 = vmatpush1.bf16.xpose.msra.mxu0 0
        %2746 = vmatprep.subr.bf16.mxu0 0
        %2747 = vmatpush1.bf16.xpose.msra.mxu0 0
        %2748 = vmatprep.subr.bf16.mxu0 0
        %2749 = vmatpush1.bf16.xpose.msra.mxu0 0
        %2750 = vmatprep.subr.bf16.mxu0 0
        %2751 = vmatpush1.bf16.xpose.msra.mxu0 0
        %2752 = vmatprep.subr.bf16.mxu0 0
        %2753 = vmatpush1.bf16.xpose.msra.mxu0 0
        %2754 = vmatprep.subr.bf16.mxu0 0
        %2755 = vmatpush1.bf16.xpose.msra.mxu0 %v2738
        %2756 = vmatprep.subr.bf16.mxu0 0
        %2757 = vmatpush2.bf16.xpose.msra.mxu0 0
        %2758 = vmatprep.subr.bf16.mxu0 0
        %2759 = vmatpush2.bf16.xpose.msra.mxu0 0
        %2760 = vmatprep.subr.bf16.mxu0 0
        %2761 = vmatpush2.bf16.xpose.msra.mxu0 0
        %2762 = vmatprep.subr.bf16.mxu0 0
        %2763 = vmatpush2.bf16.xpose.msra.mxu0 0
        %2764 = vmatprep.subr.bf16.mxu0 0
        %2765 = vmatpush2.bf16.xpose.msra.mxu0 0
        %2766 = vmatprep.subr.bf16.mxu0 0
        %2767 = vmatpush2.bf16.xpose.msra.mxu0 0
        %2768 = vmatprep.subr.bf16.mxu0 0
        %2769 = vmatpush2.bf16.xpose.msra.mxu0 0
        %2770 = vmatprep.subr.bf16.mxu0 0
        %2771 = vmatpush2.bf16.xpose.msra.mxu0 0
        %2772 = vmatprep.mubr.bf16.mxu0 0
        %2773 = vmatmul.mubr.bf16.gmra.mxu0 %v2735
        %v2774 = vpop.f32.mrf.mxu0
        %v2775 = vadd.f32 0.0, %v2774
        %v2776 = vpop.f32.mrf.mxu0
        %v2777 = vpop.f32.mrf.mxu0
        %v2778 = vpop.f32.mrf.mxu0
        %2779 = vdwg.mxu0
        %v2781 = vsel %vm2687, %v1461, 0
        %v2784 = vsel %vm2687, %v2067, 0
        %2786 = vmatprep.subr.bf16.mxu0 0
        %2787 = vmatpush1.bf16.xpose.msra.mxu0 0
        %2788 = vmatprep.subr.bf16.mxu0 0
        %2789 = vmatpush1.bf16.xpose.msra.mxu0 0
        %2790 = vmatprep.subr.bf16.mxu0 0
        %2791 = vmatpush1.bf16.xpose.msra.mxu0 0
        %2792 = vmatprep.subr.bf16.mxu0 0
        %2793 = vmatpush1.bf16.xpose.msra.mxu0 0
        %2794 = vmatprep.subr.bf16.mxu0 0
        %2795 = vmatpush1.bf16.xpose.msra.mxu0 0
        %2796 = vmatprep.subr.bf16.mxu0 0
        %2797 = vmatpush1.bf16.xpose.msra.mxu0 0
        %2798 = vmatprep.subr.bf16.mxu0 0
        %2799 = vmatpush1.bf16.xpose.msra.mxu0 0
        %2800 = vmatprep.subr.bf16.mxu0 0
        %2801 = vmatpush1.bf16.xpose.msra.mxu0 %v2784
        %2802 = vmatprep.subr.bf16.mxu0 0
        %2803 = vmatpush2.bf16.xpose.msra.mxu0 0
        %2804 = vmatprep.subr.bf16.mxu0 0
        %2805 = vmatpush2.bf16.xpose.msra.mxu0 0
        %2806 = vmatprep.subr.bf16.mxu0 0
        %2807 = vmatpush2.bf16.xpose.msra.mxu0 0
        %2808 = vmatprep.subr.bf16.mxu0 0
        %2809 = vmatpush2.bf16.xpose.msra.mxu0 0
        %2810 = vmatprep.subr.bf16.mxu0 0
        %2811 = vmatpush2.bf16.xpose.msra.mxu0 0
        %2812 = vmatprep.subr.bf16.mxu0 0
        %2813 = vmatpush2.bf16.xpose.msra.mxu0 0
        %2814 = vmatprep.subr.bf16.mxu0 0
        %2815 = vmatpush2.bf16.xpose.msra.mxu0 0
        %2816 = vmatprep.subr.bf16.mxu0 0
        %2817 = vmatpush2.bf16.xpose.msra.mxu0 0
        %2818 = vmatprep.mubr.bf16.mxu0 0
        %2819 = vmatmul.mubr.bf16.gmra.mxu0 %v2781
        %v2820 = vpop.f32.mrf.mxu0
        %v2821 = vadd.f32 0.0, %v2820
        %v2822 = vpop.f32.mrf.mxu0
        %v2823 = vpop.f32.mrf.mxu0
        %v2824 = vpop.f32.mrf.mxu0
        %2825 = vdwg.mxu0
        %v2827 = vsel %vm2687, %v1462, 0
        %v2830 = vsel %vm2687, %v2068, 0
        %2832 = vmatprep.subr.bf16.mxu0 0
        %2833 = vmatpush1.bf16.xpose.msra.mxu0 0
        %2834 = vmatprep.subr.bf16.mxu0 0
        %2835 = vmatpush1.bf16.xpose.msra.mxu0 0
        %2836 = vmatprep.subr.bf16.mxu0 0
        %2837 = vmatpush1.bf16.xpose.msra.mxu0 0
        %2838 = vmatprep.subr.bf16.mxu0 0
        %2839 = vmatpush1.bf16.xpose.msra.mxu0 0
        %2840 = vmatprep.subr.bf16.mxu0 0
        %2841 = vmatpush1.bf16.xpose.msra.mxu0 0
        %2842 = vmatprep.subr.bf16.mxu0 0
        %2843 = vmatpush1.bf16.xpose.msra.mxu0 0
        %2844 = vmatprep.subr.bf16.mxu0 0
        %2845 = vmatpush1.bf16.xpose.msra.mxu0 0
        %2846 = vmatprep.subr.bf16.mxu0 0
        %2847 = vmatpush1.bf16.xpose.msra.mxu0 %v2830
        %2848 = vmatprep.subr.bf16.mxu0 0
        %2849 = vmatpush2.bf16.xpose.msra.mxu0 0
        %2850 = vmatprep.subr.bf16.mxu0 0
        %2851 = vmatpush2.bf16.xpose.msra.mxu0 0
        %2852 = vmatprep.subr.bf16.mxu0 0
        %2853 = vmatpush2.bf16.xpose.msra.mxu0 0
        %2854 = vmatprep.subr.bf16.mxu0 0
        %2855 = vmatpush2.bf16.xpose.msra.mxu0 0
        %2856 = vmatprep.subr.bf16.mxu0 0
        %2857 = vmatpush2.bf16.xpose.msra.mxu0 0
        %2858 = vmatprep.subr.bf16.mxu0 0
        %2859 = vmatpush2.bf16.xpose.msra.mxu0 0
        %2860 = vmatprep.subr.bf16.mxu0 0
        %2861 = vmatpush2.bf16.xpose.msra.mxu0 0
        %2862 = vmatprep.subr.bf16.mxu0 0
        %2863 = vmatpush2.bf16.xpose.msra.mxu0 0
        %2864 = vmatprep.mubr.bf16.mxu0 0
        %2865 = vmatmul.mubr.bf16.gmra.mxu0 %v2827
        %v2866 = vpop.f32.mrf.mxu0
        %v2867 = vadd.f32 0.0, %v2866
        %v2868 = vpop.f32.mrf.mxu0
        %v2869 = vpop.f32.mrf.mxu0
        %v2870 = vpop.f32.mrf.mxu0
        %2871 = vdwg.mxu0
        %v2873 = vsel %vm2687, %v1463, 0
        %v2876 = vsel %vm2687, %v2069, 0
        %2878 = vmatprep.subr.bf16.mxu0 0
        %2879 = vmatpush1.bf16.xpose.msra.mxu0 0
        %2880 = vmatprep.subr.bf16.mxu0 0
        %2881 = vmatpush1.bf16.xpose.msra.mxu0 0
        %2882 = vmatprep.subr.bf16.mxu0 0
        %2883 = vmatpush1.bf16.xpose.msra.mxu0 0
        %2884 = vmatprep.subr.bf16.mxu0 0
        %2885 = vmatpush1.bf16.xpose.msra.mxu0 0
        %2886 = vmatprep.subr.bf16.mxu0 0
        %2887 = vmatpush1.bf16.xpose.msra.mxu0 0
        %2888 = vmatprep.subr.bf16.mxu0 0
        %2889 = vmatpush1.bf16.xpose.msra.mxu0 0
        %2890 = vmatprep.subr.bf16.mxu0 0
        %2891 = vmatpush1.bf16.xpose.msra.mxu0 0
        %2892 = vmatprep.subr.bf16.mxu0 0
        %2893 = vmatpush1.bf16.xpose.msra.mxu0 %v2876
        %2894 = vmatprep.subr.bf16.mxu0 0
        %2895 = vmatpush2.bf16.xpose.msra.mxu0 0
        %2896 = vmatprep.subr.bf16.mxu0 0
        %2897 = vmatpush2.bf16.xpose.msra.mxu0 0
        %2898 = vmatprep.subr.bf16.mxu0 0
        %2899 = vmatpush2.bf16.xpose.msra.mxu0 0
        %2900 = vmatprep.subr.bf16.mxu0 0
        %2901 = vmatpush2.bf16.xpose.msra.mxu0 0
        %2902 = vmatprep.subr.bf16.mxu0 0
        %2903 = vmatpush2.bf16.xpose.msra.mxu0 0
        %2904 = vmatprep.subr.bf16.mxu0 0
        %2905 = vmatpush2.bf16.xpose.msra.mxu0 0
        %2906 = vmatprep.subr.bf16.mxu0 0
        %2907 = vmatpush2.bf16.xpose.msra.mxu0 0
        %2908 = vmatprep.subr.bf16.mxu0 0
        %2909 = vmatpush2.bf16.xpose.msra.mxu0 0
        %2910 = vmatprep.mubr.bf16.mxu0 0
        %2911 = vmatmul.mubr.bf16.gmra.mxu0 %v2873
        %v2912 = vpop.f32.mrf.mxu0
        %v2913 = vadd.f32 0.0, %v2912
        %v2914 = vpop.f32.mrf.mxu0
        %v2915 = vpop.f32.mrf.mxu0
        %v2916 = vpop.f32.mrf.mxu0
        %2917 = vdwg.mxu0
        %v2919 = vsel %vm2687, %v1464, 0
        %v2922 = vsel %vm2687, %v2070, 0
        %2924 = vmatprep.subr.bf16.mxu0 0
        %2925 = vmatpush1.bf16.xpose.msra.mxu0 0
        %2926 = vmatprep.subr.bf16.mxu0 0
        %2927 = vmatpush1.bf16.xpose.msra.mxu0 0
        %2928 = vmatprep.subr.bf16.mxu0 0
        %2929 = vmatpush1.bf16.xpose.msra.mxu0 0
        %2930 = vmatprep.subr.bf16.mxu0 0
        %2931 = vmatpush1.bf16.xpose.msra.mxu0 0
        %2932 = vmatprep.subr.bf16.mxu0 0
        %2933 = vmatpush1.bf16.xpose.msra.mxu0 0
        %2934 = vmatprep.subr.bf16.mxu0 0
        %2935 = vmatpush1.bf16.xpose.msra.mxu0 0
        %2936 = vmatprep.subr.bf16.mxu0 0
        %2937 = vmatpush1.bf16.xpose.msra.mxu0 0
        %2938 = vmatprep.subr.bf16.mxu0 0
        %2939 = vmatpush1.bf16.xpose.msra.mxu0 %v2922
        %2940 = vmatprep.subr.bf16.mxu0 0
        %2941 = vmatpush2.bf16.xpose.msra.mxu0 0
        %2942 = vmatprep.subr.bf16.mxu0 0
        %2943 = vmatpush2.bf16.xpose.msra.mxu0 0
        %2944 = vmatprep.subr.bf16.mxu0 0
        %2945 = vmatpush2.bf16.xpose.msra.mxu0 0
        %2946 = vmatprep.subr.bf16.mxu0 0
        %2947 = vmatpush2.bf16.xpose.msra.mxu0 0
        %2948 = vmatprep.subr.bf16.mxu0 0
        %2949 = vmatpush2.bf16.xpose.msra.mxu0 0
        %2950 = vmatprep.subr.bf16.mxu0 0
        %2951 = vmatpush2.bf16.xpose.msra.mxu0 0
        %2952 = vmatprep.subr.bf16.mxu0 0
        %2953 = vmatpush2.bf16.xpose.msra.mxu0 0
        %2954 = vmatprep.subr.bf16.mxu0 0
        %2955 = vmatpush2.bf16.xpose.msra.mxu0 0
        %2956 = vmatprep.mubr.bf16.mxu0 0
        %2957 = vmatmul.mubr.bf16.gmra.mxu0 %v2919
        %v2958 = vpop.f32.mrf.mxu0
        %v2959 = vadd.f32 0.0, %v2958
        %v2960 = vpop.f32.mrf.mxu0
        %v2961 = vpop.f32.mrf.mxu0
        %v2962 = vpop.f32.mrf.mxu0
        %2963 = vdwg.mxu0
        %v2965 = vsel %vm2687, %v1465, 0
        %v2968 = vsel %vm2687, %v2071, 0
        %2970 = vmatprep.subr.bf16.mxu0 0
        %2971 = vmatpush1.bf16.xpose.msra.mxu0 0
        %2972 = vmatprep.subr.bf16.mxu0 0
        %2973 = vmatpush1.bf16.xpose.msra.mxu0 0
        %2974 = vmatprep.subr.bf16.mxu0 0
        %2975 = vmatpush1.bf16.xpose.msra.mxu0 0
        %2976 = vmatprep.subr.bf16.mxu0 0
        %2977 = vmatpush1.bf16.xpose.msra.mxu0 0
        %2978 = vmatprep.subr.bf16.mxu0 0
        %2979 = vmatpush1.bf16.xpose.msra.mxu0 0
        %2980 = vmatprep.subr.bf16.mxu0 0
        %2981 = vmatpush1.bf16.xpose.msra.mxu0 0
        %2982 = vmatprep.subr.bf16.mxu0 0
        %2983 = vmatpush1.bf16.xpose.msra.mxu0 0
        %2984 = vmatprep.subr.bf16.mxu0 0
        %2985 = vmatpush1.bf16.xpose.msra.mxu0 %v2968
        %2986 = vmatprep.subr.bf16.mxu0 0
        %2987 = vmatpush2.bf16.xpose.msra.mxu0 0
        %2988 = vmatprep.subr.bf16.mxu0 0
        %2989 = vmatpush2.bf16.xpose.msra.mxu0 0
        %2990 = vmatprep.subr.bf16.mxu0 0
        %2991 = vmatpush2.bf16.xpose.msra.mxu0 0
        %2992 = vmatprep.subr.bf16.mxu0 0
        %2993 = vmatpush2.bf16.xpose.msra.mxu0 0
        %2994 = vmatprep.subr.bf16.mxu0 0
        %2995 = vmatpush2.bf16.xpose.msra.mxu0 0
        %2996 = vmatprep.subr.bf16.mxu0 0
        %2997 = vmatpush2.bf16.xpose.msra.mxu0 0
        %2998 = vmatprep.subr.bf16.mxu0 0
        %2999 = vmatpush2.bf16.xpose.msra.mxu0 0
        %3000 = vmatprep.subr.bf16.mxu0 0
        %3001 = vmatpush2.bf16.xpose.msra.mxu0 0
        %3002 = vmatprep.mubr.bf16.mxu0 0
        %3003 = vmatmul.mubr.bf16.gmra.mxu0 %v2965
        %v3004 = vpop.f32.mrf.mxu0
        %v3005 = vadd.f32 0.0, %v3004
        %v3006 = vpop.f32.mrf.mxu0
        %v3007 = vpop.f32.mrf.mxu0
        %v3008 = vpop.f32.mrf.mxu0
        %3009 = vdwg.mxu0
        %v3011 = vsel %vm2687, %v1466, 0
        %v3014 = vsel %vm2687, %v2072, 0
        %3016 = vmatprep.subr.bf16.mxu0 0
        %3017 = vmatpush1.bf16.xpose.msra.mxu0 0
        %3018 = vmatprep.subr.bf16.mxu0 0
        %3019 = vmatpush1.bf16.xpose.msra.mxu0 0
        %3020 = vmatprep.subr.bf16.mxu0 0
        %3021 = vmatpush1.bf16.xpose.msra.mxu0 0
        %3022 = vmatprep.subr.bf16.mxu0 0
        %3023 = vmatpush1.bf16.xpose.msra.mxu0 0
        %3024 = vmatprep.subr.bf16.mxu0 0
        %3025 = vmatpush1.bf16.xpose.msra.mxu0 0
        %3026 = vmatprep.subr.bf16.mxu0 0
        %3027 = vmatpush1.bf16.xpose.msra.mxu0 0
        %3028 = vmatprep.subr.bf16.mxu0 0
        %3029 = vmatpush1.bf16.xpose.msra.mxu0 0
        %3030 = vmatprep.subr.bf16.mxu0 0
        %3031 = vmatpush1.bf16.xpose.msra.mxu0 %v3014
        %3032 = vmatprep.subr.bf16.mxu0 0
        %3033 = vmatpush2.bf16.xpose.msra.mxu0 0
        %3034 = vmatprep.subr.bf16.mxu0 0
        %3035 = vmatpush2.bf16.xpose.msra.mxu0 0
        %3036 = vmatprep.subr.bf16.mxu0 0
        %3037 = vmatpush2.bf16.xpose.msra.mxu0 0
        %3038 = vmatprep.subr.bf16.mxu0 0
        %3039 = vmatpush2.bf16.xpose.msra.mxu0 0
        %3040 = vmatprep.subr.bf16.mxu0 0
        %3041 = vmatpush2.bf16.xpose.msra.mxu0 0
        %3042 = vmatprep.subr.bf16.mxu0 0
        %3043 = vmatpush2.bf16.xpose.msra.mxu0 0
        %3044 = vmatprep.subr.bf16.mxu0 0
        %3045 = vmatpush2.bf16.xpose.msra.mxu0 0
        %3046 = vmatprep.subr.bf16.mxu0 0
        %3047 = vmatpush2.bf16.xpose.msra.mxu0 0
        %3048 = vmatprep.mubr.bf16.mxu0 0
        %3049 = vmatmul.mubr.bf16.gmra.mxu0 %v3011
        %v3050 = vpop.f32.mrf.mxu0
        %v3051 = vadd.f32 0.0, %v3050
        %v3052 = vpop.f32.mrf.mxu0
        %v3053 = vpop.f32.mrf.mxu0
        %v3054 = vpop.f32.mrf.mxu0
        %3055 = vdwg.mxu0
        %v3057 = vsel %vm2687, %v1467, 0
        %v3060 = vsel %vm2687, %v2073, 0
        %3062 = vmatprep.subr.bf16.mxu0 0
        %3063 = vmatpush1.bf16.xpose.msra.mxu0 0
        %3064 = vmatprep.subr.bf16.mxu0 0
        %3065 = vmatpush1.bf16.xpose.msra.mxu0 0
        %3066 = vmatprep.subr.bf16.mxu0 0
        %3067 = vmatpush1.bf16.xpose.msra.mxu0 0
        %3068 = vmatprep.subr.bf16.mxu0 0
        %3069 = vmatpush1.bf16.xpose.msra.mxu0 0
        %3070 = vmatprep.subr.bf16.mxu0 0
        %3071 = vmatpush1.bf16.xpose.msra.mxu0 0
        %3072 = vmatprep.subr.bf16.mxu0 0
        %3073 = vmatpush1.bf16.xpose.msra.mxu0 0
        %3074 = vmatprep.subr.bf16.mxu0 0
        %3075 = vmatpush1.bf16.xpose.msra.mxu0 0
        %3076 = vmatprep.subr.bf16.mxu0 0
        %3077 = vmatpush1.bf16.xpose.msra.mxu0 %v3060
        %3078 = vmatprep.subr.bf16.mxu0 0
        %3079 = vmatpush2.bf16.xpose.msra.mxu0 0
        %3080 = vmatprep.subr.bf16.mxu0 0
        %3081 = vmatpush2.bf16.xpose.msra.mxu0 0
        %3082 = vmatprep.subr.bf16.mxu0 0
        %3083 = vmatpush2.bf16.xpose.msra.mxu0 0
        %3084 = vmatprep.subr.bf16.mxu0 0
        %3085 = vmatpush2.bf16.xpose.msra.mxu0 0
        %3086 = vmatprep.subr.bf16.mxu0 0
        %3087 = vmatpush2.bf16.xpose.msra.mxu0 0
        %3088 = vmatprep.subr.bf16.mxu0 0
        %3089 = vmatpush2.bf16.xpose.msra.mxu0 0
        %3090 = vmatprep.subr.bf16.mxu0 0
        %3091 = vmatpush2.bf16.xpose.msra.mxu0 0
        %3092 = vmatprep.subr.bf16.mxu0 0
        %3093 = vmatpush2.bf16.xpose.msra.mxu0 0
        %3094 = vmatprep.mubr.bf16.mxu0 0
        %3095 = vmatmul.mubr.bf16.gmra.mxu0 %v3057
        %v3096 = vpop.f32.mrf.mxu0
        %v3097 = vadd.f32 0.0, %v3096
        %v3098 = vpop.f32.mrf.mxu0
        %v3099 = vpop.f32.mrf.mxu0
        %v3100 = vpop.f32.mrf.mxu0
        %3101 = vdwg.mxu0
        %v3103 = vsel %vm2687, %v1468, 0
        %v3106 = vsel %vm2687, %v2074, 0
        %3108 = vmatprep.subr.bf16.mxu0 0
        %3109 = vmatpush1.bf16.xpose.msra.mxu0 0
        %3110 = vmatprep.subr.bf16.mxu0 0
        %3111 = vmatpush1.bf16.xpose.msra.mxu0 0
        %3112 = vmatprep.subr.bf16.mxu0 0
        %3113 = vmatpush1.bf16.xpose.msra.mxu0 0
        %3114 = vmatprep.subr.bf16.mxu0 0
        %3115 = vmatpush1.bf16.xpose.msra.mxu0 0
        %3116 = vmatprep.subr.bf16.mxu0 0
        %3117 = vmatpush1.bf16.xpose.msra.mxu0 0
        %3118 = vmatprep.subr.bf16.mxu0 0
        %3119 = vmatpush1.bf16.xpose.msra.mxu0 0
        %3120 = vmatprep.subr.bf16.mxu0 0
        %3121 = vmatpush1.bf16.xpose.msra.mxu0 0
        %3122 = vmatprep.subr.bf16.mxu0 0
        %3123 = vmatpush1.bf16.xpose.msra.mxu0 %v3106
        %3124 = vmatprep.subr.bf16.mxu0 0
        %3125 = vmatpush2.bf16.xpose.msra.mxu0 0
        %3126 = vmatprep.subr.bf16.mxu0 0
        %3127 = vmatpush2.bf16.xpose.msra.mxu0 0
        %3128 = vmatprep.subr.bf16.mxu0 0
        %3129 = vmatpush2.bf16.xpose.msra.mxu0 0
        %3130 = vmatprep.subr.bf16.mxu0 0
        %3131 = vmatpush2.bf16.xpose.msra.mxu0 0
        %3132 = vmatprep.subr.bf16.mxu0 0
        %3133 = vmatpush2.bf16.xpose.msra.mxu0 0
        %3134 = vmatprep.subr.bf16.mxu0 0
        %3135 = vmatpush2.bf16.xpose.msra.mxu0 0
        %3136 = vmatprep.subr.bf16.mxu0 0
        %3137 = vmatpush2.bf16.xpose.msra.mxu0 0
        %3138 = vmatprep.subr.bf16.mxu0 0
        %3139 = vmatpush2.bf16.xpose.msra.mxu0 0
        %3140 = vmatprep.mubr.bf16.mxu0 0
        %3141 = vmatmul.mubr.bf16.gmra.mxu0 %v3103
        %v3142 = vpop.f32.mrf.mxu0
        %v3143 = vadd.f32 0.0, %v3142
        %v3144 = vpop.f32.mrf.mxu0
        %v3145 = vpop.f32.mrf.mxu0
        %v3146 = vpop.f32.mrf.mxu0
        %3147 = vdwg.mxu0
        %v3149 = vsel %vm2687, %v1469, 0
        %v3152 = vsel %vm2687, %v2075, 0
        %3154 = vmatprep.subr.bf16.mxu0 0
        %3155 = vmatpush1.bf16.xpose.msra.mxu0 0
        %3156 = vmatprep.subr.bf16.mxu0 0
        %3157 = vmatpush1.bf16.xpose.msra.mxu0 0
        %3158 = vmatprep.subr.bf16.mxu0 0
        %3159 = vmatpush1.bf16.xpose.msra.mxu0 0
        %3160 = vmatprep.subr.bf16.mxu0 0
        %3161 = vmatpush1.bf16.xpose.msra.mxu0 0
        %3162 = vmatprep.subr.bf16.mxu0 0
        %3163 = vmatpush1.bf16.xpose.msra.mxu0 0
        %3164 = vmatprep.subr.bf16.mxu0 0
        %3165 = vmatpush1.bf16.xpose.msra.mxu0 0
        %3166 = vmatprep.subr.bf16.mxu0 0
        %3167 = vmatpush1.bf16.xpose.msra.mxu0 0
        %3168 = vmatprep.subr.bf16.mxu0 0
        %3169 = vmatpush1.bf16.xpose.msra.mxu0 %v3152
        %3170 = vmatprep.subr.bf16.mxu0 0
        %3171 = vmatpush2.bf16.xpose.msra.mxu0 0
        %3172 = vmatprep.subr.bf16.mxu0 0
        %3173 = vmatpush2.bf16.xpose.msra.mxu0 0
        %3174 = vmatprep.subr.bf16.mxu0 0
        %3175 = vmatpush2.bf16.xpose.msra.mxu0 0
        %3176 = vmatprep.subr.bf16.mxu0 0
        %3177 = vmatpush2.bf16.xpose.msra.mxu0 0
        %3178 = vmatprep.subr.bf16.mxu0 0
        %3179 = vmatpush2.bf16.xpose.msra.mxu0 0
        %3180 = vmatprep.subr.bf16.mxu0 0
        %3181 = vmatpush2.bf16.xpose.msra.mxu0 0
        %3182 = vmatprep.subr.bf16.mxu0 0
        %3183 = vmatpush2.bf16.xpose.msra.mxu0 0
        %3184 = vmatprep.subr.bf16.mxu0 0
        %3185 = vmatpush2.bf16.xpose.msra.mxu0 0
        %3186 = vmatprep.mubr.bf16.mxu0 0
        %3187 = vmatmul.mubr.bf16.gmra.mxu0 %v3149
        %v3188 = vpop.f32.mrf.mxu0
        %v3189 = vadd.f32 0.0, %v3188
        %v3190 = vpop.f32.mrf.mxu0
        %v3191 = vpop.f32.mrf.mxu0
        %v3192 = vpop.f32.mrf.mxu0
        %3193 = vdwg.mxu0
        %v3195 = vsel %vm2687, %v1470, 0
        %v3198 = vsel %vm2687, %v2076, 0
        %3200 = vmatprep.subr.bf16.mxu0 0
        %3201 = vmatpush1.bf16.xpose.msra.mxu0 0
        %3202 = vmatprep.subr.bf16.mxu0 0
        %3203 = vmatpush1.bf16.xpose.msra.mxu0 0
        %3204 = vmatprep.subr.bf16.mxu0 0
        %3205 = vmatpush1.bf16.xpose.msra.mxu0 0
        %3206 = vmatprep.subr.bf16.mxu0 0
        %3207 = vmatpush1.bf16.xpose.msra.mxu0 0
        %3208 = vmatprep.subr.bf16.mxu0 0
        %3209 = vmatpush1.bf16.xpose.msra.mxu0 0
        %3210 = vmatprep.subr.bf16.mxu0 0
        %3211 = vmatpush1.bf16.xpose.msra.mxu0 0
        %3212 = vmatprep.subr.bf16.mxu0 0
        %3213 = vmatpush1.bf16.xpose.msra.mxu0 0
        %3214 = vmatprep.subr.bf16.mxu0 0
        %3215 = vmatpush1.bf16.xpose.msra.mxu0 %v3198
        %3216 = vmatprep.subr.bf16.mxu0 0
        %3217 = vmatpush2.bf16.xpose.msra.mxu0 0
        %3218 = vmatprep.subr.bf16.mxu0 0
        %3219 = vmatpush2.bf16.xpose.msra.mxu0 0
        %3220 = vmatprep.subr.bf16.mxu0 0
        %3221 = vmatpush2.bf16.xpose.msra.mxu0 0
        %3222 = vmatprep.subr.bf16.mxu0 0
        %3223 = vmatpush2.bf16.xpose.msra.mxu0 0
        %3224 = vmatprep.subr.bf16.mxu0 0
        %3225 = vmatpush2.bf16.xpose.msra.mxu0 0
        %3226 = vmatprep.subr.bf16.mxu0 0
        %3227 = vmatpush2.bf16.xpose.msra.mxu0 0
        %3228 = vmatprep.subr.bf16.mxu0 0
        %3229 = vmatpush2.bf16.xpose.msra.mxu0 0
        %3230 = vmatprep.subr.bf16.mxu0 0
        %3231 = vmatpush2.bf16.xpose.msra.mxu0 0
        %3232 = vmatprep.mubr.bf16.mxu0 0
        %3233 = vmatmul.mubr.bf16.gmra.mxu0 %v3195
        %v3234 = vpop.f32.mrf.mxu0
        %v3235 = vadd.f32 0.0, %v3234
        %v3236 = vpop.f32.mrf.mxu0
        %v3237 = vpop.f32.mrf.mxu0
        %v3238 = vpop.f32.mrf.mxu0
        %3239 = vdwg.mxu0
        %v3241 = vsel %vm2687, %v1471, 0
        %v3244 = vsel %vm2687, %v2077, 0
        %3246 = vmatprep.subr.bf16.mxu0 0
        %3247 = vmatpush1.bf16.xpose.msra.mxu0 0
        %3248 = vmatprep.subr.bf16.mxu0 0
        %3249 = vmatpush1.bf16.xpose.msra.mxu0 0
        %3250 = vmatprep.subr.bf16.mxu0 0
        %3251 = vmatpush1.bf16.xpose.msra.mxu0 0
        %3252 = vmatprep.subr.bf16.mxu0 0
        %3253 = vmatpush1.bf16.xpose.msra.mxu0 0
        %3254 = vmatprep.subr.bf16.mxu0 0
        %3255 = vmatpush1.bf16.xpose.msra.mxu0 0
        %3256 = vmatprep.subr.bf16.mxu0 0
        %3257 = vmatpush1.bf16.xpose.msra.mxu0 0
        %3258 = vmatprep.subr.bf16.mxu0 0
        %3259 = vmatpush1.bf16.xpose.msra.mxu0 0
        %3260 = vmatprep.subr.bf16.mxu0 0
        %3261 = vmatpush1.bf16.xpose.msra.mxu0 %v3244
        %3262 = vmatprep.subr.bf16.mxu0 0
        %3263 = vmatpush2.bf16.xpose.msra.mxu0 0
        %3264 = vmatprep.subr.bf16.mxu0 0
        %3265 = vmatpush2.bf16.xpose.msra.mxu0 0
        %3266 = vmatprep.subr.bf16.mxu0 0
        %3267 = vmatpush2.bf16.xpose.msra.mxu0 0
        %3268 = vmatprep.subr.bf16.mxu0 0
        %3269 = vmatpush2.bf16.xpose.msra.mxu0 0
        %3270 = vmatprep.subr.bf16.mxu0 0
        %3271 = vmatpush2.bf16.xpose.msra.mxu0 0
        %3272 = vmatprep.subr.bf16.mxu0 0
        %3273 = vmatpush2.bf16.xpose.msra.mxu0 0
        %3274 = vmatprep.subr.bf16.mxu0 0
        %3275 = vmatpush2.bf16.xpose.msra.mxu0 0
        %3276 = vmatprep.subr.bf16.mxu0 0
        %3277 = vmatpush2.bf16.xpose.msra.mxu0 0
        %3278 = vmatprep.mubr.bf16.mxu0 0
        %3279 = vmatmul.mubr.bf16.gmra.mxu0 %v3241
        %v3280 = vpop.f32.mrf.mxu0
        %v3281 = vadd.f32 0.0, %v3280
        %v3282 = vpop.f32.mrf.mxu0
        %v3283 = vpop.f32.mrf.mxu0
        %v3284 = vpop.f32.mrf.mxu0
        %3285 = vdwg.mxu0
        %v3287 = vsel %vm2687, %v1472, 0
        %v3290 = vsel %vm2687, %v2078, 0
        %3292 = vmatprep.subr.bf16.mxu0 0
        %3293 = vmatpush1.bf16.xpose.msra.mxu0 0
        %3294 = vmatprep.subr.bf16.mxu0 0
        %3295 = vmatpush1.bf16.xpose.msra.mxu0 0
        %3296 = vmatprep.subr.bf16.mxu0 0
        %3297 = vmatpush1.bf16.xpose.msra.mxu0 0
        %3298 = vmatprep.subr.bf16.mxu0 0
        %3299 = vmatpush1.bf16.xpose.msra.mxu0 0
        %3300 = vmatprep.subr.bf16.mxu0 0
        %3301 = vmatpush1.bf16.xpose.msra.mxu0 0
        %3302 = vmatprep.subr.bf16.mxu0 0
        %3303 = vmatpush1.bf16.xpose.msra.mxu0 0
        %3304 = vmatprep.subr.bf16.mxu0 0
        %3305 = vmatpush1.bf16.xpose.msra.mxu0 0
        %3306 = vmatprep.subr.bf16.mxu0 0
        %3307 = vmatpush1.bf16.xpose.msra.mxu0 %v3290
        %3308 = vmatprep.subr.bf16.mxu0 0
        %3309 = vmatpush2.bf16.xpose.msra.mxu0 0
        %3310 = vmatprep.subr.bf16.mxu0 0
        %3311 = vmatpush2.bf16.xpose.msra.mxu0 0
        %3312 = vmatprep.subr.bf16.mxu0 0
        %3313 = vmatpush2.bf16.xpose.msra.mxu0 0
        %3314 = vmatprep.subr.bf16.mxu0 0
        %3315 = vmatpush2.bf16.xpose.msra.mxu0 0
        %3316 = vmatprep.subr.bf16.mxu0 0
        %3317 = vmatpush2.bf16.xpose.msra.mxu0 0
        %3318 = vmatprep.subr.bf16.mxu0 0
        %3319 = vmatpush2.bf16.xpose.msra.mxu0 0
        %3320 = vmatprep.subr.bf16.mxu0 0
        %3321 = vmatpush2.bf16.xpose.msra.mxu0 0
        %3322 = vmatprep.subr.bf16.mxu0 0
        %3323 = vmatpush2.bf16.xpose.msra.mxu0 0
        %3324 = vmatprep.mubr.bf16.mxu0 0
        %3325 = vmatmul.mubr.bf16.gmra.mxu0 %v3287
        %v3326 = vpop.f32.mrf.mxu0
        %v3327 = vadd.f32 0.0, %v3326
        %v3328 = vpop.f32.mrf.mxu0
        %v3329 = vpop.f32.mrf.mxu0
        %v3330 = vpop.f32.mrf.mxu0
        %3331 = vdwg.mxu0
        %v3333 = vsel %vm2687, %v1473, 0
        %v3336 = vsel %vm2687, %v2079, 0
        %3338 = vmatprep.subr.bf16.mxu0 0
        %3339 = vmatpush1.bf16.xpose.msra.mxu0 0
        %3340 = vmatprep.subr.bf16.mxu0 0
        %3341 = vmatpush1.bf16.xpose.msra.mxu0 0
        %3342 = vmatprep.subr.bf16.mxu0 0
        %3343 = vmatpush1.bf16.xpose.msra.mxu0 0
        %3344 = vmatprep.subr.bf16.mxu0 0
        %3345 = vmatpush1.bf16.xpose.msra.mxu0 0
        %3346 = vmatprep.subr.bf16.mxu0 0
        %3347 = vmatpush1.bf16.xpose.msra.mxu0 0
        %3348 = vmatprep.subr.bf16.mxu0 0
        %3349 = vmatpush1.bf16.xpose.msra.mxu0 0
        %3350 = vmatprep.subr.bf16.mxu0 0
        %3351 = vmatpush1.bf16.xpose.msra.mxu0 0
        %3352 = vmatprep.subr.bf16.mxu0 0
        %3353 = vmatpush1.bf16.xpose.msra.mxu0 %v3336
        %3354 = vmatprep.subr.bf16.mxu0 0
        %3355 = vmatpush2.bf16.xpose.msra.mxu0 0
        %3356 = vmatprep.subr.bf16.mxu0 0
        %3357 = vmatpush2.bf16.xpose.msra.mxu0 0
        %3358 = vmatprep.subr.bf16.mxu0 0
        %3359 = vmatpush2.bf16.xpose.msra.mxu0 0
        %3360 = vmatprep.subr.bf16.mxu0 0
        %3361 = vmatpush2.bf16.xpose.msra.mxu0 0
        %3362 = vmatprep.subr.bf16.mxu0 0
        %3363 = vmatpush2.bf16.xpose.msra.mxu0 0
        %3364 = vmatprep.subr.bf16.mxu0 0
        %3365 = vmatpush2.bf16.xpose.msra.mxu0 0
        %3366 = vmatprep.subr.bf16.mxu0 0
        %3367 = vmatpush2.bf16.xpose.msra.mxu0 0
        %3368 = vmatprep.subr.bf16.mxu0 0
        %3369 = vmatpush2.bf16.xpose.msra.mxu0 0
        %3370 = vmatprep.mubr.bf16.mxu0 0
        %3371 = vmatmul.mubr.bf16.gmra.mxu0 %v3333
        %v3372 = vpop.f32.mrf.mxu0
        %v3373 = vadd.f32 0.0, %v3372
        %v3374 = vpop.f32.mrf.mxu0
        %v3375 = vpop.f32.mrf.mxu0
        %v3376 = vpop.f32.mrf.mxu0
        %3377 = vdwg.mxu0
        %v3379 = vsel %vm2687, %v1474, 0
        %v3382 = vsel %vm2687, %v2080, 0
        %3384 = vmatprep.subr.bf16.mxu0 0
        %3385 = vmatpush1.bf16.xpose.msra.mxu0 0
        %3386 = vmatprep.subr.bf16.mxu0 0
        %3387 = vmatpush1.bf16.xpose.msra.mxu0 0
        %3388 = vmatprep.subr.bf16.mxu0 0
        %3389 = vmatpush1.bf16.xpose.msra.mxu0 0
        %3390 = vmatprep.subr.bf16.mxu0 0
        %3391 = vmatpush1.bf16.xpose.msra.mxu0 0
        %3392 = vmatprep.subr.bf16.mxu0 0
        %3393 = vmatpush1.bf16.xpose.msra.mxu0 0
        %3394 = vmatprep.subr.bf16.mxu0 0
        %3395 = vmatpush1.bf16.xpose.msra.mxu0 0
        %3396 = vmatprep.subr.bf16.mxu0 0
        %3397 = vmatpush1.bf16.xpose.msra.mxu0 0
        %3398 = vmatprep.subr.bf16.mxu0 0
        %3399 = vmatpush1.bf16.xpose.msra.mxu0 %v3382
        %3400 = vmatprep.subr.bf16.mxu0 0
        %3401 = vmatpush2.bf16.xpose.msra.mxu0 0
        %3402 = vmatprep.subr.bf16.mxu0 0
        %3403 = vmatpush2.bf16.xpose.msra.mxu0 0
        %3404 = vmatprep.subr.bf16.mxu0 0
        %3405 = vmatpush2.bf16.xpose.msra.mxu0 0
        %3406 = vmatprep.subr.bf16.mxu0 0
        %3407 = vmatpush2.bf16.xpose.msra.mxu0 0
        %3408 = vmatprep.subr.bf16.mxu0 0
        %3409 = vmatpush2.bf16.xpose.msra.mxu0 0
        %3410 = vmatprep.subr.bf16.mxu0 0
        %3411 = vmatpush2.bf16.xpose.msra.mxu0 0
        %3412 = vmatprep.subr.bf16.mxu0 0
        %3413 = vmatpush2.bf16.xpose.msra.mxu0 0
        %3414 = vmatprep.subr.bf16.mxu0 0
        %3415 = vmatpush2.bf16.xpose.msra.mxu0 0
        %3416 = vmatprep.mubr.bf16.mxu0 0
        %3417 = vmatmul.mubr.bf16.gmra.mxu0 %v3379
        %v3418 = vpop.f32.mrf.mxu0
        %v3419 = vadd.f32 0.0, %v3418
        %v3420 = vpop.f32.mrf.mxu0
        %v3421 = vpop.f32.mrf.mxu0
        %v3422 = vpop.f32.mrf.mxu0
        %3423 = vdwg.mxu0
        %v3424 = vsel %vm2687, %v2729, -inf
        %3425 = vmax.xlane.f32.xlu0 %v3424
        %v3426 = vpop.xlane.xlu0 %3425
        %v3427 = vsel %vm2687, %v2775, -inf
        %3428 = vmax.xlane.f32.xlu0 %v3427
        %v3429 = vpop.xlane.xlu0 %3428
        %v3430 = vsel %vm2687, %v2821, -inf
        %3431 = vmax.xlane.f32.xlu0 %v3430
        %v3432 = vpop.xlane.xlu0 %3431
        %v3433 = vsel %vm2687, %v2867, -inf
        %3434 = vmax.xlane.f32.xlu0 %v3433
        %v3435 = vpop.xlane.xlu0 %3434
        %v3436 = vsel %vm2687, %v2913, -inf
        %3437 = vmax.xlane.f32.xlu0 %v3436
        %v3438 = vpop.xlane.xlu0 %3437
        %v3439 = vsel %vm2687, %v2959, -inf
        %3440 = vmax.xlane.f32.xlu0 %v3439
        %v3441 = vpop.xlane.xlu0 %3440
        %v3442 = vsel %vm2687, %v3005, -inf
        %3443 = vmax.xlane.f32.xlu0 %v3442
        %v3444 = vpop.xlane.xlu0 %3443
        %v3445 = vsel %vm2687, %v3051, -inf
        %3446 = vmax.xlane.f32.xlu0 %v3445
        %v3447 = vpop.xlane.xlu0 %3446
        %v3448 = vsel %vm2687, %v3097, -inf
        %3449 = vmax.xlane.f32.xlu0 %v3448
        %v3450 = vpop.xlane.xlu0 %3449
        %v3451 = vsel %vm2687, %v3143, -inf
        %3452 = vmax.xlane.f32.xlu0 %v3451
        %v3453 = vpop.xlane.xlu0 %3452
        %v3454 = vsel %vm2687, %v3189, -inf
        %3455 = vmax.xlane.f32.xlu0 %v3454
        %v3456 = vpop.xlane.xlu0 %3455
        %v3457 = vsel %vm2687, %v3235, -inf
        %3458 = vmax.xlane.f32.xlu0 %v3457
        %v3459 = vpop.xlane.xlu0 %3458
        %v3460 = vsel %vm2687, %v3281, -inf
        %3461 = vmax.xlane.f32.xlu0 %v3460
        %v3462 = vpop.xlane.xlu0 %3461
        %v3463 = vsel %vm2687, %v3327, -inf
        %3464 = vmax.xlane.f32.xlu0 %v3463
        %v3465 = vpop.xlane.xlu0 %3464
        %v3466 = vsel %vm2687, %v3373, -inf
        %3467 = vmax.xlane.f32.xlu0 %v3466
        %v3468 = vpop.xlane.xlu0 %3467
        %v3469 = vsel %vm2687, %v3419, -inf
        %3470 = vmax.xlane.f32.xlu0 %v3469
        %v3471 = vpop.xlane.xlu0 %3470
        %v3472 = vsub.f32 %v2729, %v3426
        %v3473 = vsub.f32 %v2775, %v3429
        %v3474 = vsub.f32 %v2821, %v3432
        %v3475 = vsub.f32 %v2867, %v3435
        %v3476 = vsub.f32 %v2913, %v3438
        %v3477 = vsub.f32 %v2959, %v3441
        %v3478 = vsub.f32 %v3005, %v3444
        %v3479 = vsub.f32 %v3051, %v3447
        %v3480 = vsub.f32 %v3097, %v3450
        %v3481 = vsub.f32 %v3143, %v3453
        %v3482 = vsub.f32 %v3189, %v3456
        %v3483 = vsub.f32 %v3235, %v3459
        %v3484 = vsub.f32 %v3281, %v3462
        %v3485 = vsub.f32 %v3327, %v3465
        %v3486 = vsub.f32 %v3373, %v3468
        %v3487 = vsub.f32 %v3419, %v3471
        %v3488 = vmul.f32 %v3472, 1.442695
        %v3489 = vpow.pop %v3488
        %v3490 = vmul.f32 %v3473, 1.442695
        %v3491 = vpow.pop %v3490
        %v3492 = vmul.f32 %v3474, 1.442695
        %v3493 = vpow.pop %v3492
        %v3494 = vmul.f32 %v3475, 1.442695
        %v3495 = vpow.pop %v3494
        %v3496 = vmul.f32 %v3476, 1.442695
        %v3497 = vpow.pop %v3496
        %v3498 = vmul.f32 %v3477, 1.442695
        %v3499 = vpow.pop %v3498
        %v3500 = vmul.f32 %v3478, 1.442695
        %v3501 = vpow.pop %v3500
        %v3502 = vmul.f32 %v3479, 1.442695
        %v3503 = vpow.pop %v3502
        %v3504 = vmul.f32 %v3480, 1.442695
        %v3505 = vpow.pop %v3504
        %v3506 = vmul.f32 %v3481, 1.442695
        %v3507 = vpow.pop %v3506
        %v3508 = vmul.f32 %v3482, 1.442695
        %v3509 = vpow.pop %v3508
        %v3510 = vmul.f32 %v3483, 1.442695
        %v3511 = vpow.pop %v3510
        %v3512 = vmul.f32 %v3484, 1.442695
        %v3513 = vpow.pop %v3512
        %v3514 = vmul.f32 %v3485, 1.442695
        %v3515 = vpow.pop %v3514
        %v3516 = vmul.f32 %v3486, 1.442695
        %v3517 = vpow.pop %v3516
        %v3518 = vmul.f32 %v3487, 1.442695
        %v3519 = vpow.pop %v3518
        %v3520 = vsel %vm2687, %v3489, 0.0
        %3521 = vadd.xlane.f32.xlu0 %v3520
        %v3522 = vpop.xlane.xlu0 %3521
        %v3523 = vsel %vm2687, %v3491, 0.0
        %3524 = vadd.xlane.f32.xlu0 %v3523
        %v3525 = vpop.xlane.xlu0 %3524
        %v3526 = vsel %vm2687, %v3493, 0.0
        %3527 = vadd.xlane.f32.xlu0 %v3526
        %v3528 = vpop.xlane.xlu0 %3527
        %v3529 = vsel %vm2687, %v3495, 0.0
        %3530 = vadd.xlane.f32.xlu0 %v3529
        %v3531 = vpop.xlane.xlu0 %3530
        %v3532 = vsel %vm2687, %v3497, 0.0
        %3533 = vadd.xlane.f32.xlu0 %v3532
        %v3534 = vpop.xlane.xlu0 %3533
        %v3535 = vsel %vm2687, %v3499, 0.0
        %3536 = vadd.xlane.f32.xlu0 %v3535
        %v3537 = vpop.xlane.xlu0 %3536
        %v3538 = vsel %vm2687, %v3501, 0.0
        %3539 = vadd.xlane.f32.xlu0 %v3538
        %v3540 = vpop.xlane.xlu0 %3539
        %v3541 = vsel %vm2687, %v3503, 0.0
        %3542 = vadd.xlane.f32.xlu0 %v3541
        %v3543 = vpop.xlane.xlu0 %3542
        %v3544 = vsel %vm2687, %v3505, 0.0
        %3545 = vadd.xlane.f32.xlu0 %v3544
        %v3546 = vpop.xlane.xlu0 %3545
        %v3547 = vsel %vm2687, %v3507, 0.0
        %3548 = vadd.xlane.f32.xlu0 %v3547
        %v3549 = vpop.xlane.xlu0 %3548
        %v3550 = vsel %vm2687, %v3509, 0.0
        %3551 = vadd.xlane.f32.xlu0 %v3550
        %v3552 = vpop.xlane.xlu0 %3551
        %v3553 = vsel %vm2687, %v3511, 0.0
        %3554 = vadd.xlane.f32.xlu0 %v3553
        %v3555 = vpop.xlane.xlu0 %3554
        %v3556 = vsel %vm2687, %v3513, 0.0
        %3557 = vadd.xlane.f32.xlu0 %v3556
        %v3558 = vpop.xlane.xlu0 %3557
        %v3559 = vsel %vm2687, %v3515, 0.0
        %3560 = vadd.xlane.f32.xlu0 %v3559
        %v3561 = vpop.xlane.xlu0 %3560
        %v3562 = vsel %vm2687, %v3517, 0.0
        %3563 = vadd.xlane.f32.xlu0 %v3562
        %v3564 = vpop.xlane.xlu0 %3563
        %v3565 = vsel %vm2687, %v3519, 0.0
        %3566 = vadd.xlane.f32.xlu0 %v3565
        %v3567 = vpop.xlane.xlu0 %3566
        %v3568 = vpack.c.bf16 %v3489, %v3489
        %v3569 = vpack.c.bf16 %v3491, %v3491
        %v3570 = vpack.c.bf16 %v3493, %v3493
        %v3571 = vpack.c.bf16 %v3495, %v3495
        %v3572 = vpack.c.bf16 %v3497, %v3497
        %v3573 = vpack.c.bf16 %v3499, %v3499
        %v3574 = vpack.c.bf16 %v3501, %v3501
        %v3575 = vpack.c.bf16 %v3503, %v3503
        %v3576 = vpack.c.bf16 %v3505, %v3505
        %v3577 = vpack.c.bf16 %v3507, %v3507
        %v3578 = vpack.c.bf16 %v3509, %v3509
        %v3579 = vpack.c.bf16 %v3511, %v3511
        %v3580 = vpack.c.bf16 %v3513, %v3513
        %v3581 = vpack.c.bf16 %v3515, %v3515
        %v3582 = vpack.c.bf16 %v3517, %v3517
        %v3583 = vpack.c.bf16 %v3519, %v3519
        %v3585 = vsel %vm2687, %v3568, 0
        %vm3587 = vcmask 1043456
        %v3589 = vsel %vm3587, %v2671, 0
        %3591 = vmatprep.subr.bf16.mxu0 0
        %3592 = vmatpush1.bf16.msra.mxu0 0
        %3593 = vmatprep.subr.bf16.mxu0 0
        %3594 = vmatpush1.bf16.msra.mxu0 0
        %3595 = vmatprep.subr.bf16.mxu0 0
        %3596 = vmatpush1.bf16.msra.mxu0 0
        %3597 = vmatprep.subr.bf16.mxu0 0
        %3598 = vmatpush1.bf16.msra.mxu0 0
        %3599 = vmatprep.subr.bf16.mxu0 0
        %3600 = vmatpush1.bf16.msra.mxu0 0
        %3601 = vmatprep.subr.bf16.mxu0 0
        %3602 = vmatpush1.bf16.msra.mxu0 0
        %3603 = vmatprep.subr.bf16.mxu0 0
        %3604 = vmatpush1.bf16.msra.mxu0 0
        %3605 = vmatprep.subr.bf16.mxu0 0
        %3606 = vmatpush1.bf16.msra.mxu0 %v3589
        %3607 = vmatprep.subr.bf16.mxu0 0
        %3608 = vmatpush2.bf16.msra.mxu0 0
        %3609 = vmatprep.subr.bf16.mxu0 0
        %3610 = vmatpush2.bf16.msra.mxu0 0
        %3611 = vmatprep.subr.bf16.mxu0 0
        %3612 = vmatpush2.bf16.msra.mxu0 0
        %3613 = vmatprep.subr.bf16.mxu0 0
        %3614 = vmatpush2.bf16.msra.mxu0 0
        %3615 = vmatprep.subr.bf16.mxu0 0
        %3616 = vmatpush2.bf16.msra.mxu0 0
        %3617 = vmatprep.subr.bf16.mxu0 0
        %3618 = vmatpush2.bf16.msra.mxu0 0
        %3619 = vmatprep.subr.bf16.mxu0 0
        %3620 = vmatpush2.bf16.msra.mxu0 0
        %3621 = vmatprep.subr.bf16.mxu0 0
        %3622 = vmatpush2.bf16.msra.mxu0 0
        %3623 = vmatprep.mubr.bf16.mxu0 0
        %3624 = vmatmul.mubr.bf16.gmra.mxu0 %v3585
        %v3625 = vpop.f32.mrf.mxu0
        %v3626 = vadd.f32 0.0, %v3625
        %v3627 = vpop.f32.mrf.mxu0
        %v3628 = vpop.f32.mrf.mxu0
        %v3629 = vpop.f32.mrf.mxu0
        %3630 = vdwg.mxu0
        %v3632 = vsel %vm2687, %v3569, 0
        %v3635 = vsel %vm3587, %v2672, 0
        %3637 = vmatprep.subr.bf16.mxu0 0
        %3638 = vmatpush1.bf16.msra.mxu0 0
        %3639 = vmatprep.subr.bf16.mxu0 0
        %3640 = vmatpush1.bf16.msra.mxu0 0
        %3641 = vmatprep.subr.bf16.mxu0 0
        %3642 = vmatpush1.bf16.msra.mxu0 0
        %3643 = vmatprep.subr.bf16.mxu0 0
        %3644 = vmatpush1.bf16.msra.mxu0 0
        %3645 = vmatprep.subr.bf16.mxu0 0
        %3646 = vmatpush1.bf16.msra.mxu0 0
        %3647 = vmatprep.subr.bf16.mxu0 0
        %3648 = vmatpush1.bf16.msra.mxu0 0
        %3649 = vmatprep.subr.bf16.mxu0 0
        %3650 = vmatpush1.bf16.msra.mxu0 0
        %3651 = vmatprep.subr.bf16.mxu0 0
        %3652 = vmatpush1.bf16.msra.mxu0 %v3635
        %3653 = vmatprep.subr.bf16.mxu0 0
        %3654 = vmatpush2.bf16.msra.mxu0 0
        %3655 = vmatprep.subr.bf16.mxu0 0
        %3656 = vmatpush2.bf16.msra.mxu0 0
        %3657 = vmatprep.subr.bf16.mxu0 0
        %3658 = vmatpush2.bf16.msra.mxu0 0
        %3659 = vmatprep.subr.bf16.mxu0 0
        %3660 = vmatpush2.bf16.msra.mxu0 0
        %3661 = vmatprep.subr.bf16.mxu0 0
        %3662 = vmatpush2.bf16.msra.mxu0 0
        %3663 = vmatprep.subr.bf16.mxu0 0
        %3664 = vmatpush2.bf16.msra.mxu0 0
        %3665 = vmatprep.subr.bf16.mxu0 0
        %3666 = vmatpush2.bf16.msra.mxu0 0
        %3667 = vmatprep.subr.bf16.mxu0 0
        %3668 = vmatpush2.bf16.msra.mxu0 0
        %3669 = vmatprep.mubr.bf16.mxu0 0
        %3670 = vmatmul.mubr.bf16.gmra.mxu0 %v3632
        %v3671 = vpop.f32.mrf.mxu0
        %v3672 = vadd.f32 0.0, %v3671
        %v3673 = vpop.f32.mrf.mxu0
        %v3674 = vpop.f32.mrf.mxu0
        %v3675 = vpop.f32.mrf.mxu0
        %3676 = vdwg.mxu0
        %v3678 = vsel %vm2687, %v3570, 0
        %v3681 = vsel %vm3587, %v2673, 0
        %3683 = vmatprep.subr.bf16.mxu0 0
        %3684 = vmatpush1.bf16.msra.mxu0 0
        %3685 = vmatprep.subr.bf16.mxu0 0
        %3686 = vmatpush1.bf16.msra.mxu0 0
        %3687 = vmatprep.subr.bf16.mxu0 0
        %3688 = vmatpush1.bf16.msra.mxu0 0
        %3689 = vmatprep.subr.bf16.mxu0 0
        %3690 = vmatpush1.bf16.msra.mxu0 0
        %3691 = vmatprep.subr.bf16.mxu0 0
        %3692 = vmatpush1.bf16.msra.mxu0 0
        %3693 = vmatprep.subr.bf16.mxu0 0
        %3694 = vmatpush1.bf16.msra.mxu0 0
        %3695 = vmatprep.subr.bf16.mxu0 0
        %3696 = vmatpush1.bf16.msra.mxu0 0
        %3697 = vmatprep.subr.bf16.mxu0 0
        %3698 = vmatpush1.bf16.msra.mxu0 %v3681
        %3699 = vmatprep.subr.bf16.mxu0 0
        %3700 = vmatpush2.bf16.msra.mxu0 0
        %3701 = vmatprep.subr.bf16.mxu0 0
        %3702 = vmatpush2.bf16.msra.mxu0 0
        %3703 = vmatprep.subr.bf16.mxu0 0
        %3704 = vmatpush2.bf16.msra.mxu0 0
        %3705 = vmatprep.subr.bf16.mxu0 0
        %3706 = vmatpush2.bf16.msra.mxu0 0
        %3707 = vmatprep.subr.bf16.mxu0 0
        %3708 = vmatpush2.bf16.msra.mxu0 0
        %3709 = vmatprep.subr.bf16.mxu0 0
        %3710 = vmatpush2.bf16.msra.mxu0 0
        %3711 = vmatprep.subr.bf16.mxu0 0
        %3712 = vmatpush2.bf16.msra.mxu0 0
        %3713 = vmatprep.subr.bf16.mxu0 0
        %3714 = vmatpush2.bf16.msra.mxu0 0
        %3715 = vmatprep.mubr.bf16.mxu0 0
        %3716 = vmatmul.mubr.bf16.gmra.mxu0 %v3678
        %v3717 = vpop.f32.mrf.mxu0
        %v3718 = vadd.f32 0.0, %v3717
        %v3719 = vpop.f32.mrf.mxu0
        %v3720 = vpop.f32.mrf.mxu0
        %v3721 = vpop.f32.mrf.mxu0
        %3722 = vdwg.mxu0
        %v3724 = vsel %vm2687, %v3571, 0
        %v3727 = vsel %vm3587, %v2674, 0
        %3729 = vmatprep.subr.bf16.mxu0 0
        %3730 = vmatpush1.bf16.msra.mxu0 0
        %3731 = vmatprep.subr.bf16.mxu0 0
        %3732 = vmatpush1.bf16.msra.mxu0 0
        %3733 = vmatprep.subr.bf16.mxu0 0
        %3734 = vmatpush1.bf16.msra.mxu0 0
        %3735 = vmatprep.subr.bf16.mxu0 0
        %3736 = vmatpush1.bf16.msra.mxu0 0
        %3737 = vmatprep.subr.bf16.mxu0 0
        %3738 = vmatpush1.bf16.msra.mxu0 0
        %3739 = vmatprep.subr.bf16.mxu0 0
        %3740 = vmatpush1.bf16.msra.mxu0 0
        %3741 = vmatprep.subr.bf16.mxu0 0
        %3742 = vmatpush1.bf16.msra.mxu0 0
        %3743 = vmatprep.subr.bf16.mxu0 0
        %3744 = vmatpush1.bf16.msra.mxu0 %v3727
        %3745 = vmatprep.subr.bf16.mxu0 0
        %3746 = vmatpush2.bf16.msra.mxu0 0
        %3747 = vmatprep.subr.bf16.mxu0 0
        %3748 = vmatpush2.bf16.msra.mxu0 0
        %3749 = vmatprep.subr.bf16.mxu0 0
        %3750 = vmatpush2.bf16.msra.mxu0 0
        %3751 = vmatprep.subr.bf16.mxu0 0
        %3752 = vmatpush2.bf16.msra.mxu0 0
        %3753 = vmatprep.subr.bf16.mxu0 0
        %3754 = vmatpush2.bf16.msra.mxu0 0
        %3755 = vmatprep.subr.bf16.mxu0 0
        %3756 = vmatpush2.bf16.msra.mxu0 0
        %3757 = vmatprep.subr.bf16.mxu0 0
        %3758 = vmatpush2.bf16.msra.mxu0 0
        %3759 = vmatprep.subr.bf16.mxu0 0
        %3760 = vmatpush2.bf16.msra.mxu0 0
        %3761 = vmatprep.mubr.bf16.mxu0 0
        %3762 = vmatmul.mubr.bf16.gmra.mxu0 %v3724
        %v3763 = vpop.f32.mrf.mxu0
        %v3764 = vadd.f32 0.0, %v3763
        %v3765 = vpop.f32.mrf.mxu0
        %v3766 = vpop.f32.mrf.mxu0
        %v3767 = vpop.f32.mrf.mxu0
        %3768 = vdwg.mxu0
        %v3770 = vsel %vm2687, %v3572, 0
        %v3773 = vsel %vm3587, %v2675, 0
        %3775 = vmatprep.subr.bf16.mxu0 0
        %3776 = vmatpush1.bf16.msra.mxu0 0
        %3777 = vmatprep.subr.bf16.mxu0 0
        %3778 = vmatpush1.bf16.msra.mxu0 0
        %3779 = vmatprep.subr.bf16.mxu0 0
        %3780 = vmatpush1.bf16.msra.mxu0 0
        %3781 = vmatprep.subr.bf16.mxu0 0
        %3782 = vmatpush1.bf16.msra.mxu0 0
        %3783 = vmatprep.subr.bf16.mxu0 0
        %3784 = vmatpush1.bf16.msra.mxu0 0
        %3785 = vmatprep.subr.bf16.mxu0 0
        %3786 = vmatpush1.bf16.msra.mxu0 0
        %3787 = vmatprep.subr.bf16.mxu0 0
        %3788 = vmatpush1.bf16.msra.mxu0 0
        %3789 = vmatprep.subr.bf16.mxu0 0
        %3790 = vmatpush1.bf16.msra.mxu0 %v3773
        %3791 = vmatprep.subr.bf16.mxu0 0
        %3792 = vmatpush2.bf16.msra.mxu0 0
        %3793 = vmatprep.subr.bf16.mxu0 0
        %3794 = vmatpush2.bf16.msra.mxu0 0
        %3795 = vmatprep.subr.bf16.mxu0 0
        %3796 = vmatpush2.bf16.msra.mxu0 0
        %3797 = vmatprep.subr.bf16.mxu0 0
        %3798 = vmatpush2.bf16.msra.mxu0 0
        %3799 = vmatprep.subr.bf16.mxu0 0
        %3800 = vmatpush2.bf16.msra.mxu0 0
        %3801 = vmatprep.subr.bf16.mxu0 0
        %3802 = vmatpush2.bf16.msra.mxu0 0
        %3803 = vmatprep.subr.bf16.mxu0 0
        %3804 = vmatpush2.bf16.msra.mxu0 0
        %3805 = vmatprep.subr.bf16.mxu0 0
        %3806 = vmatpush2.bf16.msra.mxu0 0
        %3807 = vmatprep.mubr.bf16.mxu0 0
        %3808 = vmatmul.mubr.bf16.gmra.mxu0 %v3770
        %v3809 = vpop.f32.mrf.mxu0
        %v3810 = vadd.f32 0.0, %v3809
        %v3811 = vpop.f32.mrf.mxu0
        %v3812 = vpop.f32.mrf.mxu0
        %v3813 = vpop.f32.mrf.mxu0
        %3814 = vdwg.mxu0
        %v3816 = vsel %vm2687, %v3573, 0
        %v3819 = vsel %vm3587, %v2676, 0
        %3821 = vmatprep.subr.bf16.mxu0 0
        %3822 = vmatpush1.bf16.msra.mxu0 0
        %3823 = vmatprep.subr.bf16.mxu0 0
        %3824 = vmatpush1.bf16.msra.mxu0 0
        %3825 = vmatprep.subr.bf16.mxu0 0
        %3826 = vmatpush1.bf16.msra.mxu0 0
        %3827 = vmatprep.subr.bf16.mxu0 0
        %3828 = vmatpush1.bf16.msra.mxu0 0
        %3829 = vmatprep.subr.bf16.mxu0 0
        %3830 = vmatpush1.bf16.msra.mxu0 0
        %3831 = vmatprep.subr.bf16.mxu0 0
        %3832 = vmatpush1.bf16.msra.mxu0 0
        %3833 = vmatprep.subr.bf16.mxu0 0
        %3834 = vmatpush1.bf16.msra.mxu0 0
        %3835 = vmatprep.subr.bf16.mxu0 0
        %3836 = vmatpush1.bf16.msra.mxu0 %v3819
        %3837 = vmatprep.subr.bf16.mxu0 0
        %3838 = vmatpush2.bf16.msra.mxu0 0
        %3839 = vmatprep.subr.bf16.mxu0 0
        %3840 = vmatpush2.bf16.msra.mxu0 0
        %3841 = vmatprep.subr.bf16.mxu0 0
        %3842 = vmatpush2.bf16.msra.mxu0 0
        %3843 = vmatprep.subr.bf16.mxu0 0
        %3844 = vmatpush2.bf16.msra.mxu0 0
        %3845 = vmatprep.subr.bf16.mxu0 0
        %3846 = vmatpush2.bf16.msra.mxu0 0
        %3847 = vmatprep.subr.bf16.mxu0 0
        %3848 = vmatpush2.bf16.msra.mxu0 0
        %3849 = vmatprep.subr.bf16.mxu0 0
        %3850 = vmatpush2.bf16.msra.mxu0 0
        %3851 = vmatprep.subr.bf16.mxu0 0
        %3852 = vmatpush2.bf16.msra.mxu0 0
        %3853 = vmatprep.mubr.bf16.mxu0 0
        %3854 = vmatmul.mubr.bf16.gmra.mxu0 %v3816
        %v3855 = vpop.f32.mrf.mxu0
        %v3856 = vadd.f32 0.0, %v3855
        %v3857 = vpop.f32.mrf.mxu0
        %v3858 = vpop.f32.mrf.mxu0
        %v3859 = vpop.f32.mrf.mxu0
        %3860 = vdwg.mxu0
        %v3862 = vsel %vm2687, %v3574, 0
        %v3865 = vsel %vm3587, %v2677, 0
        %3867 = vmatprep.subr.bf16.mxu0 0
        %3868 = vmatpush1.bf16.msra.mxu0 0
        %3869 = vmatprep.subr.bf16.mxu0 0
        %3870 = vmatpush1.bf16.msra.mxu0 0
        %3871 = vmatprep.subr.bf16.mxu0 0
        %3872 = vmatpush1.bf16.msra.mxu0 0
        %3873 = vmatprep.subr.bf16.mxu0 0
        %3874 = vmatpush1.bf16.msra.mxu0 0
        %3875 = vmatprep.subr.bf16.mxu0 0
        %3876 = vmatpush1.bf16.msra.mxu0 0
        %3877 = vmatprep.subr.bf16.mxu0 0
        %3878 = vmatpush1.bf16.msra.mxu0 0
        %3879 = vmatprep.subr.bf16.mxu0 0
        %3880 = vmatpush1.bf16.msra.mxu0 0
        %3881 = vmatprep.subr.bf16.mxu0 0
        %3882 = vmatpush1.bf16.msra.mxu0 %v3865
        %3883 = vmatprep.subr.bf16.mxu0 0
        %3884 = vmatpush2.bf16.msra.mxu0 0
        %3885 = vmatprep.subr.bf16.mxu0 0
        %3886 = vmatpush2.bf16.msra.mxu0 0
        %3887 = vmatprep.subr.bf16.mxu0 0
        %3888 = vmatpush2.bf16.msra.mxu0 0
        %3889 = vmatprep.subr.bf16.mxu0 0
        %3890 = vmatpush2.bf16.msra.mxu0 0
        %3891 = vmatprep.subr.bf16.mxu0 0
        %3892 = vmatpush2.bf16.msra.mxu0 0
        %3893 = vmatprep.subr.bf16.mxu0 0
        %3894 = vmatpush2.bf16.msra.mxu0 0
        %3895 = vmatprep.subr.bf16.mxu0 0
        %3896 = vmatpush2.bf16.msra.mxu0 0
        %3897 = vmatprep.subr.bf16.mxu0 0
        %3898 = vmatpush2.bf16.msra.mxu0 0
        %3899 = vmatprep.mubr.bf16.mxu0 0
        %3900 = vmatmul.mubr.bf16.gmra.mxu0 %v3862
        %v3901 = vpop.f32.mrf.mxu0
        %v3902 = vadd.f32 0.0, %v3901
        %v3903 = vpop.f32.mrf.mxu0
        %v3904 = vpop.f32.mrf.mxu0
        %v3905 = vpop.f32.mrf.mxu0
        %3906 = vdwg.mxu0
        %v3908 = vsel %vm2687, %v3575, 0
        %v3911 = vsel %vm3587, %v2678, 0
        %3913 = vmatprep.subr.bf16.mxu0 0
        %3914 = vmatpush1.bf16.msra.mxu0 0
        %3915 = vmatprep.subr.bf16.mxu0 0
        %3916 = vmatpush1.bf16.msra.mxu0 0
        %3917 = vmatprep.subr.bf16.mxu0 0
        %3918 = vmatpush1.bf16.msra.mxu0 0
        %3919 = vmatprep.subr.bf16.mxu0 0
        %3920 = vmatpush1.bf16.msra.mxu0 0
        %3921 = vmatprep.subr.bf16.mxu0 0
        %3922 = vmatpush1.bf16.msra.mxu0 0
        %3923 = vmatprep.subr.bf16.mxu0 0
        %3924 = vmatpush1.bf16.msra.mxu0 0
        %3925 = vmatprep.subr.bf16.mxu0 0
        %3926 = vmatpush1.bf16.msra.mxu0 0
        %3927 = vmatprep.subr.bf16.mxu0 0
        %3928 = vmatpush1.bf16.msra.mxu0 %v3911
        %3929 = vmatprep.subr.bf16.mxu0 0
        %3930 = vmatpush2.bf16.msra.mxu0 0
        %3931 = vmatprep.subr.bf16.mxu0 0
        %3932 = vmatpush2.bf16.msra.mxu0 0
        %3933 = vmatprep.subr.bf16.mxu0 0
        %3934 = vmatpush2.bf16.msra.mxu0 0
        %3935 = vmatprep.subr.bf16.mxu0 0
        %3936 = vmatpush2.bf16.msra.mxu0 0
        %3937 = vmatprep.subr.bf16.mxu0 0
        %3938 = vmatpush2.bf16.msra.mxu0 0
        %3939 = vmatprep.subr.bf16.mxu0 0
        %3940 = vmatpush2.bf16.msra.mxu0 0
        %3941 = vmatprep.subr.bf16.mxu0 0
        %3942 = vmatpush2.bf16.msra.mxu0 0
        %3943 = vmatprep.subr.bf16.mxu0 0
        %3944 = vmatpush2.bf16.msra.mxu0 0
        %3945 = vmatprep.mubr.bf16.mxu0 0
        %3946 = vmatmul.mubr.bf16.gmra.mxu0 %v3908
        %v3947 = vpop.f32.mrf.mxu0
        %v3948 = vadd.f32 0.0, %v3947
        %v3949 = vpop.f32.mrf.mxu0
        %v3950 = vpop.f32.mrf.mxu0
        %v3951 = vpop.f32.mrf.mxu0
        %3952 = vdwg.mxu0
        %v3954 = vsel %vm2687, %v3576, 0
        %v3957 = vsel %vm3587, %v2679, 0
        %3959 = vmatprep.subr.bf16.mxu0 0
        %3960 = vmatpush1.bf16.msra.mxu0 0
        %3961 = vmatprep.subr.bf16.mxu0 0
        %3962 = vmatpush1.bf16.msra.mxu0 0
        %3963 = vmatprep.subr.bf16.mxu0 0
        %3964 = vmatpush1.bf16.msra.mxu0 0
        %3965 = vmatprep.subr.bf16.mxu0 0
        %3966 = vmatpush1.bf16.msra.mxu0 0
        %3967 = vmatprep.subr.bf16.mxu0 0
        %3968 = vmatpush1.bf16.msra.mxu0 0
        %3969 = vmatprep.subr.bf16.mxu0 0
        %3970 = vmatpush1.bf16.msra.mxu0 0
        %3971 = vmatprep.subr.bf16.mxu0 0
        %3972 = vmatpush1.bf16.msra.mxu0 0
        %3973 = vmatprep.subr.bf16.mxu0 0
        %3974 = vmatpush1.bf16.msra.mxu0 %v3957
        %3975 = vmatprep.subr.bf16.mxu0 0
        %3976 = vmatpush2.bf16.msra.mxu0 0
        %3977 = vmatprep.subr.bf16.mxu0 0
        %3978 = vmatpush2.bf16.msra.mxu0 0
        %3979 = vmatprep.subr.bf16.mxu0 0
        %3980 = vmatpush2.bf16.msra.mxu0 0
        %3981 = vmatprep.subr.bf16.mxu0 0
        %3982 = vmatpush2.bf16.msra.mxu0 0
        %3983 = vmatprep.subr.bf16.mxu0 0
        %3984 = vmatpush2.bf16.msra.mxu0 0
        %3985 = vmatprep.subr.bf16.mxu0 0
        %3986 = vmatpush2.bf16.msra.mxu0 0
        %3987 = vmatprep.subr.bf16.mxu0 0
        %3988 = vmatpush2.bf16.msra.mxu0 0
        %3989 = vmatprep.subr.bf16.mxu0 0
        %3990 = vmatpush2.bf16.msra.mxu0 0
        %3991 = vmatprep.mubr.bf16.mxu0 0
        %3992 = vmatmul.mubr.bf16.gmra.mxu0 %v3954
        %v3993 = vpop.f32.mrf.mxu0
        %v3994 = vadd.f32 0.0, %v3993
        %v3995 = vpop.f32.mrf.mxu0
        %v3996 = vpop.f32.mrf.mxu0
        %v3997 = vpop.f32.mrf.mxu0
        %3998 = vdwg.mxu0
        %v4000 = vsel %vm2687, %v3577, 0
        %v4003 = vsel %vm3587, %v2680, 0
        %4005 = vmatprep.subr.bf16.mxu0 0
        %4006 = vmatpush1.bf16.msra.mxu0 0
        %4007 = vmatprep.subr.bf16.mxu0 0
        %4008 = vmatpush1.bf16.msra.mxu0 0
        %4009 = vmatprep.subr.bf16.mxu0 0
        %4010 = vmatpush1.bf16.msra.mxu0 0
        %4011 = vmatprep.subr.bf16.mxu0 0
        %4012 = vmatpush1.bf16.msra.mxu0 0
        %4013 = vmatprep.subr.bf16.mxu0 0
        %4014 = vmatpush1.bf16.msra.mxu0 0
        %4015 = vmatprep.subr.bf16.mxu0 0
        %4016 = vmatpush1.bf16.msra.mxu0 0
        %4017 = vmatprep.subr.bf16.mxu0 0
        %4018 = vmatpush1.bf16.msra.mxu0 0
        %4019 = vmatprep.subr.bf16.mxu0 0
        %4020 = vmatpush1.bf16.msra.mxu0 %v4003
        %4021 = vmatprep.subr.bf16.mxu0 0
        %4022 = vmatpush2.bf16.msra.mxu0 0
        %4023 = vmatprep.subr.bf16.mxu0 0
        %4024 = vmatpush2.bf16.msra.mxu0 0
        %4025 = vmatprep.subr.bf16.mxu0 0
        %4026 = vmatpush2.bf16.msra.mxu0 0
        %4027 = vmatprep.subr.bf16.mxu0 0
        %4028 = vmatpush2.bf16.msra.mxu0 0
        %4029 = vmatprep.subr.bf16.mxu0 0
        %4030 = vmatpush2.bf16.msra.mxu0 0
        %4031 = vmatprep.subr.bf16.mxu0 0
        %4032 = vmatpush2.bf16.msra.mxu0 0
        %4033 = vmatprep.subr.bf16.mxu0 0
        %4034 = vmatpush2.bf16.msra.mxu0 0
        %4035 = vmatprep.subr.bf16.mxu0 0
        %4036 = vmatpush2.bf16.msra.mxu0 0
        %4037 = vmatprep.mubr.bf16.mxu0 0
        %4038 = vmatmul.mubr.bf16.gmra.mxu0 %v4000
        %v4039 = vpop.f32.mrf.mxu0
        %v4040 = vadd.f32 0.0, %v4039
        %v4041 = vpop.f32.mrf.mxu0
        %v4042 = vpop.f32.mrf.mxu0
        %v4043 = vpop.f32.mrf.mxu0
        %4044 = vdwg.mxu0
        %v4046 = vsel %vm2687, %v3578, 0
        %v4049 = vsel %vm3587, %v2681, 0
        %4051 = vmatprep.subr.bf16.mxu0 0
        %4052 = vmatpush1.bf16.msra.mxu0 0
        %4053 = vmatprep.subr.bf16.mxu0 0
        %4054 = vmatpush1.bf16.msra.mxu0 0
        %4055 = vmatprep.subr.bf16.mxu0 0
        %4056 = vmatpush1.bf16.msra.mxu0 0
        %4057 = vmatprep.subr.bf16.mxu0 0
        %4058 = vmatpush1.bf16.msra.mxu0 0
        %4059 = vmatprep.subr.bf16.mxu0 0
        %4060 = vmatpush1.bf16.msra.mxu0 0
        %4061 = vmatprep.subr.bf16.mxu0 0
        %4062 = vmatpush1.bf16.msra.mxu0 0
        %4063 = vmatprep.subr.bf16.mxu0 0
        %4064 = vmatpush1.bf16.msra.mxu0 0
        %4065 = vmatprep.subr.bf16.mxu0 0
        %4066 = vmatpush1.bf16.msra.mxu0 %v4049
        %4067 = vmatprep.subr.bf16.mxu0 0
        %4068 = vmatpush2.bf16.msra.mxu0 0
        %4069 = vmatprep.subr.bf16.mxu0 0
        %4070 = vmatpush2.bf16.msra.mxu0 0
        %4071 = vmatprep.subr.bf16.mxu0 0
        %4072 = vmatpush2.bf16.msra.mxu0 0
        %4073 = vmatprep.subr.bf16.mxu0 0
        %4074 = vmatpush2.bf16.msra.mxu0 0
        %4075 = vmatprep.subr.bf16.mxu0 0
        %4076 = vmatpush2.bf16.msra.mxu0 0
        %4077 = vmatprep.subr.bf16.mxu0 0
        %4078 = vmatpush2.bf16.msra.mxu0 0
        %4079 = vmatprep.subr.bf16.mxu0 0
        %4080 = vmatpush2.bf16.msra.mxu0 0
        %4081 = vmatprep.subr.bf16.mxu0 0
        %4082 = vmatpush2.bf16.msra.mxu0 0
        %4083 = vmatprep.mubr.bf16.mxu0 0
        %4084 = vmatmul.mubr.bf16.gmra.mxu0 %v4046
        %v4085 = vpop.f32.mrf.mxu0
        %v4086 = vadd.f32 0.0, %v4085
        %v4087 = vpop.f32.mrf.mxu0
        %v4088 = vpop.f32.mrf.mxu0
        %v4089 = vpop.f32.mrf.mxu0
        %4090 = vdwg.mxu0
        %v4092 = vsel %vm2687, %v3579, 0
        %v4095 = vsel %vm3587, %v2682, 0
        %4097 = vmatprep.subr.bf16.mxu0 0
        %4098 = vmatpush1.bf16.msra.mxu0 0
        %4099 = vmatprep.subr.bf16.mxu0 0
        %4100 = vmatpush1.bf16.msra.mxu0 0
        %4101 = vmatprep.subr.bf16.mxu0 0
        %4102 = vmatpush1.bf16.msra.mxu0 0
        %4103 = vmatprep.subr.bf16.mxu0 0
        %4104 = vmatpush1.bf16.msra.mxu0 0
        %4105 = vmatprep.subr.bf16.mxu0 0
        %4106 = vmatpush1.bf16.msra.mxu0 0
        %4107 = vmatprep.subr.bf16.mxu0 0
        %4108 = vmatpush1.bf16.msra.mxu0 0
        %4109 = vmatprep.subr.bf16.mxu0 0
        %4110 = vmatpush1.bf16.msra.mxu0 0
        %4111 = vmatprep.subr.bf16.mxu0 0
        %4112 = vmatpush1.bf16.msra.mxu0 %v4095
        %4113 = vmatprep.subr.bf16.mxu0 0
        %4114 = vmatpush2.bf16.msra.mxu0 0
        %4115 = vmatprep.subr.bf16.mxu0 0
        %4116 = vmatpush2.bf16.msra.mxu0 0
        %4117 = vmatprep.subr.bf16.mxu0 0
        %4118 = vmatpush2.bf16.msra.mxu0 0
        %4119 = vmatprep.subr.bf16.mxu0 0
        %4120 = vmatpush2.bf16.msra.mxu0 0
        %4121 = vmatprep.subr.bf16.mxu0 0
        %4122 = vmatpush2.bf16.msra.mxu0 0
        %4123 = vmatprep.subr.bf16.mxu0 0
        %4124 = vmatpush2.bf16.msra.mxu0 0
        %4125 = vmatprep.subr.bf16.mxu0 0
        %4126 = vmatpush2.bf16.msra.mxu0 0
        %4127 = vmatprep.subr.bf16.mxu0 0
        %4128 = vmatpush2.bf16.msra.mxu0 0
        %4129 = vmatprep.mubr.bf16.mxu0 0
        %4130 = vmatmul.mubr.bf16.gmra.mxu0 %v4092
        %v4131 = vpop.f32.mrf.mxu0
        %v4132 = vadd.f32 0.0, %v4131
        %v4133 = vpop.f32.mrf.mxu0
        %v4134 = vpop.f32.mrf.mxu0
        %v4135 = vpop.f32.mrf.mxu0
        %4136 = vdwg.mxu0
        %v4138 = vsel %vm2687, %v3580, 0
        %v4141 = vsel %vm3587, %v2683, 0
        %4143 = vmatprep.subr.bf16.mxu0 0
        %4144 = vmatpush1.bf16.msra.mxu0 0
        %4145 = vmatprep.subr.bf16.mxu0 0
        %4146 = vmatpush1.bf16.msra.mxu0 0
        %4147 = vmatprep.subr.bf16.mxu0 0
        %4148 = vmatpush1.bf16.msra.mxu0 0
        %4149 = vmatprep.subr.bf16.mxu0 0
        %4150 = vmatpush1.bf16.msra.mxu0 0
        %4151 = vmatprep.subr.bf16.mxu0 0
        %4152 = vmatpush1.bf16.msra.mxu0 0
        %4153 = vmatprep.subr.bf16.mxu0 0
        %4154 = vmatpush1.bf16.msra.mxu0 0
        %4155 = vmatprep.subr.bf16.mxu0 0
        %4156 = vmatpush1.bf16.msra.mxu0 0
        %4157 = vmatprep.subr.bf16.mxu0 0
        %4158 = vmatpush1.bf16.msra.mxu0 %v4141
        %4159 = vmatprep.subr.bf16.mxu0 0
        %4160 = vmatpush2.bf16.msra.mxu0 0
        %4161 = vmatprep.subr.bf16.mxu0 0
        %4162 = vmatpush2.bf16.msra.mxu0 0
        %4163 = vmatprep.subr.bf16.mxu0 0
        %4164 = vmatpush2.bf16.msra.mxu0 0
        %4165 = vmatprep.subr.bf16.mxu0 0
        %4166 = vmatpush2.bf16.msra.mxu0 0
        %4167 = vmatprep.subr.bf16.mxu0 0
        %4168 = vmatpush2.bf16.msra.mxu0 0
        %4169 = vmatprep.subr.bf16.mxu0 0
        %4170 = vmatpush2.bf16.msra.mxu0 0
        %4171 = vmatprep.subr.bf16.mxu0 0
        %4172 = vmatpush2.bf16.msra.mxu0 0
        %4173 = vmatprep.subr.bf16.mxu0 0
        %4174 = vmatpush2.bf16.msra.mxu0 0
        %4175 = vmatprep.mubr.bf16.mxu0 0
        %4176 = vmatmul.mubr.bf16.gmra.mxu0 %v4138
        %v4177 = vpop.f32.mrf.mxu0
        %v4178 = vadd.f32 0.0, %v4177
        %v4179 = vpop.f32.mrf.mxu0
        %v4180 = vpop.f32.mrf.mxu0
        %v4181 = vpop.f32.mrf.mxu0
        %4182 = vdwg.mxu0
        %v4184 = vsel %vm2687, %v3581, 0
        %v4187 = vsel %vm3587, %v2684, 0
        %4189 = vmatprep.subr.bf16.mxu0 0
        %4190 = vmatpush1.bf16.msra.mxu0 0
        %4191 = vmatprep.subr.bf16.mxu0 0
        %4192 = vmatpush1.bf16.msra.mxu0 0
        %4193 = vmatprep.subr.bf16.mxu0 0
        %4194 = vmatpush1.bf16.msra.mxu0 0
        %4195 = vmatprep.subr.bf16.mxu0 0
        %4196 = vmatpush1.bf16.msra.mxu0 0
        %4197 = vmatprep.subr.bf16.mxu0 0
        %4198 = vmatpush1.bf16.msra.mxu0 0
        %4199 = vmatprep.subr.bf16.mxu0 0
        %4200 = vmatpush1.bf16.msra.mxu0 0
        %4201 = vmatprep.subr.bf16.mxu0 0
        %4202 = vmatpush1.bf16.msra.mxu0 0
        %4203 = vmatprep.subr.bf16.mxu0 0
        %4204 = vmatpush1.bf16.msra.mxu0 %v4187
        %4205 = vmatprep.subr.bf16.mxu0 0
        %4206 = vmatpush2.bf16.msra.mxu0 0
        %4207 = vmatprep.subr.bf16.mxu0 0
        %4208 = vmatpush2.bf16.msra.mxu0 0
        %4209 = vmatprep.subr.bf16.mxu0 0
        %4210 = vmatpush2.bf16.msra.mxu0 0
        %4211 = vmatprep.subr.bf16.mxu0 0
        %4212 = vmatpush2.bf16.msra.mxu0 0
        %4213 = vmatprep.subr.bf16.mxu0 0
        %4214 = vmatpush2.bf16.msra.mxu0 0
        %4215 = vmatprep.subr.bf16.mxu0 0
        %4216 = vmatpush2.bf16.msra.mxu0 0
        %4217 = vmatprep.subr.bf16.mxu0 0
        %4218 = vmatpush2.bf16.msra.mxu0 0
        %4219 = vmatprep.subr.bf16.mxu0 0
        %4220 = vmatpush2.bf16.msra.mxu0 0
        %4221 = vmatprep.mubr.bf16.mxu0 0
        %4222 = vmatmul.mubr.bf16.gmra.mxu0 %v4184
        %v4223 = vpop.f32.mrf.mxu0
        %v4224 = vadd.f32 0.0, %v4223
        %v4225 = vpop.f32.mrf.mxu0
        %v4226 = vpop.f32.mrf.mxu0
        %v4227 = vpop.f32.mrf.mxu0
        %4228 = vdwg.mxu0
        %v4230 = vsel %vm2687, %v3582, 0
        %v4233 = vsel %vm3587, %v2685, 0
        %4235 = vmatprep.subr.bf16.mxu0 0
        %4236 = vmatpush1.bf16.msra.mxu0 0
        %4237 = vmatprep.subr.bf16.mxu0 0
        %4238 = vmatpush1.bf16.msra.mxu0 0
        %4239 = vmatprep.subr.bf16.mxu0 0
        %4240 = vmatpush1.bf16.msra.mxu0 0
        %4241 = vmatprep.subr.bf16.mxu0 0
        %4242 = vmatpush1.bf16.msra.mxu0 0
        %4243 = vmatprep.subr.bf16.mxu0 0
        %4244 = vmatpush1.bf16.msra.mxu0 0
        %4245 = vmatprep.subr.bf16.mxu0 0
        %4246 = vmatpush1.bf16.msra.mxu0 0
        %4247 = vmatprep.subr.bf16.mxu0 0
        %4248 = vmatpush1.bf16.msra.mxu0 0
        %4249 = vmatprep.subr.bf16.mxu0 0
        %4250 = vmatpush1.bf16.msra.mxu0 %v4233
        %4251 = vmatprep.subr.bf16.mxu0 0
        %4252 = vmatpush2.bf16.msra.mxu0 0
        %4253 = vmatprep.subr.bf16.mxu0 0
        %4254 = vmatpush2.bf16.msra.mxu0 0
        %4255 = vmatprep.subr.bf16.mxu0 0
        %4256 = vmatpush2.bf16.msra.mxu0 0
        %4257 = vmatprep.subr.bf16.mxu0 0
        %4258 = vmatpush2.bf16.msra.mxu0 0
        %4259 = vmatprep.subr.bf16.mxu0 0
        %4260 = vmatpush2.bf16.msra.mxu0 0
        %4261 = vmatprep.subr.bf16.mxu0 0
        %4262 = vmatpush2.bf16.msra.mxu0 0
        %4263 = vmatprep.subr.bf16.mxu0 0
        %4264 = vmatpush2.bf16.msra.mxu0 0
        %4265 = vmatprep.subr.bf16.mxu0 0
        %4266 = vmatpush2.bf16.msra.mxu0 0
        %4267 = vmatprep.mubr.bf16.mxu0 0
        %4268 = vmatmul.mubr.bf16.gmra.mxu0 %v4230
        %v4269 = vpop.f32.mrf.mxu0
        %v4270 = vadd.f32 0.0, %v4269
        %v4271 = vpop.f32.mrf.mxu0
        %v4272 = vpop.f32.mrf.mxu0
        %v4273 = vpop.f32.mrf.mxu0
        %4274 = vdwg.mxu0
        %v4276 = vsel %vm2687, %v3583, 0
        %v4279 = vsel %vm3587, %v2686, 0
        %4281 = vmatprep.subr.bf16.mxu0 0
        %4282 = vmatpush1.bf16.msra.mxu0 0
        %4283 = vmatprep.subr.bf16.mxu0 0
        %4284 = vmatpush1.bf16.msra.mxu0 0
        %4285 = vmatprep.subr.bf16.mxu0 0
        %4286 = vmatpush1.bf16.msra.mxu0 0
        %4287 = vmatprep.subr.bf16.mxu0 0
        %4288 = vmatpush1.bf16.msra.mxu0 0
        %4289 = vmatprep.subr.bf16.mxu0 0
        %4290 = vmatpush1.bf16.msra.mxu0 0
        %4291 = vmatprep.subr.bf16.mxu0 0
        %4292 = vmatpush1.bf16.msra.mxu0 0
        %4293 = vmatprep.subr.bf16.mxu0 0
        %4294 = vmatpush1.bf16.msra.mxu0 0
        %4295 = vmatprep.subr.bf16.mxu0 0
        %4296 = vmatpush1.bf16.msra.mxu0 %v4279
        %4297 = vmatprep.subr.bf16.mxu0 0
        %4298 = vmatpush2.bf16.msra.mxu0 0
        %4299 = vmatprep.subr.bf16.mxu0 0
        %4300 = vmatpush2.bf16.msra.mxu0 0
        %4301 = vmatprep.subr.bf16.mxu0 0
        %4302 = vmatpush2.bf16.msra.mxu0 0
        %4303 = vmatprep.subr.bf16.mxu0 0
        %4304 = vmatpush2.bf16.msra.mxu0 0
        %4305 = vmatprep.subr.bf16.mxu0 0
        %4306 = vmatpush2.bf16.msra.mxu0 0
        %4307 = vmatprep.subr.bf16.mxu0 0
        %4308 = vmatpush2.bf16.msra.mxu0 0
        %4309 = vmatprep.subr.bf16.mxu0 0
        %4310 = vmatpush2.bf16.msra.mxu0 0
        %4311 = vmatprep.subr.bf16.mxu0 0
        %4312 = vmatpush2.bf16.msra.mxu0 0
        %4313 = vmatprep.mubr.bf16.mxu0 0
        %4314 = vmatmul.mubr.bf16.gmra.mxu0 %v4276
        %v4315 = vpop.f32.mrf.mxu0
        %v4316 = vadd.f32 0.0, %v4315
        %v4317 = vpop.f32.mrf.mxu0
        %v4318 = vpop.f32.mrf.mxu0
        %v4319 = vpop.f32.mrf.mxu0
        %4320 = vdwg.mxu0
        %v4321 = vrcp.pop %v3522
        %v4322 = vrcp.pop %v3525
        %v4323 = vrcp.pop %v3528
        %v4324 = vrcp.pop %v3531
        %v4325 = vrcp.pop %v3534
        %v4326 = vrcp.pop %v3537
        %v4327 = vrcp.pop %v3540
        %v4328 = vrcp.pop %v3543
        %v4329 = vrcp.pop %v3546
        %v4330 = vrcp.pop %v3549
        %v4331 = vrcp.pop %v3552
        %v4332 = vrcp.pop %v3555
        %v4333 = vrcp.pop %v3558
        %v4334 = vrcp.pop %v3561
        %v4335 = vrcp.pop %v3564
        %v4336 = vrcp.pop %v3567
        %v4337 = vmul.f32 %v3626, %v4321
        %v4338 = vmul.f32 %v3672, %v4322
        %v4339 = vmul.f32 %v3718, %v4323
        %v4340 = vmul.f32 %v3764, %v4324
        %v4341 = vmul.f32 %v3810, %v4325
        %v4342 = vmul.f32 %v3856, %v4326
        %v4343 = vmul.f32 %v3902, %v4327
        %v4344 = vmul.f32 %v3948, %v4328
        %v4345 = vmul.f32 %v3994, %v4329
        %v4346 = vmul.f32 %v4040, %v4330
        %v4347 = vmul.f32 %v4086, %v4331
        %v4348 = vmul.f32 %v4132, %v4332
        %v4349 = vmul.f32 %v4178, %v4333
        %v4350 = vmul.f32 %v4224, %v4334
        %v4351 = vmul.f32 %v4270, %v4335
        %v4352 = vmul.f32 %v4316, %v4336
        %v4353 = vcombine.low %v4337, %v4339
        %v4354 = vcombine.high %v4337, %v4339
        %v4356 = vunpack.c.l.s4 1983009808
        %v4357 = vunpack.c.0.s8 %v4356
        %v4358 = vlaneseq
        %v4359 = vshrl.u32 %v4358, 7
        %v4360 = vsub.s32 %v4357, %v4359
        %v4361 = vrot.slane %v4353, %v4360
        %v4363 = vunpack.c.l.s4 1983009808
        %v4364 = vunpack.c.0.s8 %v4363
        %v4365 = vlaneseq
        %v4366 = vshrl.u32 %v4365, 7
        %v4367 = vsub.s32 %v4364, %v4366
        %v4368 = vrot.slane %v4354, %v4367
        %v4369 = vcombine.low %v4338, %v4340
        %v4370 = vcombine.high %v4338, %v4340
        %v4372 = vunpack.c.l.s4 1983009808
        %v4373 = vunpack.c.0.s8 %v4372
        %v4374 = vlaneseq
        %v4375 = vshrl.u32 %v4374, 7
        %v4376 = vsub.s32 %v4373, %v4375
        %v4377 = vrot.slane %v4369, %v4376
        %v4379 = vunpack.c.l.s4 1983009808
        %v4380 = vunpack.c.0.s8 %v4379
        %v4381 = vlaneseq
        %v4382 = vshrl.u32 %v4381, 7
        %v4383 = vsub.s32 %v4380, %v4382
        %v4384 = vrot.slane %v4370, %v4383
        %v4385 = vcombine.low %v4341, %v4343
        %v4386 = vcombine.high %v4341, %v4343
        %v4388 = vunpack.c.l.s4 1983009808
        %v4389 = vunpack.c.0.s8 %v4388
        %v4390 = vlaneseq
        %v4391 = vshrl.u32 %v4390, 7
        %v4392 = vsub.s32 %v4389, %v4391
        %v4393 = vrot.slane %v4385, %v4392
        %v4395 = vunpack.c.l.s4 1983009808
        %v4396 = vunpack.c.0.s8 %v4395
        %v4397 = vlaneseq
        %v4398 = vshrl.u32 %v4397, 7
        %v4399 = vsub.s32 %v4396, %v4398
        %v4400 = vrot.slane %v4386, %v4399
        %v4401 = vcombine.low %v4342, %v4344
        %v4402 = vcombine.high %v4342, %v4344
        %v4404 = vunpack.c.l.s4 1983009808
        %v4405 = vunpack.c.0.s8 %v4404
        %v4406 = vlaneseq
        %v4407 = vshrl.u32 %v4406, 7
        %v4408 = vsub.s32 %v4405, %v4407
        %v4409 = vrot.slane %v4401, %v4408
        %v4411 = vunpack.c.l.s4 1983009808
        %v4412 = vunpack.c.0.s8 %v4411
        %v4413 = vlaneseq
        %v4414 = vshrl.u32 %v4413, 7
        %v4415 = vsub.s32 %v4412, %v4414
        %v4416 = vrot.slane %v4402, %v4415
        %v4417 = vcombine.low %v4361, %v4377
        %v4418 = vcombine.high %v4361, %v4377
        %v4420 = vunpack.c.l.s4 1934713408
        %v4421 = vunpack.c.0.s8 %v4420
        %v4422 = vlaneseq
        %v4423 = vshrl.u32 %v4422, 7
        %v4424 = vsub.s32 %v4421, %v4423
        %v4425 = vrot.slane %v4417, %v4424
        %v4427 = vunpack.c.l.s4 1934713408
        %v4428 = vunpack.c.0.s8 %v4427
        %v4429 = vlaneseq
        %v4430 = vshrl.u32 %v4429, 7
        %v4431 = vsub.s32 %v4428, %v4430
        %v4432 = vrot.slane %v4418, %v4431
        %v4433 = vcombine.low %v4368, %v4384
        %v4434 = vcombine.high %v4368, %v4384
        %v4436 = vunpack.c.l.s4 1934713408
        %v4437 = vunpack.c.0.s8 %v4436
        %v4438 = vlaneseq
        %v4439 = vshrl.u32 %v4438, 7
        %v4440 = vsub.s32 %v4437, %v4439
        %v4441 = vrot.slane %v4433, %v4440
        %v4443 = vunpack.c.l.s4 1934713408
        %v4444 = vunpack.c.0.s8 %v4443
        %v4445 = vlaneseq
        %v4446 = vshrl.u32 %v4445, 7
        %v4447 = vsub.s32 %v4444, %v4446
        %v4448 = vrot.slane %v4434, %v4447
        %v4449 = vcombine.low %v4393, %v4409
        %v4450 = vcombine.high %v4393, %v4409
        %v4452 = vunpack.c.l.s4 1934713408
        %v4453 = vunpack.c.0.s8 %v4452
        %v4454 = vlaneseq
        %v4455 = vshrl.u32 %v4454, 7
        %v4456 = vsub.s32 %v4453, %v4455
        %v4457 = vrot.slane %v4449, %v4456
        %v4459 = vunpack.c.l.s4 1934713408
        %v4460 = vunpack.c.0.s8 %v4459
        %v4461 = vlaneseq
        %v4462 = vshrl.u32 %v4461, 7
        %v4463 = vsub.s32 %v4460, %v4462
        %v4464 = vrot.slane %v4450, %v4463
        %v4465 = vcombine.low %v4400, %v4416
        %v4466 = vcombine.high %v4400, %v4416
        %v4468 = vunpack.c.l.s4 1934713408
        %v4469 = vunpack.c.0.s8 %v4468
        %v4470 = vlaneseq
        %v4471 = vshrl.u32 %v4470, 7
        %v4472 = vsub.s32 %v4469, %v4471
        %v4473 = vrot.slane %v4465, %v4472
        %v4475 = vunpack.c.l.s4 1934713408
        %v4476 = vunpack.c.0.s8 %v4475
        %v4477 = vlaneseq
        %v4478 = vshrl.u32 %v4477, 7
        %v4479 = vsub.s32 %v4476, %v4478
        %v4480 = vrot.slane %v4466, %v4479
        %v4481 = vcombine.low %v4425, %v4457
        %v4482 = vcombine.high %v4425, %v4457
        %v4483 = vcombine.low %v4432, %v4464
        %v4484 = vcombine.high %v4432, %v4464
        %v4485 = vcombine.low %v4441, %v4473
        %v4486 = vcombine.high %v4441, %v4473
        %v4487 = vcombine.low %v4448, %v4480
        %v4488 = vcombine.high %v4448, %v4480
        %v4489 = vcombine.low %v4345, %v4347
        %v4490 = vcombine.high %v4345, %v4347
        %v4492 = vunpack.c.l.s4 1983009808
        %v4493 = vunpack.c.0.s8 %v4492
        %v4494 = vlaneseq
        %v4495 = vshrl.u32 %v4494, 7
        %v4496 = vsub.s32 %v4493, %v4495
        %v4497 = vrot.slane %v4489, %v4496
        %v4499 = vunpack.c.l.s4 1983009808
        %v4500 = vunpack.c.0.s8 %v4499
        %v4501 = vlaneseq
        %v4502 = vshrl.u32 %v4501, 7
        %v4503 = vsub.s32 %v4500, %v4502
        %v4504 = vrot.slane %v4490, %v4503
        %v4505 = vcombine.low %v4346, %v4348
        %v4506 = vcombine.high %v4346, %v4348
        %v4508 = vunpack.c.l.s4 1983009808
        %v4509 = vunpack.c.0.s8 %v4508
        %v4510 = vlaneseq
        %v4511 = vshrl.u32 %v4510, 7
        %v4512 = vsub.s32 %v4509, %v4511
        %v4513 = vrot.slane %v4505, %v4512
        %v4515 = vunpack.c.l.s4 1983009808
        %v4516 = vunpack.c.0.s8 %v4515
        %v4517 = vlaneseq
        %v4518 = vshrl.u32 %v4517, 7
        %v4519 = vsub.s32 %v4516, %v4518
        %v4520 = vrot.slane %v4506, %v4519
        %v4521 = vcombine.low %v4349, %v4351
        %v4522 = vcombine.high %v4349, %v4351
        %v4524 = vunpack.c.l.s4 1983009808
        %v4525 = vunpack.c.0.s8 %v4524
        %v4526 = vlaneseq
        %v4527 = vshrl.u32 %v4526, 7
        %v4528 = vsub.s32 %v4525, %v4527
        %v4529 = vrot.slane %v4521, %v4528
        %v4531 = vunpack.c.l.s4 1983009808
        %v4532 = vunpack.c.0.s8 %v4531
        %v4533 = vlaneseq
        %v4534 = vshrl.u32 %v4533, 7
        %v4535 = vsub.s32 %v4532, %v4534
        %v4536 = vrot.slane %v4522, %v4535
        %v4537 = vcombine.low %v4350, %v4352
        %v4538 = vcombine.high %v4350, %v4352
        %v4540 = vunpack.c.l.s4 1983009808
        %v4541 = vunpack.c.0.s8 %v4540
        %v4542 = vlaneseq
        %v4543 = vshrl.u32 %v4542, 7
        %v4544 = vsub.s32 %v4541, %v4543
        %v4545 = vrot.slane %v4537, %v4544
        %v4547 = vunpack.c.l.s4 1983009808
        %v4548 = vunpack.c.0.s8 %v4547
        %v4549 = vlaneseq
        %v4550 = vshrl.u32 %v4549, 7
        %v4551 = vsub.s32 %v4548, %v4550
        %v4552 = vrot.slane %v4538, %v4551
        %v4553 = vcombine.low %v4497, %v4513
        %v4554 = vcombine.high %v4497, %v4513
        %v4556 = vunpack.c.l.s4 1934713408
        %v4557 = vunpack.c.0.s8 %v4556
        %v4558 = vlaneseq
        %v4559 = vshrl.u32 %v4558, 7
        %v4560 = vsub.s32 %v4557, %v4559
        %v4561 = vrot.slane %v4553, %v4560
        %v4563 = vunpack.c.l.s4 1934713408
        %v4564 = vunpack.c.0.s8 %v4563
        %v4565 = vlaneseq
        %v4566 = vshrl.u32 %v4565, 7
        %v4567 = vsub.s32 %v4564, %v4566
        %v4568 = vrot.slane %v4554, %v4567
        %v4569 = vcombine.low %v4504, %v4520
        %v4570 = vcombine.high %v4504, %v4520
        %v4572 = vunpack.c.l.s4 1934713408
        %v4573 = vunpack.c.0.s8 %v4572
        %v4574 = vlaneseq
        %v4575 = vshrl.u32 %v4574, 7
        %v4576 = vsub.s32 %v4573, %v4575
        %v4577 = vrot.slane %v4569, %v4576
        %v4579 = vunpack.c.l.s4 1934713408
        %v4580 = vunpack.c.0.s8 %v4579
        %v4581 = vlaneseq
        %v4582 = vshrl.u32 %v4581, 7
        %v4583 = vsub.s32 %v4580, %v4582
        %v4584 = vrot.slane %v4570, %v4583
        %v4585 = vcombine.low %v4529, %v4545
        %v4586 = vcombine.high %v4529, %v4545
        %v4588 = vunpack.c.l.s4 1934713408
        %v4589 = vunpack.c.0.s8 %v4588
        %v4590 = vlaneseq
        %v4591 = vshrl.u32 %v4590, 7
        %v4592 = vsub.s32 %v4589, %v4591
        %v4593 = vrot.slane %v4585, %v4592
        %v4595 = vunpack.c.l.s4 1934713408
        %v4596 = vunpack.c.0.s8 %v4595
        %v4597 = vlaneseq
        %v4598 = vshrl.u32 %v4597, 7
        %v4599 = vsub.s32 %v4596, %v4598
        %v4600 = vrot.slane %v4586, %v4599
        %v4601 = vcombine.low %v4536, %v4552
        %v4602 = vcombine.high %v4536, %v4552
        %v4604 = vunpack.c.l.s4 1934713408
        %v4605 = vunpack.c.0.s8 %v4604
        %v4606 = vlaneseq
        %v4607 = vshrl.u32 %v4606, 7
        %v4608 = vsub.s32 %v4605, %v4607
        %v4609 = vrot.slane %v4601, %v4608
        %v4611 = vunpack.c.l.s4 1934713408
        %v4612 = vunpack.c.0.s8 %v4611
        %v4613 = vlaneseq
        %v4614 = vshrl.u32 %v4613, 7
        %v4615 = vsub.s32 %v4612, %v4614
        %v4616 = vrot.slane %v4602, %v4615
        %v4617 = vcombine.low %v4561, %v4593
        %v4618 = vcombine.high %v4561, %v4593
        %v4619 = vcombine.low %v4568, %v4600
        %v4620 = vcombine.high %v4568, %v4600
        %v4621 = vcombine.low %v4577, %v4609
        %v4622 = vcombine.high %v4577, %v4609
        %v4623 = vcombine.low %v4584, %v4616
        %v4624 = vcombine.high %v4584, %v4616
        %v4625 = vcombine.low %v4481, %v4483
        %v4626 = vcombine.high %v4481, %v4483
        %v4628 = vunpack.c.l.s4 1983009808
        %v4629 = vunpack.c.0.s8 %v4628
        %v4630 = vlaneseq
        %v4631 = vshrl.u32 %v4630, 7
        %v4632 = vsub.s32 %v4629, %v4631
        %v4633 = vrot.slane %v4625, %v4632
        %v4635 = vunpack.c.l.s4 1983009808
        %v4636 = vunpack.c.0.s8 %v4635
        %v4637 = vlaneseq
        %v4638 = vshrl.u32 %v4637, 7
        %v4639 = vsub.s32 %v4636, %v4638
        %v4640 = vrot.slane %v4626, %v4639
        %v4641 = vcombine.low %v4482, %v4484
        %v4642 = vcombine.high %v4482, %v4484
        %v4644 = vunpack.c.l.s4 1983009808
        %v4645 = vunpack.c.0.s8 %v4644
        %v4646 = vlaneseq
        %v4647 = vshrl.u32 %v4646, 7
        %v4648 = vsub.s32 %v4645, %v4647
        %v4649 = vrot.slane %v4641, %v4648
        %v4651 = vunpack.c.l.s4 1983009808
        %v4652 = vunpack.c.0.s8 %v4651
        %v4653 = vlaneseq
        %v4654 = vshrl.u32 %v4653, 7
        %v4655 = vsub.s32 %v4652, %v4654
        %v4656 = vrot.slane %v4642, %v4655
        %v4657 = vcombine.low %v4485, %v4487
        %v4658 = vcombine.high %v4485, %v4487
        %v4660 = vunpack.c.l.s4 1983009808
        %v4661 = vunpack.c.0.s8 %v4660
        %v4662 = vlaneseq
        %v4663 = vshrl.u32 %v4662, 7
        %v4664 = vsub.s32 %v4661, %v4663
        %v4665 = vrot.slane %v4657, %v4664
        %v4667 = vunpack.c.l.s4 1983009808
        %v4668 = vunpack.c.0.s8 %v4667
        %v4669 = vlaneseq
        %v4670 = vshrl.u32 %v4669, 7
        %v4671 = vsub.s32 %v4668, %v4670
        %v4672 = vrot.slane %v4658, %v4671
        %v4673 = vcombine.low %v4486, %v4488
        %v4674 = vcombine.high %v4486, %v4488
        %v4676 = vunpack.c.l.s4 1983009808
        %v4677 = vunpack.c.0.s8 %v4676
        %v4678 = vlaneseq
        %v4679 = vshrl.u32 %v4678, 7
        %v4680 = vsub.s32 %v4677, %v4679
        %v4681 = vrot.slane %v4673, %v4680
        %v4683 = vunpack.c.l.s4 1983009808
        %v4684 = vunpack.c.0.s8 %v4683
        %v4685 = vlaneseq
        %v4686 = vshrl.u32 %v4685, 7
        %v4687 = vsub.s32 %v4684, %v4686
        %v4688 = vrot.slane %v4674, %v4687
        %v4689 = vcombine.low %v4633, %v4649
        %v4690 = vcombine.high %v4633, %v4649
        %v4692 = vunpack.c.l.s4 1934713408
        %v4693 = vunpack.c.0.s8 %v4692
        %v4694 = vlaneseq
        %v4695 = vshrl.u32 %v4694, 7
        %v4696 = vsub.s32 %v4693, %v4695
        %v4697 = vrot.slane %v4689, %v4696
        %v4699 = vunpack.c.l.s4 1934713408
        %v4700 = vunpack.c.0.s8 %v4699
        %v4701 = vlaneseq
        %v4702 = vshrl.u32 %v4701, 7
        %v4703 = vsub.s32 %v4700, %v4702
        %v4704 = vrot.slane %v4690, %v4703
        %v4705 = vcombine.low %v4640, %v4656
        %v4706 = vcombine.high %v4640, %v4656
        %v4708 = vunpack.c.l.s4 1934713408
        %v4709 = vunpack.c.0.s8 %v4708
        %v4710 = vlaneseq
        %v4711 = vshrl.u32 %v4710, 7
        %v4712 = vsub.s32 %v4709, %v4711
        %v4713 = vrot.slane %v4705, %v4712
        %v4715 = vunpack.c.l.s4 1934713408
        %v4716 = vunpack.c.0.s8 %v4715
        %v4717 = vlaneseq
        %v4718 = vshrl.u32 %v4717, 7
        %v4719 = vsub.s32 %v4716, %v4718
        %v4720 = vrot.slane %v4706, %v4719
        %v4721 = vcombine.low %v4665, %v4681
        %v4722 = vcombine.high %v4665, %v4681
        %v4724 = vunpack.c.l.s4 1934713408
        %v4725 = vunpack.c.0.s8 %v4724
        %v4726 = vlaneseq
        %v4727 = vshrl.u32 %v4726, 7
        %v4728 = vsub.s32 %v4725, %v4727
        %v4729 = vrot.slane %v4721, %v4728
        %v4731 = vunpack.c.l.s4 1934713408
        %v4732 = vunpack.c.0.s8 %v4731
        %v4733 = vlaneseq
        %v4734 = vshrl.u32 %v4733, 7
        %v4735 = vsub.s32 %v4732, %v4734
        %v4736 = vrot.slane %v4722, %v4735
        %v4737 = vcombine.low %v4672, %v4688
        %v4738 = vcombine.high %v4672, %v4688
        %v4740 = vunpack.c.l.s4 1934713408
        %v4741 = vunpack.c.0.s8 %v4740
        %v4742 = vlaneseq
        %v4743 = vshrl.u32 %v4742, 7
        %v4744 = vsub.s32 %v4741, %v4743
        %v4745 = vrot.slane %v4737, %v4744
        %v4747 = vunpack.c.l.s4 1934713408
        %v4748 = vunpack.c.0.s8 %v4747
        %v4749 = vlaneseq
        %v4750 = vshrl.u32 %v4749, 7
        %v4751 = vsub.s32 %v4748, %v4750
        %v4752 = vrot.slane %v4738, %v4751
        %v4753 = vcombine.low %v4697, %v4729
        %v4754 = vcombine.high %v4697, %v4729
        %v4755 = vcombine.low %v4704, %v4736
        %v4756 = vcombine.high %v4704, %v4736
        %v4757 = vcombine.low %v4713, %v4745
        %v4758 = vcombine.high %v4713, %v4745
        %v4759 = vcombine.low %v4720, %v4752
        %v4760 = vcombine.high %v4720, %v4752
        %v4761 = vcombine.low %v4617, %v4619
        %v4762 = vcombine.high %v4617, %v4619
        %v4764 = vunpack.c.l.s4 1983009808
        %v4765 = vunpack.c.0.s8 %v4764
        %v4766 = vlaneseq
        %v4767 = vshrl.u32 %v4766, 7
        %v4768 = vsub.s32 %v4765, %v4767
        %v4769 = vrot.slane %v4761, %v4768
        %v4771 = vunpack.c.l.s4 1983009808
        %v4772 = vunpack.c.0.s8 %v4771
        %v4773 = vlaneseq
        %v4774 = vshrl.u32 %v4773, 7
        %v4775 = vsub.s32 %v4772, %v4774
        %v4776 = vrot.slane %v4762, %v4775
        %v4777 = vcombine.low %v4618, %v4620
        %v4778 = vcombine.high %v4618, %v4620
        %v4780 = vunpack.c.l.s4 1983009808
        %v4781 = vunpack.c.0.s8 %v4780
        %v4782 = vlaneseq
        %v4783 = vshrl.u32 %v4782, 7
        %v4784 = vsub.s32 %v4781, %v4783
        %v4785 = vrot.slane %v4777, %v4784
        %v4787 = vunpack.c.l.s4 1983009808
        %v4788 = vunpack.c.0.s8 %v4787
        %v4789 = vlaneseq
        %v4790 = vshrl.u32 %v4789, 7
        %v4791 = vsub.s32 %v4788, %v4790
        %v4792 = vrot.slane %v4778, %v4791
        %v4793 = vcombine.low %v4621, %v4623
        %v4794 = vcombine.high %v4621, %v4623
        %v4796 = vunpack.c.l.s4 1983009808
        %v4797 = vunpack.c.0.s8 %v4796
        %v4798 = vlaneseq
        %v4799 = vshrl.u32 %v4798, 7
        %v4800 = vsub.s32 %v4797, %v4799
        %v4801 = vrot.slane %v4793, %v4800
        %v4803 = vunpack.c.l.s4 1983009808
        %v4804 = vunpack.c.0.s8 %v4803
        %v4805 = vlaneseq
        %v4806 = vshrl.u32 %v4805, 7
        %v4807 = vsub.s32 %v4804, %v4806
        %v4808 = vrot.slane %v4794, %v4807
        %v4809 = vcombine.low %v4622, %v4624
        %v4810 = vcombine.high %v4622, %v4624
        %v4812 = vunpack.c.l.s4 1983009808
        %v4813 = vunpack.c.0.s8 %v4812
        %v4814 = vlaneseq
        %v4815 = vshrl.u32 %v4814, 7
        %v4816 = vsub.s32 %v4813, %v4815
        %v4817 = vrot.slane %v4809, %v4816
        %v4819 = vunpack.c.l.s4 1983009808
        %v4820 = vunpack.c.0.s8 %v4819
        %v4821 = vlaneseq
        %v4822 = vshrl.u32 %v4821, 7
        %v4823 = vsub.s32 %v4820, %v4822
        %v4824 = vrot.slane %v4810, %v4823
        %v4825 = vcombine.low %v4769, %v4785
        %v4826 = vcombine.high %v4769, %v4785
        %v4828 = vunpack.c.l.s4 1934713408
        %v4829 = vunpack.c.0.s8 %v4828
        %v4830 = vlaneseq
        %v4831 = vshrl.u32 %v4830, 7
        %v4832 = vsub.s32 %v4829, %v4831
        %v4833 = vrot.slane %v4825, %v4832
        %v4835 = vunpack.c.l.s4 1934713408
        %v4836 = vunpack.c.0.s8 %v4835
        %v4837 = vlaneseq
        %v4838 = vshrl.u32 %v4837, 7
        %v4839 = vsub.s32 %v4836, %v4838
        %v4840 = vrot.slane %v4826, %v4839
        %v4841 = vcombine.low %v4776, %v4792
        %v4842 = vcombine.high %v4776, %v4792
        %v4844 = vunpack.c.l.s4 1934713408
        %v4845 = vunpack.c.0.s8 %v4844
        %v4846 = vlaneseq
        %v4847 = vshrl.u32 %v4846, 7
        %v4848 = vsub.s32 %v4845, %v4847
        %v4849 = vrot.slane %v4841, %v4848
        %v4851 = vunpack.c.l.s4 1934713408
        %v4852 = vunpack.c.0.s8 %v4851
        %v4853 = vlaneseq
        %v4854 = vshrl.u32 %v4853, 7
        %v4855 = vsub.s32 %v4852, %v4854
        %v4856 = vrot.slane %v4842, %v4855
        %v4857 = vcombine.low %v4801, %v4817
        %v4858 = vcombine.high %v4801, %v4817
        %v4860 = vunpack.c.l.s4 1934713408
        %v4861 = vunpack.c.0.s8 %v4860
        %v4862 = vlaneseq
        %v4863 = vshrl.u32 %v4862, 7
        %v4864 = vsub.s32 %v4861, %v4863
        %v4865 = vrot.slane %v4857, %v4864
        %v4867 = vunpack.c.l.s4 1934713408
        %v4868 = vunpack.c.0.s8 %v4867
        %v4869 = vlaneseq
        %v4870 = vshrl.u32 %v4869, 7
        %v4871 = vsub.s32 %v4868, %v4870
        %v4872 = vrot.slane %v4858, %v4871
        %v4873 = vcombine.low %v4808, %v4824
        %v4874 = vcombine.high %v4808, %v4824
        %v4876 = vunpack.c.l.s4 1934713408
        %v4877 = vunpack.c.0.s8 %v4876
        %v4878 = vlaneseq
        %v4879 = vshrl.u32 %v4878, 7
        %v4880 = vsub.s32 %v4877, %v4879
        %v4881 = vrot.slane %v4873, %v4880
        %v4883 = vunpack.c.l.s4 1934713408
        %v4884 = vunpack.c.0.s8 %v4883
        %v4885 = vlaneseq
        %v4886 = vshrl.u32 %v4885, 7
        %v4887 = vsub.s32 %v4884, %v4886
        %v4888 = vrot.slane %v4874, %v4887
        %v4889 = vcombine.low %v4833, %v4865
        %v4890 = vcombine.high %v4833, %v4865
        %v4891 = vcombine.low %v4840, %v4872
        %v4892 = vcombine.high %v4840, %v4872
        %v4893 = vcombine.low %v4849, %v4881
        %v4894 = vcombine.high %v4849, %v4881
        %v4895 = vcombine.low %v4856, %v4888
        %v4896 = vcombine.high %v4856, %v4888
        %4898 = vrot.lane.b32.xlu0 %v4754, 8
        %v4899 = vpop.permute.xlu0 %4898
        %4902 = vrot.lane.b32.xlu0 %v4755, 16
        %v4903 = vpop.permute.xlu0 %4902
        %4906 = vrot.lane.b32.xlu0 %v4756, 24
        %v4907 = vpop.permute.xlu0 %4906
        %4910 = vrot.lane.b32.xlu0 %v4757, 32
        %v4911 = vpop.permute.xlu0 %4910
        %4914 = vrot.lane.b32.xlu0 %v4758, 40
        %v4915 = vpop.permute.xlu0 %4914
        %4918 = vrot.lane.b32.xlu0 %v4759, 48
        %v4919 = vpop.permute.xlu0 %4918
        %4922 = vrot.lane.b32.xlu0 %v4760, 56
        %v4923 = vpop.permute.xlu0 %4922
        %4926 = vrot.lane.b32.xlu0 %v4889, 64
        %v4927 = vpop.permute.xlu0 %4926
        %4930 = vrot.lane.b32.xlu0 %v4890, 72
        %v4931 = vpop.permute.xlu0 %4930
        %4934 = vrot.lane.b32.xlu0 %v4891, 80
        %v4935 = vpop.permute.xlu0 %4934
        %4938 = vrot.lane.b32.xlu0 %v4892, 88
        %v4939 = vpop.permute.xlu0 %4938
        %4942 = vrot.lane.b32.xlu0 %v4893, 96
        %v4943 = vpop.permute.xlu0 %4942
        %4946 = vrot.lane.b32.xlu0 %v4894, 104
        %v4947 = vpop.permute.xlu0 %4946
        %4950 = vrot.lane.b32.xlu0 %v4895, 112
        %v4951 = vpop.permute.xlu0 %4950
        %4954 = vrot.lane.b32.xlu0 %v4896, 120
        %v4955 = vpop.permute.xlu0 %4954
        %v4957 = vsel %vm2687, %v4753, %v4899
        %vm4958 = vcmask 130048
        %v4959 = vsel %vm4958, %v4957, %v4903
        %vm4960 = vcmask 195584
        %v4961 = vsel %vm4960, %v4959, %v4907
        %vm4962 = vcmask 261120
        %v4963 = vsel %vm4962, %v4961, %v4911
        %vm4964 = vcmask 326656
        %v4965 = vsel %vm4964, %v4963, %v4915
        %vm4966 = vcmask 392192
        %v4967 = vsel %vm4966, %v4965, %v4919
        %vm4968 = vcmask 457728
        %v4969 = vsel %vm4968, %v4967, %v4923
        %vm4970 = vcmask 523264
        %v4971 = vsel %vm4970, %v4969, %v4927
        %vm4972 = vcmask 588800
        %v4973 = vsel %vm4972, %v4971, %v4931
        %vm4974 = vcmask 654336
        %v4975 = vsel %vm4974, %v4973, %v4935
        %vm4976 = vcmask 719872
        %v4977 = vsel %vm4976, %v4975, %v4939
        %vm4978 = vcmask 785408
        %v4979 = vsel %vm4978, %v4977, %v4943
        %vm4980 = vcmask 850944
        %v4981 = vsel %vm4980, %v4979, %v4947
        %vm4982 = vcmask 916480
        %v4983 = vsel %vm4982, %v4981, %v4951
        %vm4984 = vcmask 982016
        %v4985 = vsel %vm4984, %v4983, %v4955
        %v4986 = vpack.c.bf16 %v4985, %v4985
        %v4987 = vld [vmem:[#allocation13] sm:$0xf]
        %v4988 = vld [vmem:[#allocation13 + $0x4] sm:$0xf]
        %v4989 = vld [vmem:[#allocation13 + $0x8] sm:$0xf]
        %v4990 = vld [vmem:[#allocation13 + $0xc] sm:$0xf]
        %v4991 = vld [vmem:[#allocation13 + $0x10] sm:$0xf]
        %v4992 = vld [vmem:[#allocation13 + $0x14] sm:$0xf]
        %v4993 = vld [vmem:[#allocation13 + $0x18] sm:$0xf]
        %v4994 = vld [vmem:[#allocation13 + $0x1c] sm:$0xf]
        %v4995 = vld [vmem:[#allocation13 + $0x20] sm:$0xf]
        %v4996 = vld [vmem:[#allocation13 + $0x24] sm:$0xf]
        %v4997 = vld [vmem:[#allocation13 + $0x28] sm:$0xf]
        %v4998 = vld [vmem:[#allocation13 + $0x2c] sm:$0xf]
        %v4999 = vld [vmem:[#allocation13 + $0x30] sm:$0xf]
        %v5000 = vld [vmem:[#allocation13 + $0x34] sm:$0xf]
        %v5001 = vld [vmem:[#allocation13 + $0x38] sm:$0xf]
        %v5002 = vld [vmem:[#allocation13 + $0x3c] sm:$0xf]
        %v5003 = vld [vmem:[%s10] sm:$0x1]
        %v5005 = vlaneseq
        %v5006 = vshrl.u32 %v5005, 7
        %v5007 = vsub.s32 0, %v5006
        %v5008 = vrot.slane %v5003, %v5007
        %v5026 = vunpack.c.l.b16 %v4987
        %v5027 = vunpack.c.l.b16 %v4988
        %v5028 = vunpack.c.l.b16 %v4989
        %v5029 = vunpack.c.l.b16 %v4990
        %v5030 = vunpack.c.l.b16 %v4991
        %v5031 = vunpack.c.l.b16 %v4992
        %v5032 = vunpack.c.l.b16 %v4993
        %v5033 = vunpack.c.l.b16 %v4994
        %v5034 = vunpack.c.l.b16 %v4995
        %v5035 = vunpack.c.l.b16 %v4996
        %v5036 = vunpack.c.l.b16 %v4997
        %v5037 = vunpack.c.l.b16 %v4998
        %v5038 = vunpack.c.l.b16 %v4999
        %v5039 = vunpack.c.l.b16 %v5000
        %v5040 = vunpack.c.l.b16 %v5001
        %v5041 = vunpack.c.l.b16 %v5002
        %v5042 = vpack.c.b16 %v5027, %v5026
        %v5043 = vpack.c.b16 %v5029, %v5028
        %v5044 = vpack.c.b16 %v5031, %v5030
        %v5045 = vpack.c.b16 %v5033, %v5032
        %v5046 = vpack.c.b16 %v5035, %v5034
        %v5047 = vpack.c.b16 %v5037, %v5036
        %v5048 = vpack.c.b16 %v5039, %v5038
        %v5049 = vpack.c.b16 %v5041, %v5040
        %5058 = vmatprep.subr.bf16.mxu0 0
        %5059 = vmatpush1.bf16.msra.mxu0 %v5049
        %5060 = vmatprep.subr.bf16.mxu0 0
        %5061 = vmatpush1.bf16.msra.mxu0 %v5048
        %5062 = vmatprep.subr.bf16.mxu0 0
        %5063 = vmatpush1.bf16.msra.mxu0 %v5047
        %5064 = vmatprep.subr.bf16.mxu0 0
        %5065 = vmatpush1.bf16.msra.mxu0 %v5046
        %5066 = vmatprep.subr.bf16.mxu0 0
        %5067 = vmatpush1.bf16.msra.mxu0 %v5045
        %5068 = vmatprep.subr.bf16.mxu0 0
        %5069 = vmatpush1.bf16.msra.mxu0 %v5044
        %5070 = vmatprep.subr.bf16.mxu0 0
        %5071 = vmatpush1.bf16.msra.mxu0 %v5043
        %5072 = vmatprep.subr.bf16.mxu0 0
        %5073 = vmatpush1.bf16.msra.mxu0 %v5042
        %5074 = vmatprep.subr.bf16.mxu0 0
        %5075 = vmatpush2.bf16.msra.mxu0 0
        %5076 = vmatprep.subr.bf16.mxu0 0
        %5077 = vmatpush2.bf16.msra.mxu0 0
        %5078 = vmatprep.subr.bf16.mxu0 0
        %5079 = vmatpush2.bf16.msra.mxu0 0
        %5080 = vmatprep.subr.bf16.mxu0 0
        %5081 = vmatpush2.bf16.msra.mxu0 0
        %5082 = vmatprep.subr.bf16.mxu0 0
        %5083 = vmatpush2.bf16.msra.mxu0 0
        %5084 = vmatprep.subr.bf16.mxu0 0
        %5085 = vmatpush2.bf16.msra.mxu0 0
        %5086 = vmatprep.subr.bf16.mxu0 0
        %5087 = vmatpush2.bf16.msra.mxu0 0
        %5088 = vmatprep.subr.bf16.mxu0 0
        %5089 = vmatpush2.bf16.msra.mxu0 0
        %5090 = vmatprep.mubr.bf16.mxu0 0
        %5091 = vmatmul.mubr.bf16.gmra.mxu0 %v4986
        %v5092 = vpop.f32.mrf.mxu0
        %v5093 = vadd.f32 %v5008, %v5092
        %v5094 = vpop.f32.mrf.mxu0
        %v5095 = vpop.f32.mrf.mxu0
        %v5096 = vpop.f32.mrf.mxu0
        %5097 = vdwg.mxu0
        %5098 = vst [vmem:[%s530] sm:$0xff] %v5093
        %s5099 = sand.u32 %s287, 1
        %s5100 = scalar_lea.sflag [#allocation4], %s5099
        %s5101 = sand.u32 %s287, 1
        %s5102 = smul.addr %s5101, 8
        %s5103 = scalar_lea.vmem [#allocation14], %s5102
        // Predicated region
        $region93: #{tpu_custom_call.1} parent=63 // pred_check
          %p5104 = pneg %p297
        $region94: #{tpu_custom_call.1} parent=63 // pred_check_branch
          %5106 = sbr.rel (%p5104) target = $region96
        $region95: #{tpu_custom_call.1} parent=63 // pred_region
          %s5108 = ssub.s32 128, 128
          %5109 = vsyncadd %s5100, %s5108
          %s5110 = smul.addr %s33, 128
          %s5111 = scalar_lea.hbm %s11, %s5110
          %s5113 = sshll.u32 %s5103, 4
          %s5114 = int_to_ptr.vmem [resolvable:$true] %s5113
          %5116 = dma.vmem_to_hbm [thread:$0]  %s5114, 128, %s5111, %s5100
        $region96: #{tpu_custom_call.1} parent=63 // pred_fallthru
          _
      $region64: #{tpu_custom_call.1} parent=5 // pred_fallthru
        _
      %p5117 = scmp.le.s32.totalorder 2, %s28
      // Predicated region
      $region97: #{tpu_custom_call.1} parent=5 // pred_check
        %p5118 = pneg %p5117
      $region98: #{tpu_custom_call.1} parent=5 // pred_check_branch
        %5120 = sbr.rel (%p5118) target = $region100
      $region99: #{tpu_custom_call.1} parent=5 // pred_region
        %s5121 = ssub.s32 %s28, 2
        // Predicated region
        $region101: #{tpu_custom_call.1} parent=99 // pred_check
          %p5122 = pneg %p303
        $region102: #{tpu_custom_call.1} parent=99 // pred_check_branch
          %5124 = sbr.rel (%p5122) target = $region104
        $region103: #{tpu_custom_call.1} parent=99 // pred_region
          %s5125 = sand.u32 %s288, 1
          %s5126 = scalar_lea.sflag [#allocation4], %s5125
          %s5127 = sand.u32 %s288, 1
          %s5128 = smul.addr %s5127, 8
          %s5129 = scalar_lea.vmem [#allocation14], %s5128
          %5130 = dma.done %s5126, 128
        $region104: #{tpu_custom_call.1} parent=99 // pred_fallthru
          _
      $region100: #{tpu_custom_call.1} parent=5 // pred_fallthru
        _
    $region6: #{tpu_custom_call.1} parent=1 // loop_footer
      %s32 = sadd.s32 1, %s28
    $region7: #{tpu_custom_call.1} parent=1 // loop_footer_branch
      %27 = sbr.rel target = $region3
    $region8: #{tpu_custom_call.1} parent=1 // loop_exit
      _
    %5131 = vsyncpa [#allocation3], 1
    %s5132 = scalar_lea.sflag [#allocation3], 1
    %5133 = vsyncpa %s5132, 1
    %5134 = vsyncpa [#allocation6], 1
    %s5135 = scalar_lea.sflag [#allocation6], 1
    %5136 = vsyncpa %s5135, 1
    %5137 = vsyncpa [#allocation9], 1
    %5138 = vsyncpa [#allocation12], 1
    %5139 = vsyncpa [#allocation4], 1
    %s5140 = scalar_lea.sflag [#allocation4], 1
    %5141 = vsyncpa %s5140, 1

</llo_original>
